<compile_context>
chip_gen: v6e
topology: v6e:2x2x1
jax: 0.10.0
libtpu: 0.0.40
codegen_flags: <defaults>
</compile_context>

<pallas_src>
import jax
import jax.numpy as jnp
from jax.experimental import pallas as pl
from jax.experimental.pallas import tpu as pltpu

# ------------- scaled-down stand-ins for the real model dims -------------
B_GRAPHS  = 2                     # number of outfits (graphs) in the batch
NODES_PER = 4                     # items per outfit
N_NODES   = B_GRAPHS * NODES_PER  # total nodes in the batched graph
C_IN      = 4                     # image channels
IMG       = 16                    # spatial size
REP_DIM   = 256                   # stand-in for resnet50's 2048-d pre-fc rep
EMBED     = 128                   # stand-in for embed_size=1000
VOCAB     = 40                    # vocabulary size
MAX_WORDS = 8                     # padded description length

VMEM = pltpu.MemorySpace.VMEM


# ------------------------- fused forward kernel ---------------------------
def _compat_fused_kernel(
    x_ref,        # (N*H*W, C_IN)        pixels-as-rows
    poolimg_ref,  # (N, N*H*W)           block-diag per-image mean-pool matrix
    wconv_ref,    # (C_IN, REP_DIM)      backbone pointwise conv
    fcimg_w_ref,  # (REP_DIM, 2*EMBED)   [cnn.fc.weight | image_embedding.weight]
    fcimg_b_ref,  # (1, 2*EMBED)
    adj_ref,      # (N, N)               adj[dst, src], block diagonal per outfit
    ggwhh_w_ref,  # (EMBED, 4*EMBED)     [W_edge | GRU W_hh]
    ggwhh_b_ref,  # (1, 4*EMBED)
    wih_ref,      # (EMBED, 3*EMBED)     GRU W_ih
    bih_ref,      # (1, 3*EMBED)
    poolg_ref,    # (B, N)               per-graph mean-pool matrix
    pred_w_ref,   # (EMBED, 1)
    pred_b_ref,   # (1, 1)
    semb_ref,     # (N, EMBED)           masked word-embedding sum / word length
    selc_ref,     # (N, 1)               cap_mask as f32 (column)
    selr_ref,     # (1, N)               cap_mask as f32 (row)
    feats_ref,    # out: (N, EMBED)
    aux_ref,      # out: (B, 128)        lane 0 = sigmoid score, lane 1 = vse loss
):
    # ---- 1) CNN backbone stand-in: pointwise conv + ReLU + per-image avg pool ----
    # NOTE: C_IN=4 sits on the lane axis of x; negligible at this size, flip to a
    # weight-major layout if C_IN grows toward real ResNet widths.
    y = jnp.dot(x_ref[...], wconv_ref[...], preferred_element_type=jnp.float32)
    y = jnp.maximum(y, 0.0)                                                   # (N*HW, REP)
    rep = jnp.dot(poolimg_ref[...], y, preferred_element_type=jnp.float32)    # (N, REP)

    # ---- 2) cnn.fc and image_embedding as ONE wide matmul (shared LHS = rep) ----
    combo = (jnp.dot(rep, fcimg_w_ref[...], preferred_element_type=jnp.float32)
             + fcimg_b_ref[...])                                              # (N, 2*EMBED)
    h = combo[:, :EMBED]          # cnn.fc(rep)        -> GGNN input features
    vemb = combo[:, EMBED:]       # image_embedding(rep) -> VSE visual embedding

    # ---- 3) GatedGraphConv (n_steps=1, n_etypes=1), [W_edge | W_hh] concat ----
    hw = (jnp.dot(h, ggwhh_w_ref[...], preferred_element_type=jnp.float32)
          + ggwhh_b_ref[...])                                                 # (N, 4*EMBED)
    msg = hw[:, :EMBED]                                                       # edge messages
    gh = hw[:, EMBED:]                                                        # GRU hidden gates
    a = jnp.dot(adj_ref[...], msg, preferred_element_type=jnp.float32)        # sum at dst
    gi = (jnp.dot(a, wih_ref[...], preferred_element_type=jnp.float32)
          + bih_ref[...])
    d = EMBED
    r = jax.nn.sigmoid(gi[:, 0:d] + gh[:, 0:d])
    z = jax.nn.sigmoid(gi[:, d:2 * d] + gh[:, d:2 * d])
    n = jnp.tanh(gi[:, 2 * d:3 * d] + r * gh[:, 2 * d:3 * d])
    feats = (1.0 - z) * n + z * h
    feats_ref[...] = feats

    # ---- 4) per-graph mean pool + predictor Linear + sigmoid ----
    pooled = jnp.dot(poolg_ref[...], feats, preferred_element_type=jnp.float32)   # (B, EMBED)
    logits = (jnp.dot(pooled, pred_w_ref[...], preferred_element_type=jnp.float32)
              + pred_b_ref[...])
    score = jax.nn.sigmoid(logits)                                                 # (B, 1)

    # ---- 5) VSE loss ----
    eps = 1e-12
    semb = semb_ref[...]
    semb = semb / jnp.maximum(jnp.sqrt(jnp.sum(semb * semb, axis=-1, keepdims=True)), eps)
    vemb = vemb / jnp.maximum(jnp.sqrt(jnp.sum(vemb * vemb, axis=-1, keepdims=True)), eps)
    sel_c = selc_ref[...]                      # (N, 1) static cap_mask (replaces masked_select)
    sel_r = selr_ref[...]                      # (1, N)
    semb = semb * sel_c
    vemb = vemb * sel_c
    scores = jax.lax.dot_general(semb, vemb, (((1,), (1,)), ((), ())),
                                 preferred_element_type=jnp.float32)          # (N, N)
    nn_ = scores.shape[0]
    ri = jax.lax.broadcasted_iota(jnp.int32, (nn_, nn_), 0)
    ci = jax.lax.broadcasted_iota(jnp.int32, (nn_, nn_), 1)
    eye = (ri == ci).astype(jnp.float32)
    diag_col = jnp.sum(semb * vemb, axis=-1, keepdims=True)                   # (N, 1) = diag
    diag_row = jnp.sum(scores * eye, axis=0, keepdims=True)                   # (1, N)
    off = (1.0 - eye) * (sel_c * sel_r)        # off-diagonal pairs among selected captions
    cost_s = jnp.maximum(0.2 - diag_col + scores, 0.0) * off
    cost_im = jnp.maximum(0.2 - diag_row + scores, 0.0) * off
    total = jnp.sum(cost_s + cost_im, keepdims=True)                          # (1, 1)
    k = jnp.maximum(jnp.sum(sel_c, keepdims=True), 1.0)                       # (1, 1)
    vse = total / (k * k)                      # reference: sum / semb.shape[0]**2 (= k^2)

    # ---- consolidated lane-dense aux output ----
    lane = jax.lax.broadcasted_iota(jnp.int32, aux_ref.shape, 1)
    aux_ref[...] = jnp.where(lane == 0, score, 0.0) + jnp.where(lane == 1, vse, 0.0)


def _fused_call(x2, pool_img, w_conv, fcimg_w, fcimg_b, adj, ggwhh_w, ggwhh_b,
                wih, bih, pool_mat, pred_w, pred_b, semb_unnorm, sel_c, sel_r):
    n_in = 16
    return pl.pallas_call(
        _compat_fused_kernel,
        in_specs=[pl.BlockSpec(memory_space=VMEM)] * n_in,
        out_specs=(pl.BlockSpec(memory_space=VMEM), pl.BlockSpec(memory_space=VMEM)),
        out_shape=(jax.ShapeDtypeStruct((N_NODES, EMBED), jnp.float32),
                   jax.ShapeDtypeStruct((B_GRAPHS, 128), jnp.float32)),
    )(x2, pool_img, w_conv, fcimg_w, fcimg_b, adj, ggwhh_w, ggwhh_b,
      wih, bih, pool_mat, pred_w, pred_b, semb_unnorm, sel_c, sel_r)


# ---------------------------- full forward --------------------------------
def compat_model_forward(images_nchw, names_padded, adj, pool_mat, params):
    n, c, h, w = images_nchw.shape
    hw = h * w

    # pixels-as-rows layout for the backbone stand-in (tiny tensor; done once in XLA)
    x2 = jnp.transpose(images_nchw, (0, 2, 3, 1)).reshape(n * hw, c)            # (N*HW, C)
    # block-diagonal per-image mean-pool matrix -> pooling runs on the MXU in-kernel
    pool_img = jnp.kron(jnp.eye(n, dtype=jnp.float32),
                        jnp.full((1, hw), 1.0 / hw, jnp.float32))               # (N, N*HW)

    # shared-LHS weight concatenations (one wide MXU pass per stage)
    fcimg_w = jnp.concatenate([params["fc_w"], params["img_w"]], axis=1)        # (REP, 2*EMB)
    fcimg_b = jnp.concatenate([params["fc_b"], params["img_b"]], axis=1)        # (1, 2*EMB)
    ggwhh_w = jnp.concatenate([params["gg_we"], params["gru_whh"]], axis=1)     # (EMB, 4*EMB)
    ggwhh_b = jnp.concatenate([params["gg_be"], params["gru_bhh"]], axis=1)     # (1, 4*EMB)

    # VSE glue: masked word-embedding sum / word length (gather done in XLA wrapper)
    mask = (names_padded > 0).astype(jnp.float32)                               # (N, W)
    gathered = jnp.take(params["sem_emb"], names_padded, axis=0)                # (N, W, EMB)
    semb_sum = jnp.einsum("nw,nwd->nd", mask, gathered)                         # (N, EMB)
    word_len = jnp.sum(mask, axis=1)
    word_len_adj = jnp.where(word_len == 0, 0.1, word_len)
    semb_unnorm = semb_sum / word_len_adj[:, None]
    sel = (jnp.sum(mask, axis=1) >= 2).astype(jnp.float32)                      # cap_mask

    feats, aux = _fused_call(
        x2, pool_img, params["w_conv"], fcimg_w, fcimg_b, adj, ggwhh_w, ggwhh_b,
        params["gru_wih"], params["gru_bih"], pool_mat,
        params["pred_w"], params["pred_b"],
        semb_unnorm, sel[:, None], sel[None, :])

    out = aux[:, 0:1]          # (B, 1) compatibility scores (sigmoid)
    vse_loss = aux[0, 1]       # scalar VSE loss
    return out, vse_loss, feats


# ------------------------------- main --------------------------------------
if __name__ == "__main__":
    key = jax.random.PRNGKey(0)
    ks = jax.random.split(key, 16)

    def init(k, shape, scale=0.05):
        return (scale * jax.random.normal(k, shape)).astype(jnp.float32)

    params = dict(
        w_conv=init(ks[0], (C_IN, REP_DIM)),
        fc_w=init(ks[1], (REP_DIM, EMBED)),            # cnn.fc (xavier-style), bias = 0
        fc_b=jnp.zeros((1, EMBED), jnp.float32),
        sem_emb=init(ks[2], (VOCAB, EMBED), 0.1),      # nn.Embedding(vocabulary, embed)
        img_w=init(ks[3], (REP_DIM, EMBED)),           # image_embedding Linear(rep -> embed)
        img_b=init(ks[4], (1, EMBED)),
        gg_we=init(ks[5], (EMBED, EMBED)),             # GatedGraphConv edge linear
        gg_be=init(ks[6], (1, EMBED)),
        gru_wih=init(ks[7], (EMBED, 3 * EMBED)),       # GRUCell
        gru_bih=init(ks[8], (1, 3 * EMBED)),
        gru_whh=init(ks[9], (EMBED, 3 * EMBED)),
        gru_bhh=init(ks[10], (1, 3 * EMBED)),
        pred_w=init(ks[11], (EMBED, 1)),               # predictor Linear(embed, 1)
        pred_b=jnp.zeros((1, 1), jnp.float32),
    )

    # images (batched graph node data), PyTorch NCHW layout
    images = jax.random.normal(ks[12], (N_NODES, C_IN, IMG, IMG), jnp.float32)

    # item descriptions: padded word-id matrix (0 = pad); node 3 has 1 word, node 5 has 0
    names = jax.random.randint(ks[13], (N_NODES, MAX_WORDS), 1, VOCAB)
    lengths = jnp.array([3, 4, 2, 1, 5, 0, 3, 2], dtype=jnp.int32)
    names = jnp.where(jnp.arange(MAX_WORDS)[None, :] < lengths[:, None], names, 0)

    # batched graph: fully connected (no self loops) within each outfit, block diagonal
    blk = jnp.ones((NODES_PER, NODES_PER), jnp.float32) - jnp.eye(NODES_PER, dtype=jnp.float32)
    adj = jnp.kron(jnp.eye(B_GRAPHS, dtype=jnp.float32), blk)               # adj[dst, src]
    pool_mat = jnp.kron(jnp.eye(B_GRAPHS, dtype=jnp.float32),
                        jnp.ones((1, NODES_PER), jnp.float32) / NODES_PER)  # per-graph mean

    fwd = jax.jit(compat_model_forward)
    out, vse_loss, feats = fwd(images, names, adj, pool_mat, params)
    jax.block_until_ready((out, vse_loss, feats))
    assert out.shape == (B_GRAPHS, 1) and feats.shape == (N_NODES, EMBED)
    assert vse_loss.shape == ()
    print("KERNEL_OK")
</pallas_src>

<mosaic_0001>
module attributes {stable_mosaic.version = 11 : i64} {
  func.func @_compat_fused_kernel(%arg0: memref<2048x4xf32, #tpu.memory_space<vmem>>, %arg1: memref<8x2048xf32, #tpu.memory_space<vmem>>, %arg2: memref<4x256xf32, #tpu.memory_space<vmem>>, %arg3: memref<256x256xf32, #tpu.memory_space<vmem>>, %arg4: memref<1x256xf32, #tpu.memory_space<vmem>>, %arg5: memref<8x8xf32, #tpu.memory_space<vmem>>, %arg6: memref<128x512xf32, #tpu.memory_space<vmem>>, %arg7: memref<1x512xf32, #tpu.memory_space<vmem>>, %arg8: memref<128x384xf32, #tpu.memory_space<vmem>>, %arg9: memref<1x384xf32, #tpu.memory_space<vmem>>, %arg10: memref<2x8xf32, #tpu.memory_space<vmem>>, %arg11: memref<128x1xf32, #tpu.memory_space<vmem>>, %arg12: memref<1x1xf32, #tpu.memory_space<vmem>>, %arg13: memref<8x128xf32, #tpu.memory_space<vmem>>, %arg14: memref<8x1xf32, #tpu.memory_space<vmem>>, %arg15: memref<1x8xf32, #tpu.memory_space<vmem>>, %arg16: memref<8x128xf32, #tpu.memory_space<vmem>>, %arg17: memref<2x128xf32, #tpu.memory_space<vmem>>) attributes {dimension_semantics = [], scalar_prefetch = 0 : i64, scratch_operands = 0 : i64, tpu.core_type = #tpu.core_type<tc>} {
    %c0 = arith.constant 0 : index
    %c0_0 = arith.constant 0 : index
    %0 = vector.load %arg0[%c0, %c0_0] : memref<2048x4xf32, #tpu.memory_space<vmem>>, vector<2048x4xf32>
    %c0_1 = arith.constant 0 : index
    %c0_2 = arith.constant 0 : index
    %1 = vector.load %arg2[%c0_1, %c0_2] : memref<4x256xf32, #tpu.memory_space<vmem>>, vector<4x256xf32>
    %cst = arith.constant dense<0.000000e+00> : vector<2048x256xf32>
    %2 = tpu.matmul %0, %1, %cst {dimension_numbers = #tpu.dot_dimension_numbers<[1], [0], [0], [1], [0, 0, 1, 1], [], []>} : vector<2048x4xf32>, vector<4x256xf32>, vector<2048x256xf32> -> vector<2048x256xf32>
    %cst_3 = arith.constant 0.000000e+00 : f32
    %3 = vector.broadcast %cst_3 : f32 to vector<2048x256xf32>
    %4 = arith.maximumf %2, %3 : vector<2048x256xf32>
    %c0_4 = arith.constant 0 : index
    %c0_5 = arith.constant 0 : index
    %5 = vector.load %arg1[%c0_4, %c0_5] : memref<8x2048xf32, #tpu.memory_space<vmem>>, vector<8x2048xf32>
    %cst_6 = arith.constant dense<0.000000e+00> : vector<8x256xf32>
    %6 = tpu.matmul %5, %4, %cst_6 {dimension_numbers = #tpu.dot_dimension_numbers<[1], [0], [0], [1], [0, 0, 1, 1], [], []>} : vector<8x2048xf32>, vector<2048x256xf32>, vector<8x256xf32> -> vector<8x256xf32>
    %c0_7 = arith.constant 0 : index
    %c0_8 = arith.constant 0 : index
    %7 = vector.load %arg3[%c0_7, %c0_8] : memref<256x256xf32, #tpu.memory_space<vmem>>, vector<256x256xf32>
    %cst_9 = arith.constant dense<0.000000e+00> : vector<8x256xf32>
    %8 = tpu.matmul %6, %7, %cst_9 {dimension_numbers = #tpu.dot_dimension_numbers<[1], [0], [0], [1], [0, 0, 1, 1], [], []>} : vector<8x256xf32>, vector<256x256xf32>, vector<8x256xf32> -> vector<8x256xf32>
    %c0_10 = arith.constant 0 : index
    %c0_11 = arith.constant 0 : index
    %9 = vector.load %arg4[%c0_10, %c0_11] : memref<1x256xf32, #tpu.memory_space<vmem>>, vector<1x256xf32>
    %10 = vector.broadcast %9 : vector<1x256xf32> to vector<8x256xf32>
    %11 = arith.addf %8, %10 : vector<8x256xf32>
    %12 = vector.extract_strided_slice %11 {offsets = [0, 0], sizes = [8, 128], strides = [1, 1]} : vector<8x256xf32> to vector<8x128xf32>
    %13 = vector.extract_strided_slice %11 {offsets = [0, 128], sizes = [8, 128], strides = [1, 1]} : vector<8x256xf32> to vector<8x128xf32>
    %c0_12 = arith.constant 0 : index
    %c0_13 = arith.constant 0 : index
    %14 = vector.load %arg6[%c0_12, %c0_13] : memref<128x512xf32, #tpu.memory_space<vmem>>, vector<128x512xf32>
    %cst_14 = arith.constant dense<0.000000e+00> : vector<8x512xf32>
    %15 = tpu.matmul %12, %14, %cst_14 {dimension_numbers = #tpu.dot_dimension_numbers<[1], [0], [0], [1], [0, 0, 1, 1], [], []>} : vector<8x128xf32>, vector<128x512xf32>, vector<8x512xf32> -> vector<8x512xf32>
    %c0_15 = arith.constant 0 : index
    %c0_16 = arith.constant 0 : index
    %16 = vector.load %arg7[%c0_15, %c0_16] : memref<1x512xf32, #tpu.memory_space<vmem>>, vector<1x512xf32>
    %17 = vector.broadcast %16 : vector<1x512xf32> to vector<8x512xf32>
    %18 = arith.addf %15, %17 : vector<8x512xf32>
    %19 = vector.extract_strided_slice %18 {offsets = [0, 0], sizes = [8, 128], strides = [1, 1]} : vector<8x512xf32> to vector<8x128xf32>
    %20 = vector.extract_strided_slice %18 {offsets = [0, 128], sizes = [8, 384], strides = [1, 1]} : vector<8x512xf32> to vector<8x384xf32>
    %c0_17 = arith.constant 0 : index
    %c0_18 = arith.constant 0 : index
    %21 = vector.load %arg5[%c0_17, %c0_18] : memref<8x8xf32, #tpu.memory_space<vmem>>, vector<8x8xf32>
    %cst_19 = arith.constant dense<0.000000e+00> : vector<8x128xf32>
    %22 = tpu.matmul %21, %19, %cst_19 {dimension_numbers = #tpu.dot_dimension_numbers<[1], [0], [0], [1], [0, 0, 1, 1], [], []>} : vector<8x8xf32>, vector<8x128xf32>, vector<8x128xf32> -> vector<8x128xf32>
    %c0_20 = arith.constant 0 : index
    %c0_21 = arith.constant 0 : index
    %23 = vector.load %arg8[%c0_20, %c0_21] : memref<128x384xf32, #tpu.memory_space<vmem>>, vector<128x384xf32>
    %cst_22 = arith.constant dense<0.000000e+00> : vector<8x384xf32>
    %24 = tpu.matmul %22, %23, %cst_22 {dimension_numbers = #tpu.dot_dimension_numbers<[1], [0], [0], [1], [0, 0, 1, 1], [], []>} : vector<8x128xf32>, vector<128x384xf32>, vector<8x384xf32> -> vector<8x384xf32>
    %c0_23 = arith.constant 0 : index
    %c0_24 = arith.constant 0 : index
    %25 = vector.load %arg9[%c0_23, %c0_24] : memref<1x384xf32, #tpu.memory_space<vmem>>, vector<1x384xf32>
    %26 = vector.broadcast %25 : vector<1x384xf32> to vector<8x384xf32>
    %27 = arith.addf %24, %26 : vector<8x384xf32>
    %28 = vector.extract_strided_slice %27 {offsets = [0, 0], sizes = [8, 128], strides = [1, 1]} : vector<8x384xf32> to vector<8x128xf32>
    %29 = vector.extract_strided_slice %20 {offsets = [0, 0], sizes = [8, 128], strides = [1, 1]} : vector<8x384xf32> to vector<8x128xf32>
    %30 = arith.addf %28, %29 : vector<8x128xf32>
    %31 = arith.negf %30 : vector<8x128xf32>
    %32 = math.exp %31 : vector<8x128xf32>
    %cst_25 = arith.constant 1.000000e+00 : f32
    %33 = vector.broadcast %cst_25 : f32 to vector<8x128xf32>
    %34 = arith.addf %33, %32 : vector<8x128xf32>
    %35 = arith.divf %33, %34 : vector<8x128xf32>
    %36 = vector.extract_strided_slice %27 {offsets = [0, 128], sizes = [8, 128], strides = [1, 1]} : vector<8x384xf32> to vector<8x128xf32>
    %37 = vector.extract_strided_slice %20 {offsets = [0, 128], sizes = [8, 128], strides = [1, 1]} : vector<8x384xf32> to vector<8x128xf32>
    %38 = arith.addf %36, %37 : vector<8x128xf32>
    %39 = arith.negf %38 : vector<8x128xf32>
    %40 = math.exp %39 : vector<8x128xf32>
    %cst_26 = arith.constant 1.000000e+00 : f32
    %41 = vector.broadcast %cst_26 : f32 to vector<8x128xf32>
    %42 = arith.addf %41, %40 : vector<8x128xf32>
    %43 = arith.divf %41, %42 : vector<8x128xf32>
    %44 = vector.extract_strided_slice %27 {offsets = [0, 256], sizes = [8, 128], strides = [1, 1]} : vector<8x384xf32> to vector<8x128xf32>
    %45 = vector.extract_strided_slice %20 {offsets = [0, 256], sizes = [8, 128], strides = [1, 1]} : vector<8x384xf32> to vector<8x128xf32>
    %46 = arith.mulf %35, %45 : vector<8x128xf32>
    %47 = arith.addf %44, %46 : vector<8x128xf32>
    %48 = math.tanh %47 : vector<8x128xf32>
    %cst_27 = arith.constant 1.000000e+00 : f32
    %49 = vector.broadcast %cst_27 : f32 to vector<8x128xf32>
    %50 = arith.subf %49, %43 : vector<8x128xf32>
    %51 = arith.mulf %50, %48 : vector<8x128xf32>
    %52 = arith.mulf %43, %12 : vector<8x128xf32>
    %53 = arith.addf %51, %52 : vector<8x128xf32>
    %c0_28 = arith.constant 0 : index
    %c0_29 = arith.constant 0 : index
    %54 = vector.load %arg16[%c0_28, %c0_29] : memref<8x128xf32, #tpu.memory_space<vmem>>, vector<8x128xf32>
    tpu.vector_store %arg16[%c0_28, %c0_29], %53 {strides = array<i32>} : memref<8x128xf32, #tpu.memory_space<vmem>>, vector<8x128xf32>,
    %c0_30 = arith.constant 0 : index
    %c0_31 = arith.constant 0 : index
    %55 = vector.load %arg10[%c0_30, %c0_31] : memref<2x8xf32, #tpu.memory_space<vmem>>, vector<2x8xf32>
    %cst_32 = arith.constant dense<0.000000e+00> : vector<2x128xf32>
    %56 = tpu.matmul %55, %53, %cst_32 {dimension_numbers = #tpu.dot_dimension_numbers<[1], [0], [0], [1], [0, 0, 1, 1], [], []>} : vector<2x8xf32>, vector<8x128xf32>, vector<2x128xf32> -> vector<2x128xf32>
    %c0_33 = arith.constant 0 : index
    %c0_34 = arith.constant 0 : index
    %57 = vector.load %arg11[%c0_33, %c0_34] : memref<128x1xf32, #tpu.memory_space<vmem>>, vector<128x1xf32>
    %cst_35 = arith.constant dense<0.000000e+00> : vector<2x1xf32>
    %58 = tpu.matmul %56, %57, %cst_35 {dimension_numbers = #tpu.dot_dimension_numbers<[1], [0], [0], [1], [0, 0, 1, 1], [], []>} : vector<2x128xf32>, vector<128x1xf32>, vector<2x1xf32> -> vector<2x1xf32>
    %c0_36 = arith.constant 0 : index
    %c0_37 = arith.constant 0 : index
    %59 = vector.load %arg12[%c0_36, %c0_37] : memref<1x1xf32, #tpu.memory_space<vmem>>, vector<1x1xf32>
    %60 = vector.broadcast %59 : vector<1x1xf32> to vector<2x1xf32>
    %61 = arith.addf %58, %60 : vector<2x1xf32>
    %62 = arith.negf %61 : vector<2x1xf32>
    %63 = math.exp %62 : vector<2x1xf32>
    %cst_38 = arith.constant 1.000000e+00 : f32
    %64 = vector.broadcast %cst_38 : f32 to vector<2x1xf32>
    %65 = arith.addf %64, %63 : vector<2x1xf32>
    %66 = arith.divf %64, %65 : vector<2x1xf32>
    %c0_39 = arith.constant 0 : index
    %c0_40 = arith.constant 0 : index
    %67 = vector.load %arg13[%c0_39, %c0_40] : memref<8x128xf32, #tpu.memory_space<vmem>>, vector<8x128xf32>
    %68 = arith.mulf %67, %67 : vector<8x128xf32>
    %cst_41 = arith.constant dense<0.000000e+00> : vector<8xf32>
    %69 = vector.multi_reduction <add>, %68, %cst_41 [1] : vector<8x128xf32> to vector<8xf32>
    %70 = vector.shape_cast %69 : vector<8xf32> to vector<8x1xf32>
    %71 = math.sqrt %70 : vector<8x1xf32>
    %cst_42 = arith.constant 9.99999996E-13 : f32
    %72 = vector.broadcast %cst_42 : f32 to vector<8x1xf32>
    %73 = arith.maximumf %71, %72 : vector<8x1xf32>
    %74 = vector.broadcast %73 : vector<8x1xf32> to vector<8x128xf32>
    %75 = arith.divf %67, %74 : vector<8x128xf32>
    %76 = arith.mulf %13, %13 : vector<8x128xf32>
    %cst_43 = arith.constant dense<0.000000e+00> : vector<8xf32>
    %77 = vector.multi_reduction <add>, %76, %cst_43 [1] : vector<8x128xf32> to vector<8xf32>
    %78 = vector.shape_cast %77 : vector<8xf32> to vector<8x1xf32>
    %79 = math.sqrt %78 : vector<8x1xf32>
    %cst_44 = arith.constant 9.99999996E-13 : f32
    %80 = vector.broadcast %cst_44 : f32 to vector<8x1xf32>
    %81 = arith.maximumf %79, %80 : vector<8x1xf32>
    %82 = vector.broadcast %81 : vector<8x1xf32> to vector<8x128xf32>
    %83 = arith.divf %13, %82 : vector<8x128xf32>
    %c0_45 = arith.constant 0 : index
    %c0_46 = arith.constant 0 : index
    %84 = vector.load %arg14[%c0_45, %c0_46] : memref<8x1xf32, #tpu.memory_space<vmem>>, vector<8x1xf32>
    %c0_47 = arith.constant 0 : index
    %c0_48 = arith.constant 0 : index
    %85 = vector.load %arg15[%c0_47, %c0_48] : memref<1x8xf32, #tpu.memory_space<vmem>>, vector<1x8xf32>
    %86 = vector.broadcast %84 : vector<8x1xf32> to vector<8x128xf32>
    %87 = arith.mulf %75, %86 : vector<8x128xf32>
    %88 = vector.broadcast %84 : vector<8x1xf32> to vector<8x128xf32>
    %89 = arith.mulf %83, %88 : vector<8x128xf32>
    %cst_49 = arith.constant dense<0.000000e+00> : vector<8x8xf32>
    %90 = tpu.matmul %87, %89, %cst_49 {dimension_numbers = #tpu.dot_dimension_numbers<[1], [1], [0], [0], [0, 0, 1, 0], [], []>} : vector<8x128xf32>, vector<8x128xf32>, vector<8x8xf32> -> vector<8x8xf32>
    %91 = tpu.iota {dimensions = array<i32: 0>} : vector<8x8xi32>
    %92 = tpu.iota {dimensions = array<i32: 1>} : vector<8x8xi32>
    %93 = arith.cmpi eq, %91, %92 : vector<8x8xi32>
    %94 = arith.extui %93 : vector<8x8xi1> to vector<8x8xi32>
    %95 = arith.sitofp %94 : vector<8x8xi32> to vector<8x8xf32>
    %96 = arith.mulf %87, %89 : vector<8x128xf32>
    %cst_50 = arith.constant dense<0.000000e+00> : vector<8xf32>
    %97 = vector.multi_reduction <add>, %96, %cst_50 [1] : vector<8x128xf32> to vector<8xf32>
    %98 = vector.shape_cast %97 : vector<8xf32> to vector<8x1xf32>
    %99 = arith.mulf %90, %95 : vector<8x8xf32>
    %cst_51 = arith.constant dense<0.000000e+00> : vector<8xf32>
    %100 = vector.multi_reduction <add>, %99, %cst_51 [0] : vector<8x8xf32> to vector<8xf32>
    %101 = vector.shape_cast %100 : vector<8xf32> to vector<1x8xf32>
    %cst_52 = arith.constant 1.000000e+00 : f32
    %102 = vector.broadcast %cst_52 : f32 to vector<8x8xf32>
    %103 = arith.subf %102, %95 : vector<8x8xf32>
    %104 = vector.broadcast %84 : vector<8x1xf32> to vector<8x8xf32>
    %105 = vector.broadcast %85 : vector<1x8xf32> to vector<8x8xf32>
    %106 = arith.mulf %104, %105 : vector<8x8xf32>
    %107 = arith.mulf %103, %106 : vector<8x8xf32>
    %cst_53 = arith.constant 2.000000e-01 : f32
    %108 = vector.broadcast %cst_53 : f32 to vector<8x1xf32>
    %109 = arith.subf %108, %98 : vector<8x1xf32>
    %110 = vector.broadcast %109 : vector<8x1xf32> to vector<8x8xf32>
    %111 = arith.addf %110, %90 : vector<8x8xf32>
    %cst_54 = arith.constant 0.000000e+00 : f32
    %112 = vector.broadcast %cst_54 : f32 to vector<8x8xf32>
    %113 = arith.maximumf %111, %112 : vector<8x8xf32>
    %114 = arith.mulf %113, %107 : vector<8x8xf32>
    %cst_55 = arith.constant 2.000000e-01 : f32
    %115 = vector.broadcast %cst_55 : f32 to vector<1x8xf32>
    %116 = arith.subf %115, %101 : vector<1x8xf32>
    %117 = vector.broadcast %116 : vector<1x8xf32> to vector<8x8xf32>
    %118 = arith.addf %117, %90 : vector<8x8xf32>
    %cst_56 = arith.constant 0.000000e+00 : f32
    %119 = vector.broadcast %cst_56 : f32 to vector<8x8xf32>
    %120 = arith.maximumf %118, %119 : vector<8x8xf32>
    %121 = arith.mulf %120, %107 : vector<8x8xf32>
    %122 = arith.addf %114, %121 : vector<8x8xf32>
    %123 = vector.shape_cast %122 : vector<8x8xf32> to vector<1x8x8xf32>
    %cst_57 = arith.constant dense<0.000000e+00> : vector<1xf32>
    %124 = vector.multi_reduction <add>, %123, %cst_57 [1, 2] : vector<1x8x8xf32> to vector<1xf32>
    %125 = vector.shape_cast %124 : vector<1xf32> to vector<1x1x1xf32>
    %126 = vector.extract %125[0, 0, 0] : f32 from vector<1x1x1xf32>
    %127 = vector.broadcast %126 : f32 to vector<1x1xf32>
    %128 = vector.shape_cast %84 : vector<8x1xf32> to vector<1x8x1xf32>
    %cst_58 = arith.constant dense<0.000000e+00> : vector<1xf32>
    %129 = vector.multi_reduction <add>, %128, %cst_58 [1, 2] : vector<1x8x1xf32> to vector<1xf32>
    %130 = vector.shape_cast %129 : vector<1xf32> to vector<1x1x1xf32>
    %131 = vector.extract %130[0, 0, 0] : f32 from vector<1x1x1xf32>
    %132 = vector.broadcast %131 : f32 to vector<1x1xf32>
    %cst_59 = arith.constant 1.000000e+00 : f32
    %133 = vector.broadcast %cst_59 : f32 to vector<1x1xf32>
    %134 = arith.maximumf %132, %133 : vector<1x1xf32>
    %135 = arith.mulf %134, %134 : vector<1x1xf32>
    %136 = arith.divf %127, %135 : vector<1x1xf32>
    %137 = tpu.iota {dimensions = array<i32: 1>} : vector<2x128xi32>
    %c0_i32 = arith.constant 0 : i32
    %138 = vector.broadcast %c0_i32 : i32 to vector<2x128xi32>
    %139 = arith.cmpi eq, %137, %138 : vector<2x128xi32>
    %cst_60 = arith.constant 0.000000e+00 : f32
    %140 = vector.shape_cast %66 : vector<2x1xf32> to vector<2x1xf32>
    %141 = vector.broadcast %140 : vector<2x1xf32> to vector<2x128xf32>
    %142 = vector.broadcast %cst_60 : f32 to vector<2x128xf32>
    %143 = arith.select %139, %141, %142 : vector<2x128xi1>, vector<2x128xf32>
    %c1_i32 = arith.constant 1 : i32
    %144 = vector.broadcast %c1_i32 : i32 to vector<2x128xi32>
    %145 = arith.cmpi eq, %137, %144 : vector<2x128xi32>
    %cst_61 = arith.constant 0.000000e+00 : f32
    %146 = vector.shape_cast %136 : vector<1x1xf32> to vector<1x1xf32>
    %147 = vector.broadcast %146 : vector<1x1xf32> to vector<2x128xf32>
    %148 = vector.broadcast %cst_61 : f32 to vector<2x128xf32>
    %149 = arith.select %145, %147, %148 : vector<2x128xi1>, vector<2x128xf32>
    %150 = arith.addf %143, %149 : vector<2x128xf32>
    %c0_62 = arith.constant 0 : index
    %c0_63 = arith.constant 0 : index
    %151 = vector.load %arg17[%c0_62, %c0_63] : memref<2x128xf32, #tpu.memory_space<vmem>>, vector<2x128xf32>
    tpu.vector_store %arg17[%c0_62, %c0_63], %150 {strides = array<i32>} : memref<2x128xf32, #tpu.memory_space<vmem>>, vector<2x128xf32>,
    return
  }
}

</mosaic_0001>

<llo_original>
// kernel: compat_model_forward.1
$region0: #{compat_model_forward.1}
  #allocation0 [shape = 'u32[]', space=smem, size = 0x4, offset = 0x4, fixed_abs, tag = 'smem constant byte address 0x4 - core index']
  #allocation1 [shape = 'u32[144,128]{1,0:T(1,128)}', space=vmem, size = 0x12000, scoped, tag = 'internal scratch']
  #allocation2 [shape = 'f32[1,1]{1,0:T(1,128)S(1)}', space=vmem, size = 0x200, scoped, tag = 'scoped memory for compat_model_forward.1']
  %s0 = inlined_call_operand.vmem [shape: f32[2048,4], index: 0, kind: input, shape index: {}]
  %s1 = inlined_call_operand.vmem [shape: f32[8,2048], index: 1, kind: input, shape index: {}]
  %s2 = inlined_call_operand.vmem [shape: f32[4,256], index: 2, kind: input, shape index: {}]
  %s3 = inlined_call_operand.vmem [shape: f32[256,256], index: 3, kind: input, shape index: {}]
  %s4 = inlined_call_operand.vmem [shape: f32[1,256], index: 4, kind: input, shape index: {}]
  %s5 = inlined_call_operand.vmem [shape: f32[8,8], index: 5, kind: input, shape index: {}]
  %s6 = inlined_call_operand.vmem [shape: f32[128,512], index: 6, kind: input, shape index: {}]
  %s7 = inlined_call_operand.vmem [shape: f32[1,512], index: 7, kind: input, shape index: {}]
  %s8 = inlined_call_operand.vmem [shape: f32[128,384], index: 8, kind: input, shape index: {}]
  %s9 = inlined_call_operand.vmem [shape: f32[1,384], index: 9, kind: input, shape index: {}]
  %s10 = inlined_call_operand.vmem [shape: f32[2,8], index: 10, kind: input, shape index: {}]
  %s11 = inlined_call_operand.vmem [shape: f32[128,1], index: 11, kind: input, shape index: {}]
  %s12 = inlined_call_operand.<no memory space> [shape: f32[1,1], index: 12, kind: input, shape index: {}]
  %s13 = inlined_call_operand.vmem [shape: f32[8,128], index: 13, kind: input, shape index: {}]
  %s14 = inlined_call_operand.vmem [shape: f32[8,1], index: 14, kind: input, shape index: {}]
  %s15 = inlined_call_operand.vmem [shape: f32[1,8], index: 15, kind: input, shape index: {}]
  %s16 = inlined_call_operand.hbm [shape: f32[8,128], index: 16, kind: output, shape index: {0}]
  %s17 = inlined_call_operand.vmem [shape: f32[2,128], index: 17, kind: output, shape index: {1}]
  %18 = xla_tuple %s16, %s17
  %s19 = sld [smem:[#allocation0]]
  $region82: #{compat_model_forward.1} parent=0
    _
  %s21 = ssub.s32 1, %s19
  %s22 = scalar_select 0, %s21, %s19
  %v23 = vstv %s12
  %24 = vst [vmem:[#allocation2] sm:$0x1] %v23
  $region1: #{compat_model_forward.1} parent=0
    #allocation3 [shape = 'u8[4096]{0}', space=vmem, size = 0x1000, scoped, tag = 'output window, operand 0, single buffered']
    #allocation4 [shape = 's32[1]{0}', space=sflag, size = 0x4, scoped, tag = 'scoped memory for compat_model_forward.1']
    %25 = vsyncpa [#allocation4], 0
    // Predicated region
    $region2: #{compat_model_forward.1} parent=1 // pred_check
      _
    $region3: #{compat_model_forward.1} parent=1 // pred_check_branch
      %27 = sbr.rel (0) target = $region5
    $region4: #{compat_model_forward.1} parent=1 // pred_region
      _
    $region5: #{compat_model_forward.1} parent=1 // pred_fallthru
      _
    // Predicated region
    $region6: #{compat_model_forward.1} parent=1 // pred_check
      _
    $region7: #{compat_model_forward.1} parent=1 // pred_check_branch
      %29 = sbr.rel (0) target = $region9
    $region8: #{compat_model_forward.1} parent=1 // pred_region
      _
    $region9: #{compat_model_forward.1} parent=1 // pred_fallthru
      _
    // Predicated region
    $region10: #{compat_model_forward.1} parent=1 // pred_check
      _
    $region11: #{compat_model_forward.1} parent=1 // pred_check_branch
      %31 = sbr.rel (0) target = $region13
    $region12: #{compat_model_forward.1} parent=1 // pred_region
      _
    $region13: #{compat_model_forward.1} parent=1 // pred_fallthru
      _
    // Predicated region
    $region14: #{compat_model_forward.1} parent=1 // pred_check
      _
    $region15: #{compat_model_forward.1} parent=1 // pred_check_branch
      %33 = sbr.rel (0) target = $region17
    $region16: #{compat_model_forward.1} parent=1 // pred_region
      _
    $region17: #{compat_model_forward.1} parent=1 // pred_fallthru
      _
    // Predicated region
    $region18: #{compat_model_forward.1} parent=1 // pred_check
      _
    $region19: #{compat_model_forward.1} parent=1 // pred_check_branch
      %35 = sbr.rel (0) target = $region21
    $region20: #{compat_model_forward.1} parent=1 // pred_region
      _
    $region21: #{compat_model_forward.1} parent=1 // pred_fallthru
      _
    // Predicated region
    $region22: #{compat_model_forward.1} parent=1 // pred_check
      _
    $region23: #{compat_model_forward.1} parent=1 // pred_check_branch
      %37 = sbr.rel (0) target = $region25
    $region24: #{compat_model_forward.1} parent=1 // pred_region
      _
    $region25: #{compat_model_forward.1} parent=1 // pred_fallthru
      _
    // Predicated region
    $region26: #{compat_model_forward.1} parent=1 // pred_check
      _
    $region27: #{compat_model_forward.1} parent=1 // pred_check_branch
      %39 = sbr.rel (0) target = $region29
    $region28: #{compat_model_forward.1} parent=1 // pred_region
      _
    $region29: #{compat_model_forward.1} parent=1 // pred_fallthru
      _
    // Predicated region
    $region30: #{compat_model_forward.1} parent=1 // pred_check
      _
    $region31: #{compat_model_forward.1} parent=1 // pred_check_branch
      %41 = sbr.rel (0) target = $region33
    $region32: #{compat_model_forward.1} parent=1 // pred_region
      _
    $region33: #{compat_model_forward.1} parent=1 // pred_fallthru
      _
    // Predicated region
    $region34: #{compat_model_forward.1} parent=1 // pred_check
      _
    $region35: #{compat_model_forward.1} parent=1 // pred_check_branch
      %43 = sbr.rel (0) target = $region37
    $region36: #{compat_model_forward.1} parent=1 // pred_region
      _
    $region37: #{compat_model_forward.1} parent=1 // pred_fallthru
      _
    // Predicated region
    $region38: #{compat_model_forward.1} parent=1 // pred_check
      _
    $region39: #{compat_model_forward.1} parent=1 // pred_check_branch
      %45 = sbr.rel (0) target = $region41
    $region40: #{compat_model_forward.1} parent=1 // pred_region
      _
    $region41: #{compat_model_forward.1} parent=1 // pred_fallthru
      _
    // Predicated region
    $region42: #{compat_model_forward.1} parent=1 // pred_check
      _
    $region43: #{compat_model_forward.1} parent=1 // pred_check_branch
      %47 = sbr.rel (0) target = $region45
    $region44: #{compat_model_forward.1} parent=1 // pred_region
      _
    $region45: #{compat_model_forward.1} parent=1 // pred_fallthru
      _
    // Predicated region
    $region46: #{compat_model_forward.1} parent=1 // pred_check
      _
    $region47: #{compat_model_forward.1} parent=1 // pred_check_branch
      %49 = sbr.rel (0) target = $region49
    $region48: #{compat_model_forward.1} parent=1 // pred_region
      _
    $region49: #{compat_model_forward.1} parent=1 // pred_fallthru
      _
    // Predicated region
    $region50: #{compat_model_forward.1} parent=1 // pred_check
      _
    $region51: #{compat_model_forward.1} parent=1 // pred_check_branch
      %51 = sbr.rel (0) target = $region53
    $region52: #{compat_model_forward.1} parent=1 // pred_region
      _
    $region53: #{compat_model_forward.1} parent=1 // pred_fallthru
      _
    // Predicated region
    $region54: #{compat_model_forward.1} parent=1 // pred_check
      _
    $region55: #{compat_model_forward.1} parent=1 // pred_check_branch
      %53 = sbr.rel (0) target = $region57
    $region56: #{compat_model_forward.1} parent=1 // pred_region
      _
    $region57: #{compat_model_forward.1} parent=1 // pred_fallthru
      _
    // Predicated region
    $region58: #{compat_model_forward.1} parent=1 // pred_check
      _
    $region59: #{compat_model_forward.1} parent=1 // pred_check_branch
      %55 = sbr.rel (0) target = $region61
    $region60: #{compat_model_forward.1} parent=1 // pred_region
      _
    $region61: #{compat_model_forward.1} parent=1 // pred_fallthru
      _
    // Predicated region
    $region62: #{compat_model_forward.1} parent=1 // pred_check
      _
    $region63: #{compat_model_forward.1} parent=1 // pred_check_branch
      %57 = sbr.rel (0) target = $region65
    $region64: #{compat_model_forward.1} parent=1 // pred_region
      _
    $region65: #{compat_model_forward.1} parent=1 // pred_fallthru
      _
    %v58 = vld [vmem:[%s0] sm:$0xff]
    %v59 = vld [vmem:[%s0 + $0x8] sm:$0xff]
    %v60 = vld [vmem:[%s0 + $0x10] sm:$0xff]
    %v61 = vld [vmem:[%s0 + $0x18] sm:$0xff]
    %v62 = vld [vmem:[%s0 + $0x20] sm:$0xff]
    %v63 = vld [vmem:[%s0 + $0x28] sm:$0xff]
    %v64 = vld [vmem:[%s0 + $0x30] sm:$0xff]
    %v65 = vld [vmem:[%s0 + $0x38] sm:$0xff]
    %v66 = vld [vmem:[%s0 + $0x40] sm:$0xff]
    %v67 = vld [vmem:[%s0 + $0x48] sm:$0xff]
    %v68 = vld [vmem:[%s0 + $0x50] sm:$0xff]
    %v69 = vld [vmem:[%s0 + $0x58] sm:$0xff]
    %v70 = vld [vmem:[%s0 + $0x60] sm:$0xff]
    %v71 = vld [vmem:[%s0 + $0x68] sm:$0xff]
    %v72 = vld [vmem:[%s0 + $0x70] sm:$0xff]
    %v73 = vld [vmem:[%s0 + $0x78] sm:$0xff]
    %v74 = vld [vmem:[%s0 + $0x80] sm:$0xff]
    %v75 = vld [vmem:[%s0 + $0x88] sm:$0xff]
    %v76 = vld [vmem:[%s0 + $0x90] sm:$0xff]
    %v77 = vld [vmem:[%s0 + $0x98] sm:$0xff]
    %v78 = vld [vmem:[%s0 + $0xa0] sm:$0xff]
    %v79 = vld [vmem:[%s0 + $0xa8] sm:$0xff]
    %v80 = vld [vmem:[%s0 + $0xb0] sm:$0xff]
    %v81 = vld [vmem:[%s0 + $0xb8] sm:$0xff]
    %v82 = vld [vmem:[%s0 + $0xc0] sm:$0xff]
    %v83 = vld [vmem:[%s0 + $0xc8] sm:$0xff]
    %v84 = vld [vmem:[%s0 + $0xd0] sm:$0xff]
    %v85 = vld [vmem:[%s0 + $0xd8] sm:$0xff]
    %v86 = vld [vmem:[%s0 + $0xe0] sm:$0xff]
    %v87 = vld [vmem:[%s0 + $0xe8] sm:$0xff]
    %v88 = vld [vmem:[%s0 + $0xf0] sm:$0xff]
    %v89 = vld [vmem:[%s0 + $0xf8] sm:$0xff]
    %v90 = vld [vmem:[%s0 + $0x100] sm:$0xff]
    %v91 = vld [vmem:[%s0 + $0x108] sm:$0xff]
    %v92 = vld [vmem:[%s0 + $0x110] sm:$0xff]
    %v93 = vld [vmem:[%s0 + $0x118] sm:$0xff]
    %v94 = vld [vmem:[%s0 + $0x120] sm:$0xff]
    %v95 = vld [vmem:[%s0 + $0x128] sm:$0xff]
    %v96 = vld [vmem:[%s0 + $0x130] sm:$0xff]
    %v97 = vld [vmem:[%s0 + $0x138] sm:$0xff]
    %v98 = vld [vmem:[%s0 + $0x140] sm:$0xff]
    %v99 = vld [vmem:[%s0 + $0x148] sm:$0xff]
    %v100 = vld [vmem:[%s0 + $0x150] sm:$0xff]
    %v101 = vld [vmem:[%s0 + $0x158] sm:$0xff]
    %v102 = vld [vmem:[%s0 + $0x160] sm:$0xff]
    %v103 = vld [vmem:[%s0 + $0x168] sm:$0xff]
    %v104 = vld [vmem:[%s0 + $0x170] sm:$0xff]
    %v105 = vld [vmem:[%s0 + $0x178] sm:$0xff]
    %v106 = vld [vmem:[%s0 + $0x180] sm:$0xff]
    %v107 = vld [vmem:[%s0 + $0x188] sm:$0xff]
    %v108 = vld [vmem:[%s0 + $0x190] sm:$0xff]
    %v109 = vld [vmem:[%s0 + $0x198] sm:$0xff]
    %v110 = vld [vmem:[%s0 + $0x1a0] sm:$0xff]
    %v111 = vld [vmem:[%s0 + $0x1a8] sm:$0xff]
    %v112 = vld [vmem:[%s0 + $0x1b0] sm:$0xff]
    %v113 = vld [vmem:[%s0 + $0x1b8] sm:$0xff]
    %v114 = vld [vmem:[%s0 + $0x1c0] sm:$0xff]
    %v115 = vld [vmem:[%s0 + $0x1c8] sm:$0xff]
    %v116 = vld [vmem:[%s0 + $0x1d0] sm:$0xff]
    %v117 = vld [vmem:[%s0 + $0x1d8] sm:$0xff]
    %v118 = vld [vmem:[%s0 + $0x1e0] sm:$0xff]
    %v119 = vld [vmem:[%s0 + $0x1e8] sm:$0xff]
    %v120 = vld [vmem:[%s0 + $0x1f0] sm:$0xff]
    %v121 = vld [vmem:[%s0 + $0x1f8] sm:$0xff]
    %v122 = vld [vmem:[%s0 + $0x200] sm:$0xff]
    %v123 = vld [vmem:[%s0 + $0x208] sm:$0xff]
    %v124 = vld [vmem:[%s0 + $0x210] sm:$0xff]
    %v125 = vld [vmem:[%s0 + $0x218] sm:$0xff]
    %v126 = vld [vmem:[%s0 + $0x220] sm:$0xff]
    %v127 = vld [vmem:[%s0 + $0x228] sm:$0xff]
    %v128 = vld [vmem:[%s0 + $0x230] sm:$0xff]
    %v129 = vld [vmem:[%s0 + $0x238] sm:$0xff]
    %v130 = vld [vmem:[%s0 + $0x240] sm:$0xff]
    %v131 = vld [vmem:[%s0 + $0x248] sm:$0xff]
    %v132 = vld [vmem:[%s0 + $0x250] sm:$0xff]
    %v133 = vld [vmem:[%s0 + $0x258] sm:$0xff]
    %v134 = vld [vmem:[%s0 + $0x260] sm:$0xff]
    %v135 = vld [vmem:[%s0 + $0x268] sm:$0xff]
    %v136 = vld [vmem:[%s0 + $0x270] sm:$0xff]
    %v137 = vld [vmem:[%s0 + $0x278] sm:$0xff]
    %v138 = vld [vmem:[%s0 + $0x280] sm:$0xff]
    %v139 = vld [vmem:[%s0 + $0x288] sm:$0xff]
    %v140 = vld [vmem:[%s0 + $0x290] sm:$0xff]
    %v141 = vld [vmem:[%s0 + $0x298] sm:$0xff]
    %v142 = vld [vmem:[%s0 + $0x2a0] sm:$0xff]
    %v143 = vld [vmem:[%s0 + $0x2a8] sm:$0xff]
    %v144 = vld [vmem:[%s0 + $0x2b0] sm:$0xff]
    %v145 = vld [vmem:[%s0 + $0x2b8] sm:$0xff]
    %v146 = vld [vmem:[%s0 + $0x2c0] sm:$0xff]
    %v147 = vld [vmem:[%s0 + $0x2c8] sm:$0xff]
    %v148 = vld [vmem:[%s0 + $0x2d0] sm:$0xff]
    %v149 = vld [vmem:[%s0 + $0x2d8] sm:$0xff]
    %v150 = vld [vmem:[%s0 + $0x2e0] sm:$0xff]
    %v151 = vld [vmem:[%s0 + $0x2e8] sm:$0xff]
    %v152 = vld [vmem:[%s0 + $0x2f0] sm:$0xff]
    %v153 = vld [vmem:[%s0 + $0x2f8] sm:$0xff]
    %v154 = vld [vmem:[%s0 + $0x300] sm:$0xff]
    %v155 = vld [vmem:[%s0 + $0x308] sm:$0xff]
    %v156 = vld [vmem:[%s0 + $0x310] sm:$0xff]
    %v157 = vld [vmem:[%s0 + $0x318] sm:$0xff]
    %v158 = vld [vmem:[%s0 + $0x320] sm:$0xff]
    %v159 = vld [vmem:[%s0 + $0x328] sm:$0xff]
    %v160 = vld [vmem:[%s0 + $0x330] sm:$0xff]
    %v161 = vld [vmem:[%s0 + $0x338] sm:$0xff]
    %v162 = vld [vmem:[%s0 + $0x340] sm:$0xff]
    %v163 = vld [vmem:[%s0 + $0x348] sm:$0xff]
    %v164 = vld [vmem:[%s0 + $0x350] sm:$0xff]
    %v165 = vld [vmem:[%s0 + $0x358] sm:$0xff]
    %v166 = vld [vmem:[%s0 + $0x360] sm:$0xff]
    %v167 = vld [vmem:[%s0 + $0x368] sm:$0xff]
    %v168 = vld [vmem:[%s0 + $0x370] sm:$0xff]
    %v169 = vld [vmem:[%s0 + $0x378] sm:$0xff]
    %v170 = vld [vmem:[%s0 + $0x380] sm:$0xff]
    %v171 = vld [vmem:[%s0 + $0x388] sm:$0xff]
    %v172 = vld [vmem:[%s0 + $0x390] sm:$0xff]
    %v173 = vld [vmem:[%s0 + $0x398] sm:$0xff]
    %v174 = vld [vmem:[%s0 + $0x3a0] sm:$0xff]
    %v175 = vld [vmem:[%s0 + $0x3a8] sm:$0xff]
    %v176 = vld [vmem:[%s0 + $0x3b0] sm:$0xff]
    %v177 = vld [vmem:[%s0 + $0x3b8] sm:$0xff]
    %v178 = vld [vmem:[%s0 + $0x3c0] sm:$0xff]
    %v179 = vld [vmem:[%s0 + $0x3c8] sm:$0xff]
    %v180 = vld [vmem:[%s0 + $0x3d0] sm:$0xff]
    %v181 = vld [vmem:[%s0 + $0x3d8] sm:$0xff]
    %v182 = vld [vmem:[%s0 + $0x3e0] sm:$0xff]
    %v183 = vld [vmem:[%s0 + $0x3e8] sm:$0xff]
    %v184 = vld [vmem:[%s0 + $0x3f0] sm:$0xff]
    %v185 = vld [vmem:[%s0 + $0x3f8] sm:$0xff]
    %v186 = vld [vmem:[%s0 + $0x400] sm:$0xff]
    %v187 = vld [vmem:[%s0 + $0x408] sm:$0xff]
    %v188 = vld [vmem:[%s0 + $0x410] sm:$0xff]
    %v189 = vld [vmem:[%s0 + $0x418] sm:$0xff]
    %v190 = vld [vmem:[%s0 + $0x420] sm:$0xff]
    %v191 = vld [vmem:[%s0 + $0x428] sm:$0xff]
    %v192 = vld [vmem:[%s0 + $0x430] sm:$0xff]
    %v193 = vld [vmem:[%s0 + $0x438] sm:$0xff]
    %v194 = vld [vmem:[%s0 + $0x440] sm:$0xff]
    %v195 = vld [vmem:[%s0 + $0x448] sm:$0xff]
    %v196 = vld [vmem:[%s0 + $0x450] sm:$0xff]
    %v197 = vld [vmem:[%s0 + $0x458] sm:$0xff]
    %v198 = vld [vmem:[%s0 + $0x460] sm:$0xff]
    %v199 = vld [vmem:[%s0 + $0x468] sm:$0xff]
    %v200 = vld [vmem:[%s0 + $0x470] sm:$0xff]
    %v201 = vld [vmem:[%s0 + $0x478] sm:$0xff]
    %v202 = vld [vmem:[%s0 + $0x480] sm:$0xff]
    %v203 = vld [vmem:[%s0 + $0x488] sm:$0xff]
    %v204 = vld [vmem:[%s0 + $0x490] sm:$0xff]
    %v205 = vld [vmem:[%s0 + $0x498] sm:$0xff]
    %v206 = vld [vmem:[%s0 + $0x4a0] sm:$0xff]
    %v207 = vld [vmem:[%s0 + $0x4a8] sm:$0xff]
    %v208 = vld [vmem:[%s0 + $0x4b0] sm:$0xff]
    %v209 = vld [vmem:[%s0 + $0x4b8] sm:$0xff]
    %v210 = vld [vmem:[%s0 + $0x4c0] sm:$0xff]
    %v211 = vld [vmem:[%s0 + $0x4c8] sm:$0xff]
    %v212 = vld [vmem:[%s0 + $0x4d0] sm:$0xff]
    %v213 = vld [vmem:[%s0 + $0x4d8] sm:$0xff]
    %v214 = vld [vmem:[%s0 + $0x4e0] sm:$0xff]
    %v215 = vld [vmem:[%s0 + $0x4e8] sm:$0xff]
    %v216 = vld [vmem:[%s0 + $0x4f0] sm:$0xff]
    %v217 = vld [vmem:[%s0 + $0x4f8] sm:$0xff]
    %v218 = vld [vmem:[%s0 + $0x500] sm:$0xff]
    %v219 = vld [vmem:[%s0 + $0x508] sm:$0xff]
    %v220 = vld [vmem:[%s0 + $0x510] sm:$0xff]
    %v221 = vld [vmem:[%s0 + $0x518] sm:$0xff]
    %v222 = vld [vmem:[%s0 + $0x520] sm:$0xff]
    %v223 = vld [vmem:[%s0 + $0x528] sm:$0xff]
    %v224 = vld [vmem:[%s0 + $0x530] sm:$0xff]
    %v225 = vld [vmem:[%s0 + $0x538] sm:$0xff]
    %v226 = vld [vmem:[%s0 + $0x540] sm:$0xff]
    %v227 = vld [vmem:[%s0 + $0x548] sm:$0xff]
    %v228 = vld [vmem:[%s0 + $0x550] sm:$0xff]
    %v229 = vld [vmem:[%s0 + $0x558] sm:$0xff]
    %v230 = vld [vmem:[%s0 + $0x560] sm:$0xff]
    %v231 = vld [vmem:[%s0 + $0x568] sm:$0xff]
    %v232 = vld [vmem:[%s0 + $0x570] sm:$0xff]
    %v233 = vld [vmem:[%s0 + $0x578] sm:$0xff]
    %v234 = vld [vmem:[%s0 + $0x580] sm:$0xff]
    %v235 = vld [vmem:[%s0 + $0x588] sm:$0xff]
    %v236 = vld [vmem:[%s0 + $0x590] sm:$0xff]
    %v237 = vld [vmem:[%s0 + $0x598] sm:$0xff]
    %v238 = vld [vmem:[%s0 + $0x5a0] sm:$0xff]
    %v239 = vld [vmem:[%s0 + $0x5a8] sm:$0xff]
    %v240 = vld [vmem:[%s0 + $0x5b0] sm:$0xff]
    %v241 = vld [vmem:[%s0 + $0x5b8] sm:$0xff]
    %v242 = vld [vmem:[%s0 + $0x5c0] sm:$0xff]
    %v243 = vld [vmem:[%s0 + $0x5c8] sm:$0xff]
    %v244 = vld [vmem:[%s0 + $0x5d0] sm:$0xff]
    %v245 = vld [vmem:[%s0 + $0x5d8] sm:$0xff]
    %v246 = vld [vmem:[%s0 + $0x5e0] sm:$0xff]
    %v247 = vld [vmem:[%s0 + $0x5e8] sm:$0xff]
    %v248 = vld [vmem:[%s0 + $0x5f0] sm:$0xff]
    %v249 = vld [vmem:[%s0 + $0x5f8] sm:$0xff]
    %v250 = vld [vmem:[%s0 + $0x600] sm:$0xff]
    %v251 = vld [vmem:[%s0 + $0x608] sm:$0xff]
    %v252 = vld [vmem:[%s0 + $0x610] sm:$0xff]
    %v253 = vld [vmem:[%s0 + $0x618] sm:$0xff]
    %v254 = vld [vmem:[%s0 + $0x620] sm:$0xff]
    %v255 = vld [vmem:[%s0 + $0x628] sm:$0xff]
    %v256 = vld [vmem:[%s0 + $0x630] sm:$0xff]
    %v257 = vld [vmem:[%s0 + $0x638] sm:$0xff]
    %v258 = vld [vmem:[%s0 + $0x640] sm:$0xff]
    %v259 = vld [vmem:[%s0 + $0x648] sm:$0xff]
    %v260 = vld [vmem:[%s0 + $0x650] sm:$0xff]
    %v261 = vld [vmem:[%s0 + $0x658] sm:$0xff]
    %v262 = vld [vmem:[%s0 + $0x660] sm:$0xff]
    %v263 = vld [vmem:[%s0 + $0x668] sm:$0xff]
    %v264 = vld [vmem:[%s0 + $0x670] sm:$0xff]
    %v265 = vld [vmem:[%s0 + $0x678] sm:$0xff]
    %v266 = vld [vmem:[%s0 + $0x680] sm:$0xff]
    %v267 = vld [vmem:[%s0 + $0x688] sm:$0xff]
    %v268 = vld [vmem:[%s0 + $0x690] sm:$0xff]
    %v269 = vld [vmem:[%s0 + $0x698] sm:$0xff]
    %v270 = vld [vmem:[%s0 + $0x6a0] sm:$0xff]
    %v271 = vld [vmem:[%s0 + $0x6a8] sm:$0xff]
    %v272 = vld [vmem:[%s0 + $0x6b0] sm:$0xff]
    %v273 = vld [vmem:[%s0 + $0x6b8] sm:$0xff]
    %v274 = vld [vmem:[%s0 + $0x6c0] sm:$0xff]
    %v275 = vld [vmem:[%s0 + $0x6c8] sm:$0xff]
    %v276 = vld [vmem:[%s0 + $0x6d0] sm:$0xff]
    %v277 = vld [vmem:[%s0 + $0x6d8] sm:$0xff]
    %v278 = vld [vmem:[%s0 + $0x6e0] sm:$0xff]
    %v279 = vld [vmem:[%s0 + $0x6e8] sm:$0xff]
    %v280 = vld [vmem:[%s0 + $0x6f0] sm:$0xff]
    %v281 = vld [vmem:[%s0 + $0x6f8] sm:$0xff]
    %v282 = vld [vmem:[%s0 + $0x700] sm:$0xff]
    %v283 = vld [vmem:[%s0 + $0x708] sm:$0xff]
    %v284 = vld [vmem:[%s0 + $0x710] sm:$0xff]
    %v285 = vld [vmem:[%s0 + $0x718] sm:$0xff]
    %v286 = vld [vmem:[%s0 + $0x720] sm:$0xff]
    %v287 = vld [vmem:[%s0 + $0x728] sm:$0xff]
    %v288 = vld [vmem:[%s0 + $0x730] sm:$0xff]
    %v289 = vld [vmem:[%s0 + $0x738] sm:$0xff]
    %v290 = vld [vmem:[%s0 + $0x740] sm:$0xff]
    %v291 = vld [vmem:[%s0 + $0x748] sm:$0xff]
    %v292 = vld [vmem:[%s0 + $0x750] sm:$0xff]
    %v293 = vld [vmem:[%s0 + $0x758] sm:$0xff]
    %v294 = vld [vmem:[%s0 + $0x760] sm:$0xff]
    %v295 = vld [vmem:[%s0 + $0x768] sm:$0xff]
    %v296 = vld [vmem:[%s0 + $0x770] sm:$0xff]
    %v297 = vld [vmem:[%s0 + $0x778] sm:$0xff]
    %v298 = vld [vmem:[%s0 + $0x780] sm:$0xff]
    %v299 = vld [vmem:[%s0 + $0x788] sm:$0xff]
    %v300 = vld [vmem:[%s0 + $0x790] sm:$0xff]
    %v301 = vld [vmem:[%s0 + $0x798] sm:$0xff]
    %v302 = vld [vmem:[%s0 + $0x7a0] sm:$0xff]
    %v303 = vld [vmem:[%s0 + $0x7a8] sm:$0xff]
    %v304 = vld [vmem:[%s0 + $0x7b0] sm:$0xff]
    %v305 = vld [vmem:[%s0 + $0x7b8] sm:$0xff]
    %v306 = vld [vmem:[%s0 + $0x7c0] sm:$0xff]
    %v307 = vld [vmem:[%s0 + $0x7c8] sm:$0xff]
    %v308 = vld [vmem:[%s0 + $0x7d0] sm:$0xff]
    %v309 = vld [vmem:[%s0 + $0x7d8] sm:$0xff]
    %v310 = vld [vmem:[%s0 + $0x7e0] sm:$0xff]
    %v311 = vld [vmem:[%s0 + $0x7e8] sm:$0xff]
    %v312 = vld [vmem:[%s0 + $0x7f0] sm:$0xff]
    %v313 = vld [vmem:[%s0 + $0x7f8] sm:$0xff]
    %v314 = vld [vmem:[%s2] sm:$0xff]
    %v316 = vcombine.high %v314, %v314
    %vm317 = vcmask 31744
    %v319 = vsel %vm317, %v58, 0
    %v322 = vsel %vm317, %v59, 0
    %v325 = vsel %vm317, %v60, 0
    %v328 = vsel %vm317, %v61, 0
    %v331 = vsel %vm317, %v62, 0
    %v334 = vsel %vm317, %v63, 0
    %v337 = vsel %vm317, %v64, 0
    %v340 = vsel %vm317, %v65, 0
    %v343 = vsel %vm317, %v66, 0
    %v346 = vsel %vm317, %v67, 0
    %v349 = vsel %vm317, %v68, 0
    %v352 = vsel %vm317, %v69, 0
    %v355 = vsel %vm317, %v70, 0
    %v358 = vsel %vm317, %v71, 0
    %v361 = vsel %vm317, %v72, 0
    %v364 = vsel %vm317, %v73, 0
    %v367 = vsel %vm317, %v74, 0
    %v370 = vsel %vm317, %v75, 0
    %v373 = vsel %vm317, %v76, 0
    %v376 = vsel %vm317, %v77, 0
    %v379 = vsel %vm317, %v78, 0
    %v382 = vsel %vm317, %v79, 0
    %v385 = vsel %vm317, %v80, 0
    %v388 = vsel %vm317, %v81, 0
    %v391 = vsel %vm317, %v82, 0
    %v394 = vsel %vm317, %v83, 0
    %v397 = vsel %vm317, %v84, 0
    %v400 = vsel %vm317, %v85, 0
    %v403 = vsel %vm317, %v86, 0
    %v406 = vsel %vm317, %v87, 0
    %v409 = vsel %vm317, %v88, 0
    %v412 = vsel %vm317, %v89, 0
    %v415 = vsel %vm317, %v90, 0
    %v418 = vsel %vm317, %v91, 0
    %v421 = vsel %vm317, %v92, 0
    %v424 = vsel %vm317, %v93, 0
    %v427 = vsel %vm317, %v94, 0
    %v430 = vsel %vm317, %v95, 0
    %v433 = vsel %vm317, %v96, 0
    %v436 = vsel %vm317, %v97, 0
    %v439 = vsel %vm317, %v98, 0
    %v442 = vsel %vm317, %v99, 0
    %v445 = vsel %vm317, %v100, 0
    %v448 = vsel %vm317, %v101, 0
    %v451 = vsel %vm317, %v102, 0
    %v454 = vsel %vm317, %v103, 0
    %v457 = vsel %vm317, %v104, 0
    %v460 = vsel %vm317, %v105, 0
    %v463 = vsel %vm317, %v106, 0
    %v466 = vsel %vm317, %v107, 0
    %v469 = vsel %vm317, %v108, 0
    %v472 = vsel %vm317, %v109, 0
    %v475 = vsel %vm317, %v110, 0
    %v478 = vsel %vm317, %v111, 0
    %v481 = vsel %vm317, %v112, 0
    %v484 = vsel %vm317, %v113, 0
    %v487 = vsel %vm317, %v114, 0
    %v490 = vsel %vm317, %v115, 0
    %v493 = vsel %vm317, %v116, 0
    %v496 = vsel %vm317, %v117, 0
    %v499 = vsel %vm317, %v118, 0
    %v502 = vsel %vm317, %v119, 0
    %v505 = vsel %vm317, %v120, 0
    %v508 = vsel %vm317, %v121, 0
    %v511 = vsel %vm317, %v122, 0
    %v514 = vsel %vm317, %v123, 0
    %v517 = vsel %vm317, %v124, 0
    %v520 = vsel %vm317, %v125, 0
    %v523 = vsel %vm317, %v126, 0
    %v526 = vsel %vm317, %v127, 0
    %v529 = vsel %vm317, %v128, 0
    %v532 = vsel %vm317, %v129, 0
    %v535 = vsel %vm317, %v130, 0
    %v538 = vsel %vm317, %v131, 0
    %v541 = vsel %vm317, %v132, 0
    %v544 = vsel %vm317, %v133, 0
    %v547 = vsel %vm317, %v134, 0
    %v550 = vsel %vm317, %v135, 0
    %v553 = vsel %vm317, %v136, 0
    %v556 = vsel %vm317, %v137, 0
    %v559 = vsel %vm317, %v138, 0
    %v562 = vsel %vm317, %v139, 0
    %v565 = vsel %vm317, %v140, 0
    %v568 = vsel %vm317, %v141, 0
    %v571 = vsel %vm317, %v142, 0
    %v574 = vsel %vm317, %v143, 0
    %v577 = vsel %vm317, %v144, 0
    %v580 = vsel %vm317, %v145, 0
    %v583 = vsel %vm317, %v146, 0
    %v586 = vsel %vm317, %v147, 0
    %v589 = vsel %vm317, %v148, 0
    %v592 = vsel %vm317, %v149, 0
    %v595 = vsel %vm317, %v150, 0
    %v598 = vsel %vm317, %v151, 0
    %v601 = vsel %vm317, %v152, 0
    %v604 = vsel %vm317, %v153, 0
    %v607 = vsel %vm317, %v154, 0
    %v610 = vsel %vm317, %v155, 0
    %v613 = vsel %vm317, %v156, 0
    %v616 = vsel %vm317, %v157, 0
    %v619 = vsel %vm317, %v158, 0
    %v622 = vsel %vm317, %v159, 0
    %v625 = vsel %vm317, %v160, 0
    %v628 = vsel %vm317, %v161, 0
    %v631 = vsel %vm317, %v162, 0
    %v634 = vsel %vm317, %v163, 0
    %v637 = vsel %vm317, %v164, 0
    %v640 = vsel %vm317, %v165, 0
    %v643 = vsel %vm317, %v166, 0
    %v646 = vsel %vm317, %v167, 0
    %v649 = vsel %vm317, %v168, 0
    %v652 = vsel %vm317, %v169, 0
    %v655 = vsel %vm317, %v170, 0
    %v658 = vsel %vm317, %v171, 0
    %v661 = vsel %vm317, %v172, 0
    %v664 = vsel %vm317, %v173, 0
    %v667 = vsel %vm317, %v174, 0
    %v670 = vsel %vm317, %v175, 0
    %v673 = vsel %vm317, %v176, 0
    %v676 = vsel %vm317, %v177, 0
    %v679 = vsel %vm317, %v178, 0
    %v682 = vsel %vm317, %v179, 0
    %v685 = vsel %vm317, %v180, 0
    %v688 = vsel %vm317, %v181, 0
    %v691 = vsel %vm317, %v182, 0
    %v694 = vsel %vm317, %v183, 0
    %v697 = vsel %vm317, %v184, 0
    %v700 = vsel %vm317, %v185, 0
    %v703 = vsel %vm317, %v186, 0
    %v706 = vsel %vm317, %v187, 0
    %v709 = vsel %vm317, %v188, 0
    %v712 = vsel %vm317, %v189, 0
    %v715 = vsel %vm317, %v190, 0
    %v718 = vsel %vm317, %v191, 0
    %v721 = vsel %vm317, %v192, 0
    %v724 = vsel %vm317, %v193, 0
    %v727 = vsel %vm317, %v194, 0
    %v730 = vsel %vm317, %v195, 0
    %v733 = vsel %vm317, %v196, 0
    %v736 = vsel %vm317, %v197, 0
    %v739 = vsel %vm317, %v198, 0
    %v742 = vsel %vm317, %v199, 0
    %v745 = vsel %vm317, %v200, 0
    %v748 = vsel %vm317, %v201, 0
    %v751 = vsel %vm317, %v202, 0
    %v754 = vsel %vm317, %v203, 0
    %v757 = vsel %vm317, %v204, 0
    %v760 = vsel %vm317, %v205, 0
    %v763 = vsel %vm317, %v206, 0
    %v766 = vsel %vm317, %v207, 0
    %v769 = vsel %vm317, %v208, 0
    %v772 = vsel %vm317, %v209, 0
    %v775 = vsel %vm317, %v210, 0
    %v778 = vsel %vm317, %v211, 0
    %v781 = vsel %vm317, %v212, 0
    %v784 = vsel %vm317, %v213, 0
    %v787 = vsel %vm317, %v214, 0
    %v790 = vsel %vm317, %v215, 0
    %v793 = vsel %vm317, %v216, 0
    %v796 = vsel %vm317, %v217, 0
    %v799 = vsel %vm317, %v218, 0
    %v802 = vsel %vm317, %v219, 0
    %v805 = vsel %vm317, %v220, 0
    %v808 = vsel %vm317, %v221, 0
    %v811 = vsel %vm317, %v222, 0
    %v814 = vsel %vm317, %v223, 0
    %v817 = vsel %vm317, %v224, 0
    %v820 = vsel %vm317, %v225, 0
    %v823 = vsel %vm317, %v226, 0
    %v826 = vsel %vm317, %v227, 0
    %v829 = vsel %vm317, %v228, 0
    %v832 = vsel %vm317, %v229, 0
    %v835 = vsel %vm317, %v230, 0
    %v838 = vsel %vm317, %v231, 0
    %v841 = vsel %vm317, %v232, 0
    %v844 = vsel %vm317, %v233, 0
    %v847 = vsel %vm317, %v234, 0
    %v850 = vsel %vm317, %v235, 0
    %v853 = vsel %vm317, %v236, 0
    %v856 = vsel %vm317, %v237, 0
    %v859 = vsel %vm317, %v238, 0
    %v862 = vsel %vm317, %v239, 0
    %v865 = vsel %vm317, %v240, 0
    %v868 = vsel %vm317, %v241, 0
    %v871 = vsel %vm317, %v242, 0
    %v874 = vsel %vm317, %v243, 0
    %v877 = vsel %vm317, %v244, 0
    %v880 = vsel %vm317, %v245, 0
    %v883 = vsel %vm317, %v246, 0
    %v886 = vsel %vm317, %v247, 0
    %v889 = vsel %vm317, %v248, 0
    %v892 = vsel %vm317, %v249, 0
    %v895 = vsel %vm317, %v250, 0
    %v898 = vsel %vm317, %v251, 0
    %v901 = vsel %vm317, %v252, 0
    %v904 = vsel %vm317, %v253, 0
    %v907 = vsel %vm317, %v254, 0
    %v910 = vsel %vm317, %v255, 0
    %v913 = vsel %vm317, %v256, 0
    %v916 = vsel %vm317, %v257, 0
    %v919 = vsel %vm317, %v258, 0
    %v922 = vsel %vm317, %v259, 0
    %v925 = vsel %vm317, %v260, 0
    %v928 = vsel %vm317, %v261, 0
    %v931 = vsel %vm317, %v262, 0
    %v934 = vsel %vm317, %v263, 0
    %v937 = vsel %vm317, %v264, 0
    %v940 = vsel %vm317, %v265, 0
    %v943 = vsel %vm317, %v266, 0
    %v946 = vsel %vm317, %v267, 0
    %v949 = vsel %vm317, %v268, 0
    %v952 = vsel %vm317, %v269, 0
    %v955 = vsel %vm317, %v270, 0
    %v958 = vsel %vm317, %v271, 0
    %v961 = vsel %vm317, %v272, 0
    %v964 = vsel %vm317, %v273, 0
    %v967 = vsel %vm317, %v274, 0
    %v970 = vsel %vm317, %v275, 0
    %v973 = vsel %vm317, %v276, 0
    %v976 = vsel %vm317, %v277, 0
    %v979 = vsel %vm317, %v278, 0
    %v982 = vsel %vm317, %v279, 0
    %v985 = vsel %vm317, %v280, 0
    %v988 = vsel %vm317, %v281, 0
    %v991 = vsel %vm317, %v282, 0
    %v994 = vsel %vm317, %v283, 0
    %v997 = vsel %vm317, %v284, 0
    %v1000 = vsel %vm317, %v285, 0
    %v1003 = vsel %vm317, %v286, 0
    %v1006 = vsel %vm317, %v287, 0
    %v1009 = vsel %vm317, %v288, 0
    %v1012 = vsel %vm317, %v289, 0
    %v1015 = vsel %vm317, %v290, 0
    %v1018 = vsel %vm317, %v291, 0
    %v1021 = vsel %vm317, %v292, 0
    %v1024 = vsel %vm317, %v293, 0
    %v1027 = vsel %vm317, %v294, 0
    %v1030 = vsel %vm317, %v295, 0
    %v1033 = vsel %vm317, %v296, 0
    %v1036 = vsel %vm317, %v297, 0
    %v1039 = vsel %vm317, %v298, 0
    %v1042 = vsel %vm317, %v299, 0
    %v1045 = vsel %vm317, %v300, 0
    %v1048 = vsel %vm317, %v301, 0
    %v1051 = vsel %vm317, %v302, 0
    %v1054 = vsel %vm317, %v303, 0
    %v1057 = vsel %vm317, %v304, 0
    %v1060 = vsel %vm317, %v305, 0
    %v1063 = vsel %vm317, %v306, 0
    %v1066 = vsel %vm317, %v307, 0
    %v1069 = vsel %vm317, %v308, 0
    %v1072 = vsel %vm317, %v309, 0
    %v1075 = vsel %vm317, %v310, 0
    %v1078 = vsel %vm317, %v311, 0
    %v1081 = vsel %vm317, %v312, 0
    %v1084 = vsel %vm317, %v313, 0
    %vm1086 = vcmask 1043456
    %v1087 = vsel %vm1086, %v314, 0
    %v1089 = vsel %vm1086, %v316, 0
    %1091 = vmatprep.subr.mxu0 0.0
    %1092 = vmatpush1.msra.mxu0 0.0
    %1093 = vmatprep.subr.mxu0 0.0
    %1094 = vmatpush1.msra.mxu0 0.0
    %1095 = vmatprep.subr.mxu0 0.0
    %1096 = vmatpush1.msra.mxu0 0.0
    %1097 = vmatprep.subr.mxu0 0.0
    %1098 = vmatpush1.msra.mxu0 0.0
    %1099 = vmatprep.subr.mxu0 0.0
    %1100 = vmatpush1.msra.mxu0 0.0
    %1101 = vmatprep.subr.mxu0 0.0
    %1102 = vmatpush1.msra.mxu0 0.0
    %1103 = vmatprep.subr.mxu0 0.0
    %1104 = vmatpush1.msra.mxu0 0.0
    %1105 = vmatprep.subr.mxu0 0.0
    %1106 = vmatpush1.msra.mxu0 0.0
    %1107 = vmatprep.subr.mxu0 0.0
    %1108 = vmatpush1.msra.mxu0 0.0
    %1109 = vmatprep.subr.mxu0 0.0
    %1110 = vmatpush1.msra.mxu0 0.0
    %1111 = vmatprep.subr.mxu0 0.0
    %1112 = vmatpush1.msra.mxu0 0.0
    %1113 = vmatprep.subr.mxu0 0.0
    %1114 = vmatpush1.msra.mxu0 0.0
    %1115 = vmatprep.subr.mxu0 0.0
    %1116 = vmatpush1.msra.mxu0 0.0
    %1117 = vmatprep.subr.mxu0 0.0
    %1118 = vmatpush1.msra.mxu0 0.0
    %1119 = vmatprep.subr.mxu0 0.0
    %1120 = vmatpush1.msra.mxu0 0.0
    %1121 = vmatprep.subr.mxu0 %v1089
    %1122 = vmatpush1.msra.mxu0 %v1087
    %1123 = vmatprep.subr.mxu0 0.0
    %1124 = vmatpush2.msra.mxu0 0.0
    %1125 = vmatprep.subr.mxu0 0.0
    %1126 = vmatpush2.msra.mxu0 0.0
    %1127 = vmatprep.subr.mxu0 0.0
    %1128 = vmatpush2.msra.mxu0 0.0
    %1129 = vmatprep.subr.mxu0 0.0
    %1130 = vmatpush2.msra.mxu0 0.0
    %1131 = vmatprep.subr.mxu0 0.0
    %1132 = vmatpush2.msra.mxu0 0.0
    %1133 = vmatprep.subr.mxu0 0.0
    %1134 = vmatpush2.msra.mxu0 0.0
    %1135 = vmatprep.subr.mxu0 0.0
    %1136 = vmatpush2.msra.mxu0 0.0
    %1137 = vmatprep.subr.mxu0 0.0
    %1138 = vmatpush2.msra.mxu0 0.0
    %1139 = vmatprep.subr.mxu0 0.0
    %1140 = vmatpush2.msra.mxu0 0.0
    %1141 = vmatprep.subr.mxu0 0.0
    %1142 = vmatpush2.msra.mxu0 0.0
    %1143 = vmatprep.subr.mxu0 0.0
    %1144 = vmatpush2.msra.mxu0 0.0
    %1145 = vmatprep.subr.mxu0 0.0
    %1146 = vmatpush2.msra.mxu0 0.0
    %1147 = vmatprep.subr.mxu0 0.0
    %1148 = vmatpush2.msra.mxu0 0.0
    %1149 = vmatprep.subr.mxu0 0.0
    %1150 = vmatpush2.msra.mxu0 0.0
    %1151 = vmatprep.subr.mxu0 0.0
    %1152 = vmatpush2.msra.mxu0 0.0
    %1153 = vmatprep.subr.mxu0 0.0
    %1154 = vmatpush2.msra.mxu0 0.0
    %1155 = vmatprep.mubr.f32.mxu0 0.0
    %1156 = vmatmul.mubr.f32.gmra.mxu0 %v319
    %v1157 = vpop.f32.mrf.mxu0
    %v1158 = vadd.f32 0.0, %v1157
    %v1159 = vpop.f32.mrf.mxu0
    %v1160 = vadd.f32 0.0, %v1159
    %1161 = vmatprep.mubr.f32.mxu0 0.0
    %1162 = vmatmul.mubr.f32.gmra.mxu0 %v322
    %v1163 = vpop.f32.mrf.mxu0
    %v1164 = vadd.f32 0.0, %v1163
    %v1165 = vpop.f32.mrf.mxu0
    %v1166 = vadd.f32 0.0, %v1165
    %1167 = vmatprep.mubr.f32.mxu0 0.0
    %1168 = vmatmul.mubr.f32.gmra.mxu0 %v325
    %v1169 = vpop.f32.mrf.mxu0
    %v1170 = vadd.f32 0.0, %v1169
    %v1171 = vpop.f32.mrf.mxu0
    %v1172 = vadd.f32 0.0, %v1171
    %1173 = vmatprep.mubr.f32.mxu0 0.0
    %1174 = vmatmul.mubr.f32.gmra.mxu0 %v328
    %v1175 = vpop.f32.mrf.mxu0
    %v1176 = vadd.f32 0.0, %v1175
    %v1177 = vpop.f32.mrf.mxu0
    %v1178 = vadd.f32 0.0, %v1177
    %1179 = vmatprep.mubr.f32.mxu0 0.0
    %1180 = vmatmul.mubr.f32.gmra.mxu0 %v331
    %v1181 = vpop.f32.mrf.mxu0
    %v1182 = vadd.f32 0.0, %v1181
    %v1183 = vpop.f32.mrf.mxu0
    %v1184 = vadd.f32 0.0, %v1183
    %1185 = vmatprep.mubr.f32.mxu0 0.0
    %1186 = vmatmul.mubr.f32.gmra.mxu0 %v334
    %v1187 = vpop.f32.mrf.mxu0
    %v1188 = vadd.f32 0.0, %v1187
    %v1189 = vpop.f32.mrf.mxu0
    %v1190 = vadd.f32 0.0, %v1189
    %1191 = vmatprep.mubr.f32.mxu0 0.0
    %1192 = vmatmul.mubr.f32.gmra.mxu0 %v337
    %v1193 = vpop.f32.mrf.mxu0
    %v1194 = vadd.f32 0.0, %v1193
    %v1195 = vpop.f32.mrf.mxu0
    %v1196 = vadd.f32 0.0, %v1195
    %1197 = vmatprep.mubr.f32.mxu0 0.0
    %1198 = vmatmul.mubr.f32.gmra.mxu0 %v340
    %v1199 = vpop.f32.mrf.mxu0
    %v1200 = vadd.f32 0.0, %v1199
    %v1201 = vpop.f32.mrf.mxu0
    %v1202 = vadd.f32 0.0, %v1201
    %1203 = vmatprep.mubr.f32.mxu0 0.0
    %1204 = vmatmul.mubr.f32.gmra.mxu0 %v343
    %v1205 = vpop.f32.mrf.mxu0
    %v1206 = vadd.f32 0.0, %v1205
    %v1207 = vpop.f32.mrf.mxu0
    %v1208 = vadd.f32 0.0, %v1207
    %1209 = vmatprep.mubr.f32.mxu0 0.0
    %1210 = vmatmul.mubr.f32.gmra.mxu0 %v346
    %v1211 = vpop.f32.mrf.mxu0
    %v1212 = vadd.f32 0.0, %v1211
    %v1213 = vpop.f32.mrf.mxu0
    %v1214 = vadd.f32 0.0, %v1213
    %1215 = vmatprep.mubr.f32.mxu0 0.0
    %1216 = vmatmul.mubr.f32.gmra.mxu0 %v349
    %v1217 = vpop.f32.mrf.mxu0
    %v1218 = vadd.f32 0.0, %v1217
    %v1219 = vpop.f32.mrf.mxu0
    %v1220 = vadd.f32 0.0, %v1219
    %1221 = vmatprep.mubr.f32.mxu0 0.0
    %1222 = vmatmul.mubr.f32.gmra.mxu0 %v352
    %v1223 = vpop.f32.mrf.mxu0
    %v1224 = vadd.f32 0.0, %v1223
    %v1225 = vpop.f32.mrf.mxu0
    %v1226 = vadd.f32 0.0, %v1225
    %1227 = vmatprep.mubr.f32.mxu0 0.0
    %1228 = vmatmul.mubr.f32.gmra.mxu0 %v355
    %v1229 = vpop.f32.mrf.mxu0
    %v1230 = vadd.f32 0.0, %v1229
    %v1231 = vpop.f32.mrf.mxu0
    %v1232 = vadd.f32 0.0, %v1231
    %1233 = vmatprep.mubr.f32.mxu0 0.0
    %1234 = vmatmul.mubr.f32.gmra.mxu0 %v358
    %v1235 = vpop.f32.mrf.mxu0
    %v1236 = vadd.f32 0.0, %v1235
    %v1237 = vpop.f32.mrf.mxu0
    %v1238 = vadd.f32 0.0, %v1237
    %1239 = vmatprep.mubr.f32.mxu0 0.0
    %1240 = vmatmul.mubr.f32.gmra.mxu0 %v361
    %v1241 = vpop.f32.mrf.mxu0
    %v1242 = vadd.f32 0.0, %v1241
    %v1243 = vpop.f32.mrf.mxu0
    %v1244 = vadd.f32 0.0, %v1243
    %1245 = vmatprep.mubr.f32.mxu0 0.0
    %1246 = vmatmul.mubr.f32.gmra.mxu0 %v364
    %v1247 = vpop.f32.mrf.mxu0
    %v1248 = vadd.f32 0.0, %v1247
    %v1249 = vpop.f32.mrf.mxu0
    %v1250 = vadd.f32 0.0, %v1249
    %1251 = vmatprep.mubr.f32.mxu0 0.0
    %1252 = vmatmul.mubr.f32.gmra.mxu0 %v367
    %v1253 = vpop.f32.mrf.mxu0
    %v1254 = vadd.f32 0.0, %v1253
    %v1255 = vpop.f32.mrf.mxu0
    %v1256 = vadd.f32 0.0, %v1255
    %1257 = vmatprep.mubr.f32.mxu0 0.0
    %1258 = vmatmul.mubr.f32.gmra.mxu0 %v370
    %v1259 = vpop.f32.mrf.mxu0
    %v1260 = vadd.f32 0.0, %v1259
    %v1261 = vpop.f32.mrf.mxu0
    %v1262 = vadd.f32 0.0, %v1261
    %1263 = vmatprep.mubr.f32.mxu0 0.0
    %1264 = vmatmul.mubr.f32.gmra.mxu0 %v373
    %v1265 = vpop.f32.mrf.mxu0
    %v1266 = vadd.f32 0.0, %v1265
    %v1267 = vpop.f32.mrf.mxu0
    %v1268 = vadd.f32 0.0, %v1267
    %1269 = vmatprep.mubr.f32.mxu0 0.0
    %1270 = vmatmul.mubr.f32.gmra.mxu0 %v376
    %v1271 = vpop.f32.mrf.mxu0
    %v1272 = vadd.f32 0.0, %v1271
    %v1273 = vpop.f32.mrf.mxu0
    %v1274 = vadd.f32 0.0, %v1273
    %1275 = vmatprep.mubr.f32.mxu0 0.0
    %1276 = vmatmul.mubr.f32.gmra.mxu0 %v379
    %v1277 = vpop.f32.mrf.mxu0
    %v1278 = vadd.f32 0.0, %v1277
    %v1279 = vpop.f32.mrf.mxu0
    %v1280 = vadd.f32 0.0, %v1279
    %1281 = vmatprep.mubr.f32.mxu0 0.0
    %1282 = vmatmul.mubr.f32.gmra.mxu0 %v382
    %v1283 = vpop.f32.mrf.mxu0
    %v1284 = vadd.f32 0.0, %v1283
    %v1285 = vpop.f32.mrf.mxu0
    %v1286 = vadd.f32 0.0, %v1285
    %1287 = vmatprep.mubr.f32.mxu0 0.0
    %1288 = vmatmul.mubr.f32.gmra.mxu0 %v385
    %v1289 = vpop.f32.mrf.mxu0
    %v1290 = vadd.f32 0.0, %v1289
    %v1291 = vpop.f32.mrf.mxu0
    %v1292 = vadd.f32 0.0, %v1291
    %1293 = vmatprep.mubr.f32.mxu0 0.0
    %1294 = vmatmul.mubr.f32.gmra.mxu0 %v388
    %v1295 = vpop.f32.mrf.mxu0
    %v1296 = vadd.f32 0.0, %v1295
    %v1297 = vpop.f32.mrf.mxu0
    %v1298 = vadd.f32 0.0, %v1297
    %1299 = vmatprep.mubr.f32.mxu0 0.0
    %1300 = vmatmul.mubr.f32.gmra.mxu0 %v391
    %v1301 = vpop.f32.mrf.mxu0
    %v1302 = vadd.f32 0.0, %v1301
    %v1303 = vpop.f32.mrf.mxu0
    %v1304 = vadd.f32 0.0, %v1303
    %1305 = vmatprep.mubr.f32.mxu0 0.0
    %1306 = vmatmul.mubr.f32.gmra.mxu0 %v394
    %v1307 = vpop.f32.mrf.mxu0
    %v1308 = vadd.f32 0.0, %v1307
    %v1309 = vpop.f32.mrf.mxu0
    %v1310 = vadd.f32 0.0, %v1309
    %1311 = vmatprep.mubr.f32.mxu0 0.0
    %1312 = vmatmul.mubr.f32.gmra.mxu0 %v397
    %v1313 = vpop.f32.mrf.mxu0
    %v1314 = vadd.f32 0.0, %v1313
    %v1315 = vpop.f32.mrf.mxu0
    %v1316 = vadd.f32 0.0, %v1315
    %1317 = vmatprep.mubr.f32.mxu0 0.0
    %1318 = vmatmul.mubr.f32.gmra.mxu0 %v400
    %v1319 = vpop.f32.mrf.mxu0
    %v1320 = vadd.f32 0.0, %v1319
    %v1321 = vpop.f32.mrf.mxu0
    %v1322 = vadd.f32 0.0, %v1321
    %1323 = vmatprep.mubr.f32.mxu0 0.0
    %1324 = vmatmul.mubr.f32.gmra.mxu0 %v403
    %v1325 = vpop.f32.mrf.mxu0
    %v1326 = vadd.f32 0.0, %v1325
    %v1327 = vpop.f32.mrf.mxu0
    %v1328 = vadd.f32 0.0, %v1327
    %1329 = vmatprep.mubr.f32.mxu0 0.0
    %1330 = vmatmul.mubr.f32.gmra.mxu0 %v406
    %v1331 = vpop.f32.mrf.mxu0
    %v1332 = vadd.f32 0.0, %v1331
    %v1333 = vpop.f32.mrf.mxu0
    %v1334 = vadd.f32 0.0, %v1333
    %1335 = vmatprep.mubr.f32.mxu0 0.0
    %1336 = vmatmul.mubr.f32.gmra.mxu0 %v409
    %v1337 = vpop.f32.mrf.mxu0
    %v1338 = vadd.f32 0.0, %v1337
    %v1339 = vpop.f32.mrf.mxu0
    %v1340 = vadd.f32 0.0, %v1339
    %1341 = vmatprep.mubr.f32.mxu0 0.0
    %1342 = vmatmul.mubr.f32.gmra.mxu0 %v412
    %v1343 = vpop.f32.mrf.mxu0
    %v1344 = vadd.f32 0.0, %v1343
    %v1345 = vpop.f32.mrf.mxu0
    %v1346 = vadd.f32 0.0, %v1345
    %1347 = vmatprep.mubr.f32.mxu0 0.0
    %1348 = vmatmul.mubr.f32.gmra.mxu0 %v415
    %v1349 = vpop.f32.mrf.mxu0
    %v1350 = vadd.f32 0.0, %v1349
    %v1351 = vpop.f32.mrf.mxu0
    %v1352 = vadd.f32 0.0, %v1351
    %1353 = vmatprep.mubr.f32.mxu0 0.0
    %1354 = vmatmul.mubr.f32.gmra.mxu0 %v418
    %v1355 = vpop.f32.mrf.mxu0
    %v1356 = vadd.f32 0.0, %v1355
    %v1357 = vpop.f32.mrf.mxu0
    %v1358 = vadd.f32 0.0, %v1357
    %1359 = vmatprep.mubr.f32.mxu0 0.0
    %1360 = vmatmul.mubr.f32.gmra.mxu0 %v421
    %v1361 = vpop.f32.mrf.mxu0
    %v1362 = vadd.f32 0.0, %v1361
    %v1363 = vpop.f32.mrf.mxu0
    %v1364 = vadd.f32 0.0, %v1363
    %1365 = vmatprep.mubr.f32.mxu0 0.0
    %1366 = vmatmul.mubr.f32.gmra.mxu0 %v424
    %v1367 = vpop.f32.mrf.mxu0
    %v1368 = vadd.f32 0.0, %v1367
    %v1369 = vpop.f32.mrf.mxu0
    %v1370 = vadd.f32 0.0, %v1369
    %1371 = vmatprep.mubr.f32.mxu0 0.0
    %1372 = vmatmul.mubr.f32.gmra.mxu0 %v427
    %v1373 = vpop.f32.mrf.mxu0
    %v1374 = vadd.f32 0.0, %v1373
    %v1375 = vpop.f32.mrf.mxu0
    %v1376 = vadd.f32 0.0, %v1375
    %1377 = vmatprep.mubr.f32.mxu0 0.0
    %1378 = vmatmul.mubr.f32.gmra.mxu0 %v430
    %v1379 = vpop.f32.mrf.mxu0
    %v1380 = vadd.f32 0.0, %v1379
    %v1381 = vpop.f32.mrf.mxu0
    %v1382 = vadd.f32 0.0, %v1381
    %1383 = vmatprep.mubr.f32.mxu0 0.0
    %1384 = vmatmul.mubr.f32.gmra.mxu0 %v433
    %v1385 = vpop.f32.mrf.mxu0
    %v1386 = vadd.f32 0.0, %v1385
    %v1387 = vpop.f32.mrf.mxu0
    %v1388 = vadd.f32 0.0, %v1387
    %1389 = vmatprep.mubr.f32.mxu0 0.0
    %1390 = vmatmul.mubr.f32.gmra.mxu0 %v436
    %v1391 = vpop.f32.mrf.mxu0
    %v1392 = vadd.f32 0.0, %v1391
    %v1393 = vpop.f32.mrf.mxu0
    %v1394 = vadd.f32 0.0, %v1393
    %1395 = vmatprep.mubr.f32.mxu0 0.0
    %1396 = vmatmul.mubr.f32.gmra.mxu0 %v439
    %v1397 = vpop.f32.mrf.mxu0
    %v1398 = vadd.f32 0.0, %v1397
    %v1399 = vpop.f32.mrf.mxu0
    %v1400 = vadd.f32 0.0, %v1399
    %1401 = vmatprep.mubr.f32.mxu0 0.0
    %1402 = vmatmul.mubr.f32.gmra.mxu0 %v442
    %v1403 = vpop.f32.mrf.mxu0
    %v1404 = vadd.f32 0.0, %v1403
    %v1405 = vpop.f32.mrf.mxu0
    %v1406 = vadd.f32 0.0, %v1405
    %1407 = vmatprep.mubr.f32.mxu0 0.0
    %1408 = vmatmul.mubr.f32.gmra.mxu0 %v445
    %v1409 = vpop.f32.mrf.mxu0
    %v1410 = vadd.f32 0.0, %v1409
    %v1411 = vpop.f32.mrf.mxu0
    %v1412 = vadd.f32 0.0, %v1411
    %1413 = vmatprep.mubr.f32.mxu0 0.0
    %1414 = vmatmul.mubr.f32.gmra.mxu0 %v448
    %v1415 = vpop.f32.mrf.mxu0
    %v1416 = vadd.f32 0.0, %v1415
    %v1417 = vpop.f32.mrf.mxu0
    %v1418 = vadd.f32 0.0, %v1417
    %1419 = vmatprep.mubr.f32.mxu0 0.0
    %1420 = vmatmul.mubr.f32.gmra.mxu0 %v451
    %v1421 = vpop.f32.mrf.mxu0
    %v1422 = vadd.f32 0.0, %v1421
    %v1423 = vpop.f32.mrf.mxu0
    %v1424 = vadd.f32 0.0, %v1423
    %1425 = vmatprep.mubr.f32.mxu0 0.0
    %1426 = vmatmul.mubr.f32.gmra.mxu0 %v454
    %v1427 = vpop.f32.mrf.mxu0
    %v1428 = vadd.f32 0.0, %v1427
    %v1429 = vpop.f32.mrf.mxu0
    %v1430 = vadd.f32 0.0, %v1429
    %1431 = vmatprep.mubr.f32.mxu0 0.0
    %1432 = vmatmul.mubr.f32.gmra.mxu0 %v457
    %v1433 = vpop.f32.mrf.mxu0
    %v1434 = vadd.f32 0.0, %v1433
    %v1435 = vpop.f32.mrf.mxu0
    %v1436 = vadd.f32 0.0, %v1435
    %1437 = vmatprep.mubr.f32.mxu0 0.0
    %1438 = vmatmul.mubr.f32.gmra.mxu0 %v460
    %v1439 = vpop.f32.mrf.mxu0
    %v1440 = vadd.f32 0.0, %v1439
    %v1441 = vpop.f32.mrf.mxu0
    %v1442 = vadd.f32 0.0, %v1441
    %1443 = vmatprep.mubr.f32.mxu0 0.0
    %1444 = vmatmul.mubr.f32.gmra.mxu0 %v463
    %v1445 = vpop.f32.mrf.mxu0
    %v1446 = vadd.f32 0.0, %v1445
    %v1447 = vpop.f32.mrf.mxu0
    %v1448 = vadd.f32 0.0, %v1447
    %1449 = vmatprep.mubr.f32.mxu0 0.0
    %1450 = vmatmul.mubr.f32.gmra.mxu0 %v466
    %v1451 = vpop.f32.mrf.mxu0
    %v1452 = vadd.f32 0.0, %v1451
    %v1453 = vpop.f32.mrf.mxu0
    %v1454 = vadd.f32 0.0, %v1453
    %1455 = vmatprep.mubr.f32.mxu0 0.0
    %1456 = vmatmul.mubr.f32.gmra.mxu0 %v469
    %v1457 = vpop.f32.mrf.mxu0
    %v1458 = vadd.f32 0.0, %v1457
    %v1459 = vpop.f32.mrf.mxu0
    %v1460 = vadd.f32 0.0, %v1459
    %1461 = vmatprep.mubr.f32.mxu0 0.0
    %1462 = vmatmul.mubr.f32.gmra.mxu0 %v472
    %v1463 = vpop.f32.mrf.mxu0
    %v1464 = vadd.f32 0.0, %v1463
    %v1465 = vpop.f32.mrf.mxu0
    %v1466 = vadd.f32 0.0, %v1465
    %1467 = vmatprep.mubr.f32.mxu0 0.0
    %1468 = vmatmul.mubr.f32.gmra.mxu0 %v475
    %v1469 = vpop.f32.mrf.mxu0
    %v1470 = vadd.f32 0.0, %v1469
    %v1471 = vpop.f32.mrf.mxu0
    %v1472 = vadd.f32 0.0, %v1471
    %1473 = vmatprep.mubr.f32.mxu0 0.0
    %1474 = vmatmul.mubr.f32.gmra.mxu0 %v478
    %v1475 = vpop.f32.mrf.mxu0
    %v1476 = vadd.f32 0.0, %v1475
    %v1477 = vpop.f32.mrf.mxu0
    %v1478 = vadd.f32 0.0, %v1477
    %1479 = vmatprep.mubr.f32.mxu0 0.0
    %1480 = vmatmul.mubr.f32.gmra.mxu0 %v481
    %v1481 = vpop.f32.mrf.mxu0
    %v1482 = vadd.f32 0.0, %v1481
    %v1483 = vpop.f32.mrf.mxu0
    %v1484 = vadd.f32 0.0, %v1483
    %1485 = vmatprep.mubr.f32.mxu0 0.0
    %1486 = vmatmul.mubr.f32.gmra.mxu0 %v484
    %v1487 = vpop.f32.mrf.mxu0
    %v1488 = vadd.f32 0.0, %v1487
    %v1489 = vpop.f32.mrf.mxu0
    %v1490 = vadd.f32 0.0, %v1489
    %1491 = vmatprep.mubr.f32.mxu0 0.0
    %1492 = vmatmul.mubr.f32.gmra.mxu0 %v487
    %v1493 = vpop.f32.mrf.mxu0
    %v1494 = vadd.f32 0.0, %v1493
    %v1495 = vpop.f32.mrf.mxu0
    %v1496 = vadd.f32 0.0, %v1495
    %1497 = vmatprep.mubr.f32.mxu0 0.0
    %1498 = vmatmul.mubr.f32.gmra.mxu0 %v490
    %v1499 = vpop.f32.mrf.mxu0
    %v1500 = vadd.f32 0.0, %v1499
    %v1501 = vpop.f32.mrf.mxu0
    %v1502 = vadd.f32 0.0, %v1501
    %1503 = vmatprep.mubr.f32.mxu0 0.0
    %1504 = vmatmul.mubr.f32.gmra.mxu0 %v493
    %v1505 = vpop.f32.mrf.mxu0
    %v1506 = vadd.f32 0.0, %v1505
    %v1507 = vpop.f32.mrf.mxu0
    %v1508 = vadd.f32 0.0, %v1507
    %1509 = vmatprep.mubr.f32.mxu0 0.0
    %1510 = vmatmul.mubr.f32.gmra.mxu0 %v496
    %v1511 = vpop.f32.mrf.mxu0
    %v1512 = vadd.f32 0.0, %v1511
    %v1513 = vpop.f32.mrf.mxu0
    %v1514 = vadd.f32 0.0, %v1513
    %1515 = vmatprep.mubr.f32.mxu0 0.0
    %1516 = vmatmul.mubr.f32.gmra.mxu0 %v499
    %v1517 = vpop.f32.mrf.mxu0
    %v1518 = vadd.f32 0.0, %v1517
    %v1519 = vpop.f32.mrf.mxu0
    %v1520 = vadd.f32 0.0, %v1519
    %1521 = vmatprep.mubr.f32.mxu0 0.0
    %1522 = vmatmul.mubr.f32.gmra.mxu0 %v502
    %v1523 = vpop.f32.mrf.mxu0
    %v1524 = vadd.f32 0.0, %v1523
    %v1525 = vpop.f32.mrf.mxu0
    %v1526 = vadd.f32 0.0, %v1525
    %1527 = vmatprep.mubr.f32.mxu0 0.0
    %1528 = vmatmul.mubr.f32.gmra.mxu0 %v505
    %v1529 = vpop.f32.mrf.mxu0
    %v1530 = vadd.f32 0.0, %v1529
    %v1531 = vpop.f32.mrf.mxu0
    %v1532 = vadd.f32 0.0, %v1531
    %1533 = vmatprep.mubr.f32.mxu0 0.0
    %1534 = vmatmul.mubr.f32.gmra.mxu0 %v508
    %v1535 = vpop.f32.mrf.mxu0
    %v1536 = vadd.f32 0.0, %v1535
    %v1537 = vpop.f32.mrf.mxu0
    %v1538 = vadd.f32 0.0, %v1537
    %1539 = vmatprep.mubr.f32.mxu0 0.0
    %1540 = vmatmul.mubr.f32.gmra.mxu0 %v511
    %v1541 = vpop.f32.mrf.mxu0
    %v1542 = vadd.f32 0.0, %v1541
    %v1543 = vpop.f32.mrf.mxu0
    %v1544 = vadd.f32 0.0, %v1543
    %1545 = vmatprep.mubr.f32.mxu0 0.0
    %1546 = vmatmul.mubr.f32.gmra.mxu0 %v514
    %v1547 = vpop.f32.mrf.mxu0
    %v1548 = vadd.f32 0.0, %v1547
    %v1549 = vpop.f32.mrf.mxu0
    %v1550 = vadd.f32 0.0, %v1549
    %1551 = vmatprep.mubr.f32.mxu0 0.0
    %1552 = vmatmul.mubr.f32.gmra.mxu0 %v517
    %v1553 = vpop.f32.mrf.mxu0
    %v1554 = vadd.f32 0.0, %v1553
    %v1555 = vpop.f32.mrf.mxu0
    %v1556 = vadd.f32 0.0, %v1555
    %1557 = vmatprep.mubr.f32.mxu0 0.0
    %1558 = vmatmul.mubr.f32.gmra.mxu0 %v520
    %v1559 = vpop.f32.mrf.mxu0
    %v1560 = vadd.f32 0.0, %v1559
    %v1561 = vpop.f32.mrf.mxu0
    %v1562 = vadd.f32 0.0, %v1561
    %1563 = vmatprep.mubr.f32.mxu0 0.0
    %1564 = vmatmul.mubr.f32.gmra.mxu0 %v523
    %v1565 = vpop.f32.mrf.mxu0
    %v1566 = vadd.f32 0.0, %v1565
    %v1567 = vpop.f32.mrf.mxu0
    %v1568 = vadd.f32 0.0, %v1567
    %1569 = vmatprep.mubr.f32.mxu0 0.0
    %1570 = vmatmul.mubr.f32.gmra.mxu0 %v526
    %v1571 = vpop.f32.mrf.mxu0
    %v1572 = vadd.f32 0.0, %v1571
    %v1573 = vpop.f32.mrf.mxu0
    %v1574 = vadd.f32 0.0, %v1573
    %1575 = vmatprep.mubr.f32.mxu0 0.0
    %1576 = vmatmul.mubr.f32.gmra.mxu0 %v529
    %v1577 = vpop.f32.mrf.mxu0
    %v1578 = vadd.f32 0.0, %v1577
    %v1579 = vpop.f32.mrf.mxu0
    %v1580 = vadd.f32 0.0, %v1579
    %1581 = vmatprep.mubr.f32.mxu0 0.0
    %1582 = vmatmul.mubr.f32.gmra.mxu0 %v532
    %v1583 = vpop.f32.mrf.mxu0
    %v1584 = vadd.f32 0.0, %v1583
    %v1585 = vpop.f32.mrf.mxu0
    %v1586 = vadd.f32 0.0, %v1585
    %1587 = vmatprep.mubr.f32.mxu0 0.0
    %1588 = vmatmul.mubr.f32.gmra.mxu0 %v535
    %v1589 = vpop.f32.mrf.mxu0
    %v1590 = vadd.f32 0.0, %v1589
    %v1591 = vpop.f32.mrf.mxu0
    %v1592 = vadd.f32 0.0, %v1591
    %1593 = vmatprep.mubr.f32.mxu0 0.0
    %1594 = vmatmul.mubr.f32.gmra.mxu0 %v538
    %v1595 = vpop.f32.mrf.mxu0
    %v1596 = vadd.f32 0.0, %v1595
    %v1597 = vpop.f32.mrf.mxu0
    %v1598 = vadd.f32 0.0, %v1597
    %1599 = vmatprep.mubr.f32.mxu0 0.0
    %1600 = vmatmul.mubr.f32.gmra.mxu0 %v541
    %v1601 = vpop.f32.mrf.mxu0
    %v1602 = vadd.f32 0.0, %v1601
    %v1603 = vpop.f32.mrf.mxu0
    %v1604 = vadd.f32 0.0, %v1603
    %1605 = vmatprep.mubr.f32.mxu0 0.0
    %1606 = vmatmul.mubr.f32.gmra.mxu0 %v544
    %v1607 = vpop.f32.mrf.mxu0
    %v1608 = vadd.f32 0.0, %v1607
    %v1609 = vpop.f32.mrf.mxu0
    %v1610 = vadd.f32 0.0, %v1609
    %1611 = vmatprep.mubr.f32.mxu0 0.0
    %1612 = vmatmul.mubr.f32.gmra.mxu0 %v547
    %v1613 = vpop.f32.mrf.mxu0
    %v1614 = vadd.f32 0.0, %v1613
    %v1615 = vpop.f32.mrf.mxu0
    %v1616 = vadd.f32 0.0, %v1615
    %1617 = vmatprep.mubr.f32.mxu0 0.0
    %1618 = vmatmul.mubr.f32.gmra.mxu0 %v550
    %v1619 = vpop.f32.mrf.mxu0
    %v1620 = vadd.f32 0.0, %v1619
    %v1621 = vpop.f32.mrf.mxu0
    %v1622 = vadd.f32 0.0, %v1621
    %1623 = vmatprep.mubr.f32.mxu0 0.0
    %1624 = vmatmul.mubr.f32.gmra.mxu0 %v553
    %v1625 = vpop.f32.mrf.mxu0
    %v1626 = vadd.f32 0.0, %v1625
    %v1627 = vpop.f32.mrf.mxu0
    %v1628 = vadd.f32 0.0, %v1627
    %1629 = vmatprep.mubr.f32.mxu0 0.0
    %1630 = vmatmul.mubr.f32.gmra.mxu0 %v556
    %v1631 = vpop.f32.mrf.mxu0
    %v1632 = vadd.f32 0.0, %v1631
    %v1633 = vpop.f32.mrf.mxu0
    %v1634 = vadd.f32 0.0, %v1633
    %1635 = vmatprep.mubr.f32.mxu0 0.0
    %1636 = vmatmul.mubr.f32.gmra.mxu0 %v559
    %v1637 = vpop.f32.mrf.mxu0
    %v1638 = vadd.f32 0.0, %v1637
    %v1639 = vpop.f32.mrf.mxu0
    %v1640 = vadd.f32 0.0, %v1639
    %1641 = vmatprep.mubr.f32.mxu0 0.0
    %1642 = vmatmul.mubr.f32.gmra.mxu0 %v562
    %v1643 = vpop.f32.mrf.mxu0
    %v1644 = vadd.f32 0.0, %v1643
    %v1645 = vpop.f32.mrf.mxu0
    %v1646 = vadd.f32 0.0, %v1645
    %1647 = vmatprep.mubr.f32.mxu0 0.0
    %1648 = vmatmul.mubr.f32.gmra.mxu0 %v565
    %v1649 = vpop.f32.mrf.mxu0
    %v1650 = vadd.f32 0.0, %v1649
    %v1651 = vpop.f32.mrf.mxu0
    %v1652 = vadd.f32 0.0, %v1651
    %1653 = vmatprep.mubr.f32.mxu0 0.0
    %1654 = vmatmul.mubr.f32.gmra.mxu0 %v568
    %v1655 = vpop.f32.mrf.mxu0
    %v1656 = vadd.f32 0.0, %v1655
    %v1657 = vpop.f32.mrf.mxu0
    %v1658 = vadd.f32 0.0, %v1657
    %1659 = vmatprep.mubr.f32.mxu0 0.0
    %1660 = vmatmul.mubr.f32.gmra.mxu0 %v571
    %v1661 = vpop.f32.mrf.mxu0
    %v1662 = vadd.f32 0.0, %v1661
    %v1663 = vpop.f32.mrf.mxu0
    %v1664 = vadd.f32 0.0, %v1663
    %1665 = vmatprep.mubr.f32.mxu0 0.0
    %1666 = vmatmul.mubr.f32.gmra.mxu0 %v574
    %v1667 = vpop.f32.mrf.mxu0
    %v1668 = vadd.f32 0.0, %v1667
    %v1669 = vpop.f32.mrf.mxu0
    %v1670 = vadd.f32 0.0, %v1669
    %1671 = vmatprep.mubr.f32.mxu0 0.0
    %1672 = vmatmul.mubr.f32.gmra.mxu0 %v577
    %v1673 = vpop.f32.mrf.mxu0
    %v1674 = vadd.f32 0.0, %v1673
    %v1675 = vpop.f32.mrf.mxu0
    %v1676 = vadd.f32 0.0, %v1675
    %1677 = vmatprep.mubr.f32.mxu0 0.0
    %1678 = vmatmul.mubr.f32.gmra.mxu0 %v580
    %v1679 = vpop.f32.mrf.mxu0
    %v1680 = vadd.f32 0.0, %v1679
    %v1681 = vpop.f32.mrf.mxu0
    %v1682 = vadd.f32 0.0, %v1681
    %1683 = vmatprep.mubr.f32.mxu0 0.0
    %1684 = vmatmul.mubr.f32.gmra.mxu0 %v583
    %v1685 = vpop.f32.mrf.mxu0
    %v1686 = vadd.f32 0.0, %v1685
    %v1687 = vpop.f32.mrf.mxu0
    %v1688 = vadd.f32 0.0, %v1687
    %1689 = vmatprep.mubr.f32.mxu0 0.0
    %1690 = vmatmul.mubr.f32.gmra.mxu0 %v586
    %v1691 = vpop.f32.mrf.mxu0
    %v1692 = vadd.f32 0.0, %v1691
    %v1693 = vpop.f32.mrf.mxu0
    %v1694 = vadd.f32 0.0, %v1693
    %1695 = vmatprep.mubr.f32.mxu0 0.0
    %1696 = vmatmul.mubr.f32.gmra.mxu0 %v589
    %v1697 = vpop.f32.mrf.mxu0
    %v1698 = vadd.f32 0.0, %v1697
    %v1699 = vpop.f32.mrf.mxu0
    %v1700 = vadd.f32 0.0, %v1699
    %1701 = vmatprep.mubr.f32.mxu0 0.0
    %1702 = vmatmul.mubr.f32.gmra.mxu0 %v592
    %v1703 = vpop.f32.mrf.mxu0
    %v1704 = vadd.f32 0.0, %v1703
    %v1705 = vpop.f32.mrf.mxu0
    %v1706 = vadd.f32 0.0, %v1705
    %1707 = vmatprep.mubr.f32.mxu0 0.0
    %1708 = vmatmul.mubr.f32.gmra.mxu0 %v595
    %v1709 = vpop.f32.mrf.mxu0
    %v1710 = vadd.f32 0.0, %v1709
    %v1711 = vpop.f32.mrf.mxu0
    %v1712 = vadd.f32 0.0, %v1711
    %1713 = vmatprep.mubr.f32.mxu0 0.0
    %1714 = vmatmul.mubr.f32.gmra.mxu0 %v598
    %v1715 = vpop.f32.mrf.mxu0
    %v1716 = vadd.f32 0.0, %v1715
    %v1717 = vpop.f32.mrf.mxu0
    %v1718 = vadd.f32 0.0, %v1717
    %1719 = vmatprep.mubr.f32.mxu0 0.0
    %1720 = vmatmul.mubr.f32.gmra.mxu0 %v601
    %v1721 = vpop.f32.mrf.mxu0
    %v1722 = vadd.f32 0.0, %v1721
    %v1723 = vpop.f32.mrf.mxu0
    %v1724 = vadd.f32 0.0, %v1723
    %1725 = vmatprep.mubr.f32.mxu0 0.0
    %1726 = vmatmul.mubr.f32.gmra.mxu0 %v604
    %v1727 = vpop.f32.mrf.mxu0
    %v1728 = vadd.f32 0.0, %v1727
    %v1729 = vpop.f32.mrf.mxu0
    %v1730 = vadd.f32 0.0, %v1729
    %1731 = vmatprep.mubr.f32.mxu0 0.0
    %1732 = vmatmul.mubr.f32.gmra.mxu0 %v607
    %v1733 = vpop.f32.mrf.mxu0
    %v1734 = vadd.f32 0.0, %v1733
    %v1735 = vpop.f32.mrf.mxu0
    %v1736 = vadd.f32 0.0, %v1735
    %1737 = vmatprep.mubr.f32.mxu0 0.0
    %1738 = vmatmul.mubr.f32.gmra.mxu0 %v610
    %v1739 = vpop.f32.mrf.mxu0
    %v1740 = vadd.f32 0.0, %v1739
    %v1741 = vpop.f32.mrf.mxu0
    %v1742 = vadd.f32 0.0, %v1741
    %1743 = vmatprep.mubr.f32.mxu0 0.0
    %1744 = vmatmul.mubr.f32.gmra.mxu0 %v613
    %v1745 = vpop.f32.mrf.mxu0
    %v1746 = vadd.f32 0.0, %v1745
    %v1747 = vpop.f32.mrf.mxu0
    %v1748 = vadd.f32 0.0, %v1747
    %1749 = vmatprep.mubr.f32.mxu0 0.0
    %1750 = vmatmul.mubr.f32.gmra.mxu0 %v616
    %v1751 = vpop.f32.mrf.mxu0
    %v1752 = vadd.f32 0.0, %v1751
    %v1753 = vpop.f32.mrf.mxu0
    %v1754 = vadd.f32 0.0, %v1753
    %1755 = vmatprep.mubr.f32.mxu0 0.0
    %1756 = vmatmul.mubr.f32.gmra.mxu0 %v619
    %v1757 = vpop.f32.mrf.mxu0
    %v1758 = vadd.f32 0.0, %v1757
    %v1759 = vpop.f32.mrf.mxu0
    %v1760 = vadd.f32 0.0, %v1759
    %1761 = vmatprep.mubr.f32.mxu0 0.0
    %1762 = vmatmul.mubr.f32.gmra.mxu0 %v622
    %v1763 = vpop.f32.mrf.mxu0
    %v1764 = vadd.f32 0.0, %v1763
    %v1765 = vpop.f32.mrf.mxu0
    %v1766 = vadd.f32 0.0, %v1765
    %1767 = vmatprep.mubr.f32.mxu0 0.0
    %1768 = vmatmul.mubr.f32.gmra.mxu0 %v625
    %v1769 = vpop.f32.mrf.mxu0
    %v1770 = vadd.f32 0.0, %v1769
    %v1771 = vpop.f32.mrf.mxu0
    %v1772 = vadd.f32 0.0, %v1771
    %1773 = vmatprep.mubr.f32.mxu0 0.0
    %1774 = vmatmul.mubr.f32.gmra.mxu0 %v628
    %v1775 = vpop.f32.mrf.mxu0
    %v1776 = vadd.f32 0.0, %v1775
    %v1777 = vpop.f32.mrf.mxu0
    %v1778 = vadd.f32 0.0, %v1777
    %1779 = vmatprep.mubr.f32.mxu0 0.0
    %1780 = vmatmul.mubr.f32.gmra.mxu0 %v631
    %v1781 = vpop.f32.mrf.mxu0
    %v1782 = vadd.f32 0.0, %v1781
    %v1783 = vpop.f32.mrf.mxu0
    %v1784 = vadd.f32 0.0, %v1783
    %1785 = vmatprep.mubr.f32.mxu0 0.0
    %1786 = vmatmul.mubr.f32.gmra.mxu0 %v634
    %v1787 = vpop.f32.mrf.mxu0
    %v1788 = vadd.f32 0.0, %v1787
    %v1789 = vpop.f32.mrf.mxu0
    %v1790 = vadd.f32 0.0, %v1789
    %1791 = vmatprep.mubr.f32.mxu0 0.0
    %1792 = vmatmul.mubr.f32.gmra.mxu0 %v637
    %v1793 = vpop.f32.mrf.mxu0
    %v1794 = vadd.f32 0.0, %v1793
    %v1795 = vpop.f32.mrf.mxu0
    %v1796 = vadd.f32 0.0, %v1795
    %1797 = vmatprep.mubr.f32.mxu0 0.0
    %1798 = vmatmul.mubr.f32.gmra.mxu0 %v640
    %v1799 = vpop.f32.mrf.mxu0
    %v1800 = vadd.f32 0.0, %v1799
    %v1801 = vpop.f32.mrf.mxu0
    %v1802 = vadd.f32 0.0, %v1801
    %1803 = vmatprep.mubr.f32.mxu0 0.0
    %1804 = vmatmul.mubr.f32.gmra.mxu0 %v643
    %v1805 = vpop.f32.mrf.mxu0
    %v1806 = vadd.f32 0.0, %v1805
    %v1807 = vpop.f32.mrf.mxu0
    %v1808 = vadd.f32 0.0, %v1807
    %1809 = vmatprep.mubr.f32.mxu0 0.0
    %1810 = vmatmul.mubr.f32.gmra.mxu0 %v646
    %v1811 = vpop.f32.mrf.mxu0
    %v1812 = vadd.f32 0.0, %v1811
    %v1813 = vpop.f32.mrf.mxu0
    %v1814 = vadd.f32 0.0, %v1813
    %1815 = vmatprep.mubr.f32.mxu0 0.0
    %1816 = vmatmul.mubr.f32.gmra.mxu0 %v649
    %v1817 = vpop.f32.mrf.mxu0
    %v1818 = vadd.f32 0.0, %v1817
    %v1819 = vpop.f32.mrf.mxu0
    %v1820 = vadd.f32 0.0, %v1819
    %1821 = vmatprep.mubr.f32.mxu0 0.0
    %1822 = vmatmul.mubr.f32.gmra.mxu0 %v652
    %v1823 = vpop.f32.mrf.mxu0
    %v1824 = vadd.f32 0.0, %v1823
    %v1825 = vpop.f32.mrf.mxu0
    %v1826 = vadd.f32 0.0, %v1825
    %1827 = vmatprep.mubr.f32.mxu0 0.0
    %1828 = vmatmul.mubr.f32.gmra.mxu0 %v655
    %v1829 = vpop.f32.mrf.mxu0
    %v1830 = vadd.f32 0.0, %v1829
    %v1831 = vpop.f32.mrf.mxu0
    %v1832 = vadd.f32 0.0, %v1831
    %1833 = vmatprep.mubr.f32.mxu0 0.0
    %1834 = vmatmul.mubr.f32.gmra.mxu0 %v658
    %v1835 = vpop.f32.mrf.mxu0
    %v1836 = vadd.f32 0.0, %v1835
    %v1837 = vpop.f32.mrf.mxu0
    %v1838 = vadd.f32 0.0, %v1837
    %1839 = vmatprep.mubr.f32.mxu0 0.0
    %1840 = vmatmul.mubr.f32.gmra.mxu0 %v661
    %v1841 = vpop.f32.mrf.mxu0
    %v1842 = vadd.f32 0.0, %v1841
    %v1843 = vpop.f32.mrf.mxu0
    %v1844 = vadd.f32 0.0, %v1843
    %1845 = vmatprep.mubr.f32.mxu0 0.0
    %1846 = vmatmul.mubr.f32.gmra.mxu0 %v664
    %v1847 = vpop.f32.mrf.mxu0
    %v1848 = vadd.f32 0.0, %v1847
    %v1849 = vpop.f32.mrf.mxu0
    %v1850 = vadd.f32 0.0, %v1849
    %1851 = vmatprep.mubr.f32.mxu0 0.0
    %1852 = vmatmul.mubr.f32.gmra.mxu0 %v667
    %v1853 = vpop.f32.mrf.mxu0
    %v1854 = vadd.f32 0.0, %v1853
    %v1855 = vpop.f32.mrf.mxu0
    %v1856 = vadd.f32 0.0, %v1855
    %1857 = vmatprep.mubr.f32.mxu0 0.0
    %1858 = vmatmul.mubr.f32.gmra.mxu0 %v670
    %v1859 = vpop.f32.mrf.mxu0
    %v1860 = vadd.f32 0.0, %v1859
    %v1861 = vpop.f32.mrf.mxu0
    %v1862 = vadd.f32 0.0, %v1861
    %1863 = vmatprep.mubr.f32.mxu0 0.0
    %1864 = vmatmul.mubr.f32.gmra.mxu0 %v673
    %v1865 = vpop.f32.mrf.mxu0
    %v1866 = vadd.f32 0.0, %v1865
    %v1867 = vpop.f32.mrf.mxu0
    %v1868 = vadd.f32 0.0, %v1867
    %1869 = vmatprep.mubr.f32.mxu0 0.0
    %1870 = vmatmul.mubr.f32.gmra.mxu0 %v676
    %v1871 = vpop.f32.mrf.mxu0
    %v1872 = vadd.f32 0.0, %v1871
    %v1873 = vpop.f32.mrf.mxu0
    %v1874 = vadd.f32 0.0, %v1873
    %1875 = vmatprep.mubr.f32.mxu0 0.0
    %1876 = vmatmul.mubr.f32.gmra.mxu0 %v679
    %v1877 = vpop.f32.mrf.mxu0
    %v1878 = vadd.f32 0.0, %v1877
    %v1879 = vpop.f32.mrf.mxu0
    %v1880 = vadd.f32 0.0, %v1879
    %1881 = vmatprep.mubr.f32.mxu0 0.0
    %1882 = vmatmul.mubr.f32.gmra.mxu0 %v682
    %v1883 = vpop.f32.mrf.mxu0
    %v1884 = vadd.f32 0.0, %v1883
    %v1885 = vpop.f32.mrf.mxu0
    %v1886 = vadd.f32 0.0, %v1885
    %1887 = vmatprep.mubr.f32.mxu0 0.0
    %1888 = vmatmul.mubr.f32.gmra.mxu0 %v685
    %v1889 = vpop.f32.mrf.mxu0
    %v1890 = vadd.f32 0.0, %v1889
    %v1891 = vpop.f32.mrf.mxu0
    %v1892 = vadd.f32 0.0, %v1891
    %1893 = vmatprep.mubr.f32.mxu0 0.0
    %1894 = vmatmul.mubr.f32.gmra.mxu0 %v688
    %v1895 = vpop.f32.mrf.mxu0
    %v1896 = vadd.f32 0.0, %v1895
    %v1897 = vpop.f32.mrf.mxu0
    %v1898 = vadd.f32 0.0, %v1897
    %1899 = vmatprep.mubr.f32.mxu0 0.0
    %1900 = vmatmul.mubr.f32.gmra.mxu0 %v691
    %v1901 = vpop.f32.mrf.mxu0
    %v1902 = vadd.f32 0.0, %v1901
    %v1903 = vpop.f32.mrf.mxu0
    %v1904 = vadd.f32 0.0, %v1903
    %1905 = vmatprep.mubr.f32.mxu0 0.0
    %1906 = vmatmul.mubr.f32.gmra.mxu0 %v694
    %v1907 = vpop.f32.mrf.mxu0
    %v1908 = vadd.f32 0.0, %v1907
    %v1909 = vpop.f32.mrf.mxu0
    %v1910 = vadd.f32 0.0, %v1909
    %1911 = vmatprep.mubr.f32.mxu0 0.0
    %1912 = vmatmul.mubr.f32.gmra.mxu0 %v697
    %v1913 = vpop.f32.mrf.mxu0
    %v1914 = vadd.f32 0.0, %v1913
    %v1915 = vpop.f32.mrf.mxu0
    %v1916 = vadd.f32 0.0, %v1915
    %1917 = vmatprep.mubr.f32.mxu0 0.0
    %1918 = vmatmul.mubr.f32.gmra.mxu0 %v700
    %v1919 = vpop.f32.mrf.mxu0
    %v1920 = vadd.f32 0.0, %v1919
    %v1921 = vpop.f32.mrf.mxu0
    %v1922 = vadd.f32 0.0, %v1921
    %1923 = vmatprep.mubr.f32.mxu0 0.0
    %1924 = vmatmul.mubr.f32.gmra.mxu0 %v703
    %v1925 = vpop.f32.mrf.mxu0
    %v1926 = vadd.f32 0.0, %v1925
    %v1927 = vpop.f32.mrf.mxu0
    %v1928 = vadd.f32 0.0, %v1927
    %1929 = vmatprep.mubr.f32.mxu0 0.0
    %1930 = vmatmul.mubr.f32.gmra.mxu0 %v706
    %v1931 = vpop.f32.mrf.mxu0
    %v1932 = vadd.f32 0.0, %v1931
    %v1933 = vpop.f32.mrf.mxu0
    %v1934 = vadd.f32 0.0, %v1933
    %1935 = vmatprep.mubr.f32.mxu0 0.0
    %1936 = vmatmul.mubr.f32.gmra.mxu0 %v709
    %v1937 = vpop.f32.mrf.mxu0
    %v1938 = vadd.f32 0.0, %v1937
    %v1939 = vpop.f32.mrf.mxu0
    %v1940 = vadd.f32 0.0, %v1939
    %1941 = vmatprep.mubr.f32.mxu0 0.0
    %1942 = vmatmul.mubr.f32.gmra.mxu0 %v712
    %v1943 = vpop.f32.mrf.mxu0
    %v1944 = vadd.f32 0.0, %v1943
    %v1945 = vpop.f32.mrf.mxu0
    %v1946 = vadd.f32 0.0, %v1945
    %1947 = vmatprep.mubr.f32.mxu0 0.0
    %1948 = vmatmul.mubr.f32.gmra.mxu0 %v715
    %v1949 = vpop.f32.mrf.mxu0
    %v1950 = vadd.f32 0.0, %v1949
    %v1951 = vpop.f32.mrf.mxu0
    %v1952 = vadd.f32 0.0, %v1951
    %1953 = vmatprep.mubr.f32.mxu0 0.0
    %1954 = vmatmul.mubr.f32.gmra.mxu0 %v718
    %v1955 = vpop.f32.mrf.mxu0
    %v1956 = vadd.f32 0.0, %v1955
    %v1957 = vpop.f32.mrf.mxu0
    %v1958 = vadd.f32 0.0, %v1957
    %1959 = vmatprep.mubr.f32.mxu0 0.0
    %1960 = vmatmul.mubr.f32.gmra.mxu0 %v721
    %v1961 = vpop.f32.mrf.mxu0
    %v1962 = vadd.f32 0.0, %v1961
    %v1963 = vpop.f32.mrf.mxu0
    %v1964 = vadd.f32 0.0, %v1963
    %1965 = vmatprep.mubr.f32.mxu0 0.0
    %1966 = vmatmul.mubr.f32.gmra.mxu0 %v724
    %v1967 = vpop.f32.mrf.mxu0
    %v1968 = vadd.f32 0.0, %v1967
    %v1969 = vpop.f32.mrf.mxu0
    %v1970 = vadd.f32 0.0, %v1969
    %1971 = vmatprep.mubr.f32.mxu0 0.0
    %1972 = vmatmul.mubr.f32.gmra.mxu0 %v727
    %v1973 = vpop.f32.mrf.mxu0
    %v1974 = vadd.f32 0.0, %v1973
    %v1975 = vpop.f32.mrf.mxu0
    %v1976 = vadd.f32 0.0, %v1975
    %1977 = vmatprep.mubr.f32.mxu0 0.0
    %1978 = vmatmul.mubr.f32.gmra.mxu0 %v730
    %v1979 = vpop.f32.mrf.mxu0
    %v1980 = vadd.f32 0.0, %v1979
    %v1981 = vpop.f32.mrf.mxu0
    %v1982 = vadd.f32 0.0, %v1981
    %1983 = vmatprep.mubr.f32.mxu0 0.0
    %1984 = vmatmul.mubr.f32.gmra.mxu0 %v733
    %v1985 = vpop.f32.mrf.mxu0
    %v1986 = vadd.f32 0.0, %v1985
    %v1987 = vpop.f32.mrf.mxu0
    %v1988 = vadd.f32 0.0, %v1987
    %1989 = vmatprep.mubr.f32.mxu0 0.0
    %1990 = vmatmul.mubr.f32.gmra.mxu0 %v736
    %v1991 = vpop.f32.mrf.mxu0
    %v1992 = vadd.f32 0.0, %v1991
    %v1993 = vpop.f32.mrf.mxu0
    %v1994 = vadd.f32 0.0, %v1993
    %1995 = vmatprep.mubr.f32.mxu0 0.0
    %1996 = vmatmul.mubr.f32.gmra.mxu0 %v739
    %v1997 = vpop.f32.mrf.mxu0
    %v1998 = vadd.f32 0.0, %v1997
    %v1999 = vpop.f32.mrf.mxu0
    %v2000 = vadd.f32 0.0, %v1999
    %2001 = vmatprep.mubr.f32.mxu0 0.0
    %2002 = vmatmul.mubr.f32.gmra.mxu0 %v742
    %v2003 = vpop.f32.mrf.mxu0
    %v2004 = vadd.f32 0.0, %v2003
    %v2005 = vpop.f32.mrf.mxu0
    %v2006 = vadd.f32 0.0, %v2005
    %2007 = vmatprep.mubr.f32.mxu0 0.0
    %2008 = vmatmul.mubr.f32.gmra.mxu0 %v745
    %v2009 = vpop.f32.mrf.mxu0
    %v2010 = vadd.f32 0.0, %v2009
    %v2011 = vpop.f32.mrf.mxu0
    %v2012 = vadd.f32 0.0, %v2011
    %2013 = vmatprep.mubr.f32.mxu0 0.0
    %2014 = vmatmul.mubr.f32.gmra.mxu0 %v748
    %v2015 = vpop.f32.mrf.mxu0
    %v2016 = vadd.f32 0.0, %v2015
    %v2017 = vpop.f32.mrf.mxu0
    %v2018 = vadd.f32 0.0, %v2017
    %2019 = vmatprep.mubr.f32.mxu0 0.0
    %2020 = vmatmul.mubr.f32.gmra.mxu0 %v751
    %v2021 = vpop.f32.mrf.mxu0
    %v2022 = vadd.f32 0.0, %v2021
    %v2023 = vpop.f32.mrf.mxu0
    %v2024 = vadd.f32 0.0, %v2023
    %2025 = vmatprep.mubr.f32.mxu0 0.0
    %2026 = vmatmul.mubr.f32.gmra.mxu0 %v754
    %v2027 = vpop.f32.mrf.mxu0
    %v2028 = vadd.f32 0.0, %v2027
    %v2029 = vpop.f32.mrf.mxu0
    %v2030 = vadd.f32 0.0, %v2029
    %2031 = vmatprep.mubr.f32.mxu0 0.0
    %2032 = vmatmul.mubr.f32.gmra.mxu0 %v757
    %v2033 = vpop.f32.mrf.mxu0
    %v2034 = vadd.f32 0.0, %v2033
    %v2035 = vpop.f32.mrf.mxu0
    %v2036 = vadd.f32 0.0, %v2035
    %2037 = vmatprep.mubr.f32.mxu0 0.0
    %2038 = vmatmul.mubr.f32.gmra.mxu0 %v760
    %v2039 = vpop.f32.mrf.mxu0
    %v2040 = vadd.f32 0.0, %v2039
    %v2041 = vpop.f32.mrf.mxu0
    %v2042 = vadd.f32 0.0, %v2041
    %2043 = vmatprep.mubr.f32.mxu0 0.0
    %2044 = vmatmul.mubr.f32.gmra.mxu0 %v763
    %v2045 = vpop.f32.mrf.mxu0
    %v2046 = vadd.f32 0.0, %v2045
    %v2047 = vpop.f32.mrf.mxu0
    %v2048 = vadd.f32 0.0, %v2047
    %2049 = vmatprep.mubr.f32.mxu0 0.0
    %2050 = vmatmul.mubr.f32.gmra.mxu0 %v766
    %v2051 = vpop.f32.mrf.mxu0
    %v2052 = vadd.f32 0.0, %v2051
    %v2053 = vpop.f32.mrf.mxu0
    %v2054 = vadd.f32 0.0, %v2053
    %2055 = vmatprep.mubr.f32.mxu0 0.0
    %2056 = vmatmul.mubr.f32.gmra.mxu0 %v769
    %v2057 = vpop.f32.mrf.mxu0
    %v2058 = vadd.f32 0.0, %v2057
    %v2059 = vpop.f32.mrf.mxu0
    %v2060 = vadd.f32 0.0, %v2059
    %2061 = vmatprep.mubr.f32.mxu0 0.0
    %2062 = vmatmul.mubr.f32.gmra.mxu0 %v772
    %v2063 = vpop.f32.mrf.mxu0
    %v2064 = vadd.f32 0.0, %v2063
    %v2065 = vpop.f32.mrf.mxu0
    %v2066 = vadd.f32 0.0, %v2065
    %2067 = vmatprep.mubr.f32.mxu0 0.0
    %2068 = vmatmul.mubr.f32.gmra.mxu0 %v775
    %v2069 = vpop.f32.mrf.mxu0
    %v2070 = vadd.f32 0.0, %v2069
    %v2071 = vpop.f32.mrf.mxu0
    %v2072 = vadd.f32 0.0, %v2071
    %2073 = vmatprep.mubr.f32.mxu0 0.0
    %2074 = vmatmul.mubr.f32.gmra.mxu0 %v778
    %v2075 = vpop.f32.mrf.mxu0
    %v2076 = vadd.f32 0.0, %v2075
    %v2077 = vpop.f32.mrf.mxu0
    %v2078 = vadd.f32 0.0, %v2077
    %2079 = vmatprep.mubr.f32.mxu0 0.0
    %2080 = vmatmul.mubr.f32.gmra.mxu0 %v781
    %v2081 = vpop.f32.mrf.mxu0
    %v2082 = vadd.f32 0.0, %v2081
    %v2083 = vpop.f32.mrf.mxu0
    %v2084 = vadd.f32 0.0, %v2083
    %2085 = vmatprep.mubr.f32.mxu0 0.0
    %2086 = vmatmul.mubr.f32.gmra.mxu0 %v784
    %v2087 = vpop.f32.mrf.mxu0
    %v2088 = vadd.f32 0.0, %v2087
    %v2089 = vpop.f32.mrf.mxu0
    %v2090 = vadd.f32 0.0, %v2089
    %2091 = vmatprep.mubr.f32.mxu0 0.0
    %2092 = vmatmul.mubr.f32.gmra.mxu0 %v787
    %v2093 = vpop.f32.mrf.mxu0
    %v2094 = vadd.f32 0.0, %v2093
    %v2095 = vpop.f32.mrf.mxu0
    %v2096 = vadd.f32 0.0, %v2095
    %2097 = vmatprep.mubr.f32.mxu0 0.0
    %2098 = vmatmul.mubr.f32.gmra.mxu0 %v790
    %v2099 = vpop.f32.mrf.mxu0
    %v2100 = vadd.f32 0.0, %v2099
    %v2101 = vpop.f32.mrf.mxu0
    %v2102 = vadd.f32 0.0, %v2101
    %2103 = vmatprep.mubr.f32.mxu0 0.0
    %2104 = vmatmul.mubr.f32.gmra.mxu0 %v793
    %v2105 = vpop.f32.mrf.mxu0
    %v2106 = vadd.f32 0.0, %v2105
    %v2107 = vpop.f32.mrf.mxu0
    %v2108 = vadd.f32 0.0, %v2107
    %2109 = vmatprep.mubr.f32.mxu0 0.0
    %2110 = vmatmul.mubr.f32.gmra.mxu0 %v796
    %v2111 = vpop.f32.mrf.mxu0
    %v2112 = vadd.f32 0.0, %v2111
    %v2113 = vpop.f32.mrf.mxu0
    %v2114 = vadd.f32 0.0, %v2113
    %2115 = vmatprep.mubr.f32.mxu0 0.0
    %2116 = vmatmul.mubr.f32.gmra.mxu0 %v799
    %v2117 = vpop.f32.mrf.mxu0
    %v2118 = vadd.f32 0.0, %v2117
    %v2119 = vpop.f32.mrf.mxu0
    %v2120 = vadd.f32 0.0, %v2119
    %2121 = vmatprep.mubr.f32.mxu0 0.0
    %2122 = vmatmul.mubr.f32.gmra.mxu0 %v802
    %v2123 = vpop.f32.mrf.mxu0
    %v2124 = vadd.f32 0.0, %v2123
    %v2125 = vpop.f32.mrf.mxu0
    %v2126 = vadd.f32 0.0, %v2125
    %2127 = vmatprep.mubr.f32.mxu0 0.0
    %2128 = vmatmul.mubr.f32.gmra.mxu0 %v805
    %v2129 = vpop.f32.mrf.mxu0
    %v2130 = vadd.f32 0.0, %v2129
    %v2131 = vpop.f32.mrf.mxu0
    %v2132 = vadd.f32 0.0, %v2131
    %2133 = vmatprep.mubr.f32.mxu0 0.0
    %2134 = vmatmul.mubr.f32.gmra.mxu0 %v808
    %v2135 = vpop.f32.mrf.mxu0
    %v2136 = vadd.f32 0.0, %v2135
    %v2137 = vpop.f32.mrf.mxu0
    %v2138 = vadd.f32 0.0, %v2137
    %2139 = vmatprep.mubr.f32.mxu0 0.0
    %2140 = vmatmul.mubr.f32.gmra.mxu0 %v811
    %v2141 = vpop.f32.mrf.mxu0
    %v2142 = vadd.f32 0.0, %v2141
    %v2143 = vpop.f32.mrf.mxu0
    %v2144 = vadd.f32 0.0, %v2143
    %2145 = vmatprep.mubr.f32.mxu0 0.0
    %2146 = vmatmul.mubr.f32.gmra.mxu0 %v814
    %v2147 = vpop.f32.mrf.mxu0
    %v2148 = vadd.f32 0.0, %v2147
    %v2149 = vpop.f32.mrf.mxu0
    %v2150 = vadd.f32 0.0, %v2149
    %2151 = vmatprep.mubr.f32.mxu0 0.0
    %2152 = vmatmul.mubr.f32.gmra.mxu0 %v817
    %v2153 = vpop.f32.mrf.mxu0
    %v2154 = vadd.f32 0.0, %v2153
    %v2155 = vpop.f32.mrf.mxu0
    %v2156 = vadd.f32 0.0, %v2155
    %2157 = vmatprep.mubr.f32.mxu0 0.0
    %2158 = vmatmul.mubr.f32.gmra.mxu0 %v820
    %v2159 = vpop.f32.mrf.mxu0
    %v2160 = vadd.f32 0.0, %v2159
    %v2161 = vpop.f32.mrf.mxu0
    %v2162 = vadd.f32 0.0, %v2161
    %2163 = vmatprep.mubr.f32.mxu0 0.0
    %2164 = vmatmul.mubr.f32.gmra.mxu0 %v823
    %v2165 = vpop.f32.mrf.mxu0
    %v2166 = vadd.f32 0.0, %v2165
    %v2167 = vpop.f32.mrf.mxu0
    %v2168 = vadd.f32 0.0, %v2167
    %2169 = vmatprep.mubr.f32.mxu0 0.0
    %2170 = vmatmul.mubr.f32.gmra.mxu0 %v826
    %v2171 = vpop.f32.mrf.mxu0
    %v2172 = vadd.f32 0.0, %v2171
    %v2173 = vpop.f32.mrf.mxu0
    %v2174 = vadd.f32 0.0, %v2173
    %2175 = vmatprep.mubr.f32.mxu0 0.0
    %2176 = vmatmul.mubr.f32.gmra.mxu0 %v829
    %v2177 = vpop.f32.mrf.mxu0
    %v2178 = vadd.f32 0.0, %v2177
    %v2179 = vpop.f32.mrf.mxu0
    %v2180 = vadd.f32 0.0, %v2179
    %2181 = vmatprep.mubr.f32.mxu0 0.0
    %2182 = vmatmul.mubr.f32.gmra.mxu0 %v832
    %v2183 = vpop.f32.mrf.mxu0
    %v2184 = vadd.f32 0.0, %v2183
    %v2185 = vpop.f32.mrf.mxu0
    %v2186 = vadd.f32 0.0, %v2185
    %2187 = vmatprep.mubr.f32.mxu0 0.0
    %2188 = vmatmul.mubr.f32.gmra.mxu0 %v835
    %v2189 = vpop.f32.mrf.mxu0
    %v2190 = vadd.f32 0.0, %v2189
    %v2191 = vpop.f32.mrf.mxu0
    %v2192 = vadd.f32 0.0, %v2191
    %2193 = vmatprep.mubr.f32.mxu0 0.0
    %2194 = vmatmul.mubr.f32.gmra.mxu0 %v838
    %v2195 = vpop.f32.mrf.mxu0
    %v2196 = vadd.f32 0.0, %v2195
    %v2197 = vpop.f32.mrf.mxu0
    %v2198 = vadd.f32 0.0, %v2197
    %2199 = vmatprep.mubr.f32.mxu0 0.0
    %2200 = vmatmul.mubr.f32.gmra.mxu0 %v841
    %v2201 = vpop.f32.mrf.mxu0
    %v2202 = vadd.f32 0.0, %v2201
    %v2203 = vpop.f32.mrf.mxu0
    %v2204 = vadd.f32 0.0, %v2203
    %2205 = vmatprep.mubr.f32.mxu0 0.0
    %2206 = vmatmul.mubr.f32.gmra.mxu0 %v844
    %v2207 = vpop.f32.mrf.mxu0
    %v2208 = vadd.f32 0.0, %v2207
    %v2209 = vpop.f32.mrf.mxu0
    %v2210 = vadd.f32 0.0, %v2209
    %2211 = vmatprep.mubr.f32.mxu0 0.0
    %2212 = vmatmul.mubr.f32.gmra.mxu0 %v847
    %v2213 = vpop.f32.mrf.mxu0
    %v2214 = vadd.f32 0.0, %v2213
    %v2215 = vpop.f32.mrf.mxu0
    %v2216 = vadd.f32 0.0, %v2215
    %2217 = vmatprep.mubr.f32.mxu0 0.0
    %2218 = vmatmul.mubr.f32.gmra.mxu0 %v850
    %v2219 = vpop.f32.mrf.mxu0
    %v2220 = vadd.f32 0.0, %v2219
    %v2221 = vpop.f32.mrf.mxu0
    %v2222 = vadd.f32 0.0, %v2221
    %2223 = vmatprep.mubr.f32.mxu0 0.0
    %2224 = vmatmul.mubr.f32.gmra.mxu0 %v853
    %v2225 = vpop.f32.mrf.mxu0
    %v2226 = vadd.f32 0.0, %v2225
    %v2227 = vpop.f32.mrf.mxu0
    %v2228 = vadd.f32 0.0, %v2227
    %2229 = vmatprep.mubr.f32.mxu0 0.0
    %2230 = vmatmul.mubr.f32.gmra.mxu0 %v856
    %v2231 = vpop.f32.mrf.mxu0
    %v2232 = vadd.f32 0.0, %v2231
    %v2233 = vpop.f32.mrf.mxu0
    %v2234 = vadd.f32 0.0, %v2233
    %2235 = vmatprep.mubr.f32.mxu0 0.0
    %2236 = vmatmul.mubr.f32.gmra.mxu0 %v859
    %v2237 = vpop.f32.mrf.mxu0
    %v2238 = vadd.f32 0.0, %v2237
    %v2239 = vpop.f32.mrf.mxu0
    %v2240 = vadd.f32 0.0, %v2239
    %2241 = vmatprep.mubr.f32.mxu0 0.0
    %2242 = vmatmul.mubr.f32.gmra.mxu0 %v862
    %v2243 = vpop.f32.mrf.mxu0
    %v2244 = vadd.f32 0.0, %v2243
    %v2245 = vpop.f32.mrf.mxu0
    %v2246 = vadd.f32 0.0, %v2245
    %2247 = vmatprep.mubr.f32.mxu0 0.0
    %2248 = vmatmul.mubr.f32.gmra.mxu0 %v865
    %v2249 = vpop.f32.mrf.mxu0
    %v2250 = vadd.f32 0.0, %v2249
    %v2251 = vpop.f32.mrf.mxu0
    %v2252 = vadd.f32 0.0, %v2251
    %2253 = vmatprep.mubr.f32.mxu0 0.0
    %2254 = vmatmul.mubr.f32.gmra.mxu0 %v868
    %v2255 = vpop.f32.mrf.mxu0
    %v2256 = vadd.f32 0.0, %v2255
    %v2257 = vpop.f32.mrf.mxu0
    %v2258 = vadd.f32 0.0, %v2257
    %2259 = vmatprep.mubr.f32.mxu0 0.0
    %2260 = vmatmul.mubr.f32.gmra.mxu0 %v871
    %v2261 = vpop.f32.mrf.mxu0
    %v2262 = vadd.f32 0.0, %v2261
    %v2263 = vpop.f32.mrf.mxu0
    %v2264 = vadd.f32 0.0, %v2263
    %2265 = vmatprep.mubr.f32.mxu0 0.0
    %2266 = vmatmul.mubr.f32.gmra.mxu0 %v874
    %v2267 = vpop.f32.mrf.mxu0
    %v2268 = vadd.f32 0.0, %v2267
    %v2269 = vpop.f32.mrf.mxu0
    %v2270 = vadd.f32 0.0, %v2269
    %2271 = vmatprep.mubr.f32.mxu0 0.0
    %2272 = vmatmul.mubr.f32.gmra.mxu0 %v877
    %v2273 = vpop.f32.mrf.mxu0
    %v2274 = vadd.f32 0.0, %v2273
    %v2275 = vpop.f32.mrf.mxu0
    %v2276 = vadd.f32 0.0, %v2275
    %2277 = vmatprep.mubr.f32.mxu0 0.0
    %2278 = vmatmul.mubr.f32.gmra.mxu0 %v880
    %v2279 = vpop.f32.mrf.mxu0
    %v2280 = vadd.f32 0.0, %v2279
    %v2281 = vpop.f32.mrf.mxu0
    %v2282 = vadd.f32 0.0, %v2281
    %2283 = vmatprep.mubr.f32.mxu0 0.0
    %2284 = vmatmul.mubr.f32.gmra.mxu0 %v883
    %v2285 = vpop.f32.mrf.mxu0
    %v2286 = vadd.f32 0.0, %v2285
    %v2287 = vpop.f32.mrf.mxu0
    %v2288 = vadd.f32 0.0, %v2287
    %2289 = vmatprep.mubr.f32.mxu0 0.0
    %2290 = vmatmul.mubr.f32.gmra.mxu0 %v886
    %v2291 = vpop.f32.mrf.mxu0
    %v2292 = vadd.f32 0.0, %v2291
    %v2293 = vpop.f32.mrf.mxu0
    %v2294 = vadd.f32 0.0, %v2293
    %2295 = vmatprep.mubr.f32.mxu0 0.0
    %2296 = vmatmul.mubr.f32.gmra.mxu0 %v889
    %v2297 = vpop.f32.mrf.mxu0
    %v2298 = vadd.f32 0.0, %v2297
    %v2299 = vpop.f32.mrf.mxu0
    %v2300 = vadd.f32 0.0, %v2299
    %2301 = vmatprep.mubr.f32.mxu0 0.0
    %2302 = vmatmul.mubr.f32.gmra.mxu0 %v892
    %v2303 = vpop.f32.mrf.mxu0
    %v2304 = vadd.f32 0.0, %v2303
    %v2305 = vpop.f32.mrf.mxu0
    %v2306 = vadd.f32 0.0, %v2305
    %2307 = vmatprep.mubr.f32.mxu0 0.0
    %2308 = vmatmul.mubr.f32.gmra.mxu0 %v895
    %v2309 = vpop.f32.mrf.mxu0
    %v2310 = vadd.f32 0.0, %v2309
    %v2311 = vpop.f32.mrf.mxu0
    %v2312 = vadd.f32 0.0, %v2311
    %2313 = vmatprep.mubr.f32.mxu0 0.0
    %2314 = vmatmul.mubr.f32.gmra.mxu0 %v898
    %v2315 = vpop.f32.mrf.mxu0
    %v2316 = vadd.f32 0.0, %v2315
    %v2317 = vpop.f32.mrf.mxu0
    %v2318 = vadd.f32 0.0, %v2317
    %2319 = vmatprep.mubr.f32.mxu0 0.0
    %2320 = vmatmul.mubr.f32.gmra.mxu0 %v901
    %v2321 = vpop.f32.mrf.mxu0
    %v2322 = vadd.f32 0.0, %v2321
    %v2323 = vpop.f32.mrf.mxu0
    %v2324 = vadd.f32 0.0, %v2323
    %2325 = vmatprep.mubr.f32.mxu0 0.0
    %2326 = vmatmul.mubr.f32.gmra.mxu0 %v904
    %v2327 = vpop.f32.mrf.mxu0
    %v2328 = vadd.f32 0.0, %v2327
    %v2329 = vpop.f32.mrf.mxu0
    %v2330 = vadd.f32 0.0, %v2329
    %2331 = vmatprep.mubr.f32.mxu0 0.0
    %2332 = vmatmul.mubr.f32.gmra.mxu0 %v907
    %v2333 = vpop.f32.mrf.mxu0
    %v2334 = vadd.f32 0.0, %v2333
    %v2335 = vpop.f32.mrf.mxu0
    %v2336 = vadd.f32 0.0, %v2335
    %2337 = vmatprep.mubr.f32.mxu0 0.0
    %2338 = vmatmul.mubr.f32.gmra.mxu0 %v910
    %v2339 = vpop.f32.mrf.mxu0
    %v2340 = vadd.f32 0.0, %v2339
    %v2341 = vpop.f32.mrf.mxu0
    %v2342 = vadd.f32 0.0, %v2341
    %2343 = vmatprep.mubr.f32.mxu0 0.0
    %2344 = vmatmul.mubr.f32.gmra.mxu0 %v913
    %v2345 = vpop.f32.mrf.mxu0
    %v2346 = vadd.f32 0.0, %v2345
    %v2347 = vpop.f32.mrf.mxu0
    %v2348 = vadd.f32 0.0, %v2347
    %2349 = vmatprep.mubr.f32.mxu0 0.0
    %2350 = vmatmul.mubr.f32.gmra.mxu0 %v916
    %v2351 = vpop.f32.mrf.mxu0
    %v2352 = vadd.f32 0.0, %v2351
    %v2353 = vpop.f32.mrf.mxu0
    %v2354 = vadd.f32 0.0, %v2353
    %2355 = vmatprep.mubr.f32.mxu0 0.0
    %2356 = vmatmul.mubr.f32.gmra.mxu0 %v919
    %v2357 = vpop.f32.mrf.mxu0
    %v2358 = vadd.f32 0.0, %v2357
    %v2359 = vpop.f32.mrf.mxu0
    %v2360 = vadd.f32 0.0, %v2359
    %2361 = vmatprep.mubr.f32.mxu0 0.0
    %2362 = vmatmul.mubr.f32.gmra.mxu0 %v922
    %v2363 = vpop.f32.mrf.mxu0
    %v2364 = vadd.f32 0.0, %v2363
    %v2365 = vpop.f32.mrf.mxu0
    %v2366 = vadd.f32 0.0, %v2365
    %2367 = vmatprep.mubr.f32.mxu0 0.0
    %2368 = vmatmul.mubr.f32.gmra.mxu0 %v925
    %v2369 = vpop.f32.mrf.mxu0
    %v2370 = vadd.f32 0.0, %v2369
    %v2371 = vpop.f32.mrf.mxu0
    %v2372 = vadd.f32 0.0, %v2371
    %2373 = vmatprep.mubr.f32.mxu0 0.0
    %2374 = vmatmul.mubr.f32.gmra.mxu0 %v928
    %v2375 = vpop.f32.mrf.mxu0
    %v2376 = vadd.f32 0.0, %v2375
    %v2377 = vpop.f32.mrf.mxu0
    %v2378 = vadd.f32 0.0, %v2377
    %2379 = vmatprep.mubr.f32.mxu0 0.0
    %2380 = vmatmul.mubr.f32.gmra.mxu0 %v931
    %v2381 = vpop.f32.mrf.mxu0
    %v2382 = vadd.f32 0.0, %v2381
    %v2383 = vpop.f32.mrf.mxu0
    %v2384 = vadd.f32 0.0, %v2383
    %2385 = vmatprep.mubr.f32.mxu0 0.0
    %2386 = vmatmul.mubr.f32.gmra.mxu0 %v934
    %v2387 = vpop.f32.mrf.mxu0
    %v2388 = vadd.f32 0.0, %v2387
    %v2389 = vpop.f32.mrf.mxu0
    %v2390 = vadd.f32 0.0, %v2389
    %2391 = vmatprep.mubr.f32.mxu0 0.0
    %2392 = vmatmul.mubr.f32.gmra.mxu0 %v937
    %v2393 = vpop.f32.mrf.mxu0
    %v2394 = vadd.f32 0.0, %v2393
    %v2395 = vpop.f32.mrf.mxu0
    %v2396 = vadd.f32 0.0, %v2395
    %2397 = vmatprep.mubr.f32.mxu0 0.0
    %2398 = vmatmul.mubr.f32.gmra.mxu0 %v940
    %v2399 = vpop.f32.mrf.mxu0
    %v2400 = vadd.f32 0.0, %v2399
    %v2401 = vpop.f32.mrf.mxu0
    %v2402 = vadd.f32 0.0, %v2401
    %2403 = vmatprep.mubr.f32.mxu0 0.0
    %2404 = vmatmul.mubr.f32.gmra.mxu0 %v943
    %v2405 = vpop.f32.mrf.mxu0
    %v2406 = vadd.f32 0.0, %v2405
    %v2407 = vpop.f32.mrf.mxu0
    %v2408 = vadd.f32 0.0, %v2407
    %2409 = vmatprep.mubr.f32.mxu0 0.0
    %2410 = vmatmul.mubr.f32.gmra.mxu0 %v946
    %v2411 = vpop.f32.mrf.mxu0
    %v2412 = vadd.f32 0.0, %v2411
    %v2413 = vpop.f32.mrf.mxu0
    %v2414 = vadd.f32 0.0, %v2413
    %2415 = vmatprep.mubr.f32.mxu0 0.0
    %2416 = vmatmul.mubr.f32.gmra.mxu0 %v949
    %v2417 = vpop.f32.mrf.mxu0
    %v2418 = vadd.f32 0.0, %v2417
    %v2419 = vpop.f32.mrf.mxu0
    %v2420 = vadd.f32 0.0, %v2419
    %2421 = vmatprep.mubr.f32.mxu0 0.0
    %2422 = vmatmul.mubr.f32.gmra.mxu0 %v952
    %v2423 = vpop.f32.mrf.mxu0
    %v2424 = vadd.f32 0.0, %v2423
    %v2425 = vpop.f32.mrf.mxu0
    %v2426 = vadd.f32 0.0, %v2425
    %2427 = vmatprep.mubr.f32.mxu0 0.0
    %2428 = vmatmul.mubr.f32.gmra.mxu0 %v955
    %v2429 = vpop.f32.mrf.mxu0
    %v2430 = vadd.f32 0.0, %v2429
    %v2431 = vpop.f32.mrf.mxu0
    %v2432 = vadd.f32 0.0, %v2431
    %2433 = vmatprep.mubr.f32.mxu0 0.0
    %2434 = vmatmul.mubr.f32.gmra.mxu0 %v958
    %v2435 = vpop.f32.mrf.mxu0
    %v2436 = vadd.f32 0.0, %v2435
    %v2437 = vpop.f32.mrf.mxu0
    %v2438 = vadd.f32 0.0, %v2437
    %2439 = vmatprep.mubr.f32.mxu0 0.0
    %2440 = vmatmul.mubr.f32.gmra.mxu0 %v961
    %v2441 = vpop.f32.mrf.mxu0
    %v2442 = vadd.f32 0.0, %v2441
    %v2443 = vpop.f32.mrf.mxu0
    %v2444 = vadd.f32 0.0, %v2443
    %2445 = vmatprep.mubr.f32.mxu0 0.0
    %2446 = vmatmul.mubr.f32.gmra.mxu0 %v964
    %v2447 = vpop.f32.mrf.mxu0
    %v2448 = vadd.f32 0.0, %v2447
    %v2449 = vpop.f32.mrf.mxu0
    %v2450 = vadd.f32 0.0, %v2449
    %2451 = vmatprep.mubr.f32.mxu0 0.0
    %2452 = vmatmul.mubr.f32.gmra.mxu0 %v967
    %v2453 = vpop.f32.mrf.mxu0
    %v2454 = vadd.f32 0.0, %v2453
    %v2455 = vpop.f32.mrf.mxu0
    %v2456 = vadd.f32 0.0, %v2455
    %2457 = vmatprep.mubr.f32.mxu0 0.0
    %2458 = vmatmul.mubr.f32.gmra.mxu0 %v970
    %v2459 = vpop.f32.mrf.mxu0
    %v2460 = vadd.f32 0.0, %v2459
    %v2461 = vpop.f32.mrf.mxu0
    %v2462 = vadd.f32 0.0, %v2461
    %2463 = vmatprep.mubr.f32.mxu0 0.0
    %2464 = vmatmul.mubr.f32.gmra.mxu0 %v973
    %v2465 = vpop.f32.mrf.mxu0
    %v2466 = vadd.f32 0.0, %v2465
    %v2467 = vpop.f32.mrf.mxu0
    %v2468 = vadd.f32 0.0, %v2467
    %2469 = vmatprep.mubr.f32.mxu0 0.0
    %2470 = vmatmul.mubr.f32.gmra.mxu0 %v976
    %v2471 = vpop.f32.mrf.mxu0
    %v2472 = vadd.f32 0.0, %v2471
    %v2473 = vpop.f32.mrf.mxu0
    %v2474 = vadd.f32 0.0, %v2473
    %2475 = vmatprep.mubr.f32.mxu0 0.0
    %2476 = vmatmul.mubr.f32.gmra.mxu0 %v979
    %v2477 = vpop.f32.mrf.mxu0
    %v2478 = vadd.f32 0.0, %v2477
    %v2479 = vpop.f32.mrf.mxu0
    %v2480 = vadd.f32 0.0, %v2479
    %2481 = vmatprep.mubr.f32.mxu0 0.0
    %2482 = vmatmul.mubr.f32.gmra.mxu0 %v982
    %v2483 = vpop.f32.mrf.mxu0
    %v2484 = vadd.f32 0.0, %v2483
    %v2485 = vpop.f32.mrf.mxu0
    %v2486 = vadd.f32 0.0, %v2485
    %2487 = vmatprep.mubr.f32.mxu0 0.0
    %2488 = vmatmul.mubr.f32.gmra.mxu0 %v985
    %v2489 = vpop.f32.mrf.mxu0
    %v2490 = vadd.f32 0.0, %v2489
    %v2491 = vpop.f32.mrf.mxu0
    %v2492 = vadd.f32 0.0, %v2491
    %2493 = vmatprep.mubr.f32.mxu0 0.0
    %2494 = vmatmul.mubr.f32.gmra.mxu0 %v988
    %v2495 = vpop.f32.mrf.mxu0
    %v2496 = vadd.f32 0.0, %v2495
    %v2497 = vpop.f32.mrf.mxu0
    %v2498 = vadd.f32 0.0, %v2497
    %2499 = vmatprep.mubr.f32.mxu0 0.0
    %2500 = vmatmul.mubr.f32.gmra.mxu0 %v991
    %v2501 = vpop.f32.mrf.mxu0
    %v2502 = vadd.f32 0.0, %v2501
    %v2503 = vpop.f32.mrf.mxu0
    %v2504 = vadd.f32 0.0, %v2503
    %2505 = vmatprep.mubr.f32.mxu0 0.0
    %2506 = vmatmul.mubr.f32.gmra.mxu0 %v994
    %v2507 = vpop.f32.mrf.mxu0
    %v2508 = vadd.f32 0.0, %v2507
    %v2509 = vpop.f32.mrf.mxu0
    %v2510 = vadd.f32 0.0, %v2509
    %2511 = vmatprep.mubr.f32.mxu0 0.0
    %2512 = vmatmul.mubr.f32.gmra.mxu0 %v997
    %v2513 = vpop.f32.mrf.mxu0
    %v2514 = vadd.f32 0.0, %v2513
    %v2515 = vpop.f32.mrf.mxu0
    %v2516 = vadd.f32 0.0, %v2515
    %2517 = vmatprep.mubr.f32.mxu0 0.0
    %2518 = vmatmul.mubr.f32.gmra.mxu0 %v1000
    %v2519 = vpop.f32.mrf.mxu0
    %v2520 = vadd.f32 0.0, %v2519
    %v2521 = vpop.f32.mrf.mxu0
    %v2522 = vadd.f32 0.0, %v2521
    %2523 = vmatprep.mubr.f32.mxu0 0.0
    %2524 = vmatmul.mubr.f32.gmra.mxu0 %v1003
    %v2525 = vpop.f32.mrf.mxu0
    %v2526 = vadd.f32 0.0, %v2525
    %v2527 = vpop.f32.mrf.mxu0
    %v2528 = vadd.f32 0.0, %v2527
    %2529 = vmatprep.mubr.f32.mxu0 0.0
    %2530 = vmatmul.mubr.f32.gmra.mxu0 %v1006
    %v2531 = vpop.f32.mrf.mxu0
    %v2532 = vadd.f32 0.0, %v2531
    %v2533 = vpop.f32.mrf.mxu0
    %v2534 = vadd.f32 0.0, %v2533
    %2535 = vmatprep.mubr.f32.mxu0 0.0
    %2536 = vmatmul.mubr.f32.gmra.mxu0 %v1009
    %v2537 = vpop.f32.mrf.mxu0
    %v2538 = vadd.f32 0.0, %v2537
    %v2539 = vpop.f32.mrf.mxu0
    %v2540 = vadd.f32 0.0, %v2539
    %2541 = vmatprep.mubr.f32.mxu0 0.0
    %2542 = vmatmul.mubr.f32.gmra.mxu0 %v1012
    %v2543 = vpop.f32.mrf.mxu0
    %v2544 = vadd.f32 0.0, %v2543
    %v2545 = vpop.f32.mrf.mxu0
    %v2546 = vadd.f32 0.0, %v2545
    %2547 = vmatprep.mubr.f32.mxu0 0.0
    %2548 = vmatmul.mubr.f32.gmra.mxu0 %v1015
    %v2549 = vpop.f32.mrf.mxu0
    %v2550 = vadd.f32 0.0, %v2549
    %v2551 = vpop.f32.mrf.mxu0
    %v2552 = vadd.f32 0.0, %v2551
    %2553 = vmatprep.mubr.f32.mxu0 0.0
    %2554 = vmatmul.mubr.f32.gmra.mxu0 %v1018
    %v2555 = vpop.f32.mrf.mxu0
    %v2556 = vadd.f32 0.0, %v2555
    %v2557 = vpop.f32.mrf.mxu0
    %v2558 = vadd.f32 0.0, %v2557
    %2559 = vmatprep.mubr.f32.mxu0 0.0
    %2560 = vmatmul.mubr.f32.gmra.mxu0 %v1021
    %v2561 = vpop.f32.mrf.mxu0
    %v2562 = vadd.f32 0.0, %v2561
    %v2563 = vpop.f32.mrf.mxu0
    %v2564 = vadd.f32 0.0, %v2563
    %2565 = vmatprep.mubr.f32.mxu0 0.0
    %2566 = vmatmul.mubr.f32.gmra.mxu0 %v1024
    %v2567 = vpop.f32.mrf.mxu0
    %v2568 = vadd.f32 0.0, %v2567
    %v2569 = vpop.f32.mrf.mxu0
    %v2570 = vadd.f32 0.0, %v2569
    %2571 = vmatprep.mubr.f32.mxu0 0.0
    %2572 = vmatmul.mubr.f32.gmra.mxu0 %v1027
    %v2573 = vpop.f32.mrf.mxu0
    %v2574 = vadd.f32 0.0, %v2573
    %v2575 = vpop.f32.mrf.mxu0
    %v2576 = vadd.f32 0.0, %v2575
    %2577 = vmatprep.mubr.f32.mxu0 0.0
    %2578 = vmatmul.mubr.f32.gmra.mxu0 %v1030
    %v2579 = vpop.f32.mrf.mxu0
    %v2580 = vadd.f32 0.0, %v2579
    %v2581 = vpop.f32.mrf.mxu0
    %v2582 = vadd.f32 0.0, %v2581
    %2583 = vmatprep.mubr.f32.mxu0 0.0
    %2584 = vmatmul.mubr.f32.gmra.mxu0 %v1033
    %v2585 = vpop.f32.mrf.mxu0
    %v2586 = vadd.f32 0.0, %v2585
    %v2587 = vpop.f32.mrf.mxu0
    %v2588 = vadd.f32 0.0, %v2587
    %2589 = vmatprep.mubr.f32.mxu0 0.0
    %2590 = vmatmul.mubr.f32.gmra.mxu0 %v1036
    %v2591 = vpop.f32.mrf.mxu0
    %v2592 = vadd.f32 0.0, %v2591
    %v2593 = vpop.f32.mrf.mxu0
    %v2594 = vadd.f32 0.0, %v2593
    %2595 = vmatprep.mubr.f32.mxu0 0.0
    %2596 = vmatmul.mubr.f32.gmra.mxu0 %v1039
    %v2597 = vpop.f32.mrf.mxu0
    %v2598 = vadd.f32 0.0, %v2597
    %v2599 = vpop.f32.mrf.mxu0
    %v2600 = vadd.f32 0.0, %v2599
    %2601 = vmatprep.mubr.f32.mxu0 0.0
    %2602 = vmatmul.mubr.f32.gmra.mxu0 %v1042
    %v2603 = vpop.f32.mrf.mxu0
    %v2604 = vadd.f32 0.0, %v2603
    %v2605 = vpop.f32.mrf.mxu0
    %v2606 = vadd.f32 0.0, %v2605
    %2607 = vmatprep.mubr.f32.mxu0 0.0
    %2608 = vmatmul.mubr.f32.gmra.mxu0 %v1045
    %v2609 = vpop.f32.mrf.mxu0
    %v2610 = vadd.f32 0.0, %v2609
    %v2611 = vpop.f32.mrf.mxu0
    %v2612 = vadd.f32 0.0, %v2611
    %2613 = vmatprep.mubr.f32.mxu0 0.0
    %2614 = vmatmul.mubr.f32.gmra.mxu0 %v1048
    %v2615 = vpop.f32.mrf.mxu0
    %v2616 = vadd.f32 0.0, %v2615
    %v2617 = vpop.f32.mrf.mxu0
    %v2618 = vadd.f32 0.0, %v2617
    %2619 = vmatprep.mubr.f32.mxu0 0.0
    %2620 = vmatmul.mubr.f32.gmra.mxu0 %v1051
    %v2621 = vpop.f32.mrf.mxu0
    %v2622 = vadd.f32 0.0, %v2621
    %v2623 = vpop.f32.mrf.mxu0
    %v2624 = vadd.f32 0.0, %v2623
    %2625 = vmatprep.mubr.f32.mxu0 0.0
    %2626 = vmatmul.mubr.f32.gmra.mxu0 %v1054
    %v2627 = vpop.f32.mrf.mxu0
    %v2628 = vadd.f32 0.0, %v2627
    %v2629 = vpop.f32.mrf.mxu0
    %v2630 = vadd.f32 0.0, %v2629
    %2631 = vmatprep.mubr.f32.mxu0 0.0
    %2632 = vmatmul.mubr.f32.gmra.mxu0 %v1057
    %v2633 = vpop.f32.mrf.mxu0
    %v2634 = vadd.f32 0.0, %v2633
    %v2635 = vpop.f32.mrf.mxu0
    %v2636 = vadd.f32 0.0, %v2635
    %2637 = vmatprep.mubr.f32.mxu0 0.0
    %2638 = vmatmul.mubr.f32.gmra.mxu0 %v1060
    %v2639 = vpop.f32.mrf.mxu0
    %v2640 = vadd.f32 0.0, %v2639
    %v2641 = vpop.f32.mrf.mxu0
    %v2642 = vadd.f32 0.0, %v2641
    %2643 = vmatprep.mubr.f32.mxu0 0.0
    %2644 = vmatmul.mubr.f32.gmra.mxu0 %v1063
    %v2645 = vpop.f32.mrf.mxu0
    %v2646 = vadd.f32 0.0, %v2645
    %v2647 = vpop.f32.mrf.mxu0
    %v2648 = vadd.f32 0.0, %v2647
    %2649 = vmatprep.mubr.f32.mxu0 0.0
    %2650 = vmatmul.mubr.f32.gmra.mxu0 %v1066
    %v2651 = vpop.f32.mrf.mxu0
    %v2652 = vadd.f32 0.0, %v2651
    %v2653 = vpop.f32.mrf.mxu0
    %v2654 = vadd.f32 0.0, %v2653
    %2655 = vmatprep.mubr.f32.mxu0 0.0
    %2656 = vmatmul.mubr.f32.gmra.mxu0 %v1069
    %v2657 = vpop.f32.mrf.mxu0
    %v2658 = vadd.f32 0.0, %v2657
    %v2659 = vpop.f32.mrf.mxu0
    %v2660 = vadd.f32 0.0, %v2659
    %2661 = vmatprep.mubr.f32.mxu0 0.0
    %2662 = vmatmul.mubr.f32.gmra.mxu0 %v1072
    %v2663 = vpop.f32.mrf.mxu0
    %v2664 = vadd.f32 0.0, %v2663
    %v2665 = vpop.f32.mrf.mxu0
    %v2666 = vadd.f32 0.0, %v2665
    %2667 = vmatprep.mubr.f32.mxu0 0.0
    %2668 = vmatmul.mubr.f32.gmra.mxu0 %v1075
    %v2669 = vpop.f32.mrf.mxu0
    %v2670 = vadd.f32 0.0, %v2669
    %v2671 = vpop.f32.mrf.mxu0
    %v2672 = vadd.f32 0.0, %v2671
    %2673 = vmatprep.mubr.f32.mxu0 0.0
    %2674 = vmatmul.mubr.f32.gmra.mxu0 %v1078
    %v2675 = vpop.f32.mrf.mxu0
    %v2676 = vadd.f32 0.0, %v2675
    %v2677 = vpop.f32.mrf.mxu0
    %v2678 = vadd.f32 0.0, %v2677
    %2679 = vmatprep.mubr.f32.mxu0 0.0
    %2680 = vmatmul.mubr.f32.gmra.mxu0 %v1081
    %v2681 = vpop.f32.mrf.mxu0
    %v2682 = vadd.f32 0.0, %v2681
    %v2683 = vpop.f32.mrf.mxu0
    %v2684 = vadd.f32 0.0, %v2683
    %2685 = vmatprep.mubr.f32.mxu0 0.0
    %2686 = vmatmul.mubr.f32.gmra.mxu0 %v1084
    %v2687 = vpop.f32.mrf.mxu0
    %v2688 = vadd.f32 0.0, %v2687
    %v2689 = vpop.f32.mrf.mxu0
    %v2690 = vadd.f32 0.0, %v2689
    %2691 = vdwg.mxu0
    %v2692 = vmax.f32 %v1158, 0.0
    %v2693 = vmax.f32 %v1160, 0.0
    %v2694 = vmax.f32 %v1164, 0.0
    %v2695 = vmax.f32 %v1166, 0.0
    %v2696 = vmax.f32 %v1170, 0.0
    %v2697 = vmax.f32 %v1172, 0.0
    %v2698 = vmax.f32 %v1176, 0.0
    %v2699 = vmax.f32 %v1178, 0.0
    %v2700 = vmax.f32 %v1182, 0.0
    %v2701 = vmax.f32 %v1184, 0.0
    %v2702 = vmax.f32 %v1188, 0.0
    %v2703 = vmax.f32 %v1190, 0.0
    %v2704 = vmax.f32 %v1194, 0.0
    %v2705 = vmax.f32 %v1196, 0.0
    %v2706 = vmax.f32 %v1200, 0.0
    %v2707 = vmax.f32 %v1202, 0.0
    %v2708 = vmax.f32 %v1206, 0.0
    %v2709 = vmax.f32 %v1208, 0.0
    %v2710 = vmax.f32 %v1212, 0.0
    %v2711 = vmax.f32 %v1214, 0.0
    %v2712 = vmax.f32 %v1218, 0.0
    %v2713 = vmax.f32 %v1220, 0.0
    %v2714 = vmax.f32 %v1224, 0.0
    %v2715 = vmax.f32 %v1226, 0.0
    %v2716 = vmax.f32 %v1230, 0.0
    %v2717 = vmax.f32 %v1232, 0.0
    %v2718 = vmax.f32 %v1236, 0.0
    %v2719 = vmax.f32 %v1238, 0.0
    %v2720 = vmax.f32 %v1242, 0.0
    %v2721 = vmax.f32 %v1244, 0.0
    %v2722 = vmax.f32 %v1248, 0.0
    %v2723 = vmax.f32 %v1250, 0.0
    %v2724 = vmax.f32 %v1254, 0.0
    %v2725 = vmax.f32 %v1256, 0.0
    %v2726 = vmax.f32 %v1260, 0.0
    %v2727 = vmax.f32 %v1262, 0.0
    %v2728 = vmax.f32 %v1266, 0.0
    %v2729 = vmax.f32 %v1268, 0.0
    %v2730 = vmax.f32 %v1272, 0.0
    %v2731 = vmax.f32 %v1274, 0.0
    %v2732 = vmax.f32 %v1278, 0.0
    %v2733 = vmax.f32 %v1280, 0.0
    %v2734 = vmax.f32 %v1284, 0.0
    %v2735 = vmax.f32 %v1286, 0.0
    %v2736 = vmax.f32 %v1290, 0.0
    %v2737 = vmax.f32 %v1292, 0.0
    %v2738 = vmax.f32 %v1296, 0.0
    %v2739 = vmax.f32 %v1298, 0.0
    %v2740 = vmax.f32 %v1302, 0.0
    %v2741 = vmax.f32 %v1304, 0.0
    %v2742 = vmax.f32 %v1308, 0.0
    %v2743 = vmax.f32 %v1310, 0.0
    %v2744 = vmax.f32 %v1314, 0.0
    %v2745 = vmax.f32 %v1316, 0.0
    %v2746 = vmax.f32 %v1320, 0.0
    %v2747 = vmax.f32 %v1322, 0.0
    %v2748 = vmax.f32 %v1326, 0.0
    %v2749 = vmax.f32 %v1328, 0.0
    %v2750 = vmax.f32 %v1332, 0.0
    %v2751 = vmax.f32 %v1334, 0.0
    %v2752 = vmax.f32 %v1338, 0.0
    %v2753 = vmax.f32 %v1340, 0.0
    %v2754 = vmax.f32 %v1344, 0.0
    %v2755 = vmax.f32 %v1346, 0.0
    %v2756 = vmax.f32 %v1350, 0.0
    %v2757 = vmax.f32 %v1352, 0.0
    %v2758 = vmax.f32 %v1356, 0.0
    %v2759 = vmax.f32 %v1358, 0.0
    %v2760 = vmax.f32 %v1362, 0.0
    %v2761 = vmax.f32 %v1364, 0.0
    %v2762 = vmax.f32 %v1368, 0.0
    %v2763 = vmax.f32 %v1370, 0.0
    %v2764 = vmax.f32 %v1374, 0.0
    %v2765 = vmax.f32 %v1376, 0.0
    %v2766 = vmax.f32 %v1380, 0.0
    %v2767 = vmax.f32 %v1382, 0.0
    %v2768 = vmax.f32 %v1386, 0.0
    %v2769 = vmax.f32 %v1388, 0.0
    %v2770 = vmax.f32 %v1392, 0.0
    %v2771 = vmax.f32 %v1394, 0.0
    %v2772 = vmax.f32 %v1398, 0.0
    %v2773 = vmax.f32 %v1400, 0.0
    %v2774 = vmax.f32 %v1404, 0.0
    %v2775 = vmax.f32 %v1406, 0.0
    %v2776 = vmax.f32 %v1410, 0.0
    %v2777 = vmax.f32 %v1412, 0.0
    %v2778 = vmax.f32 %v1416, 0.0
    %v2779 = vmax.f32 %v1418, 0.0
    %v2780 = vmax.f32 %v1422, 0.0
    %v2781 = vmax.f32 %v1424, 0.0
    %v2782 = vmax.f32 %v1428, 0.0
    %v2783 = vmax.f32 %v1430, 0.0
    %v2784 = vmax.f32 %v1434, 0.0
    %v2785 = vmax.f32 %v1436, 0.0
    %v2786 = vmax.f32 %v1440, 0.0
    %v2787 = vmax.f32 %v1442, 0.0
    %v2788 = vmax.f32 %v1446, 0.0
    %v2789 = vmax.f32 %v1448, 0.0
    %v2790 = vmax.f32 %v1452, 0.0
    %v2791 = vmax.f32 %v1454, 0.0
    %v2792 = vmax.f32 %v1458, 0.0
    %v2793 = vmax.f32 %v1460, 0.0
    %v2794 = vmax.f32 %v1464, 0.0
    %v2795 = vmax.f32 %v1466, 0.0
    %v2796 = vmax.f32 %v1470, 0.0
    %v2797 = vmax.f32 %v1472, 0.0
    %v2798 = vmax.f32 %v1476, 0.0
    %v2799 = vmax.f32 %v1478, 0.0
    %v2800 = vmax.f32 %v1482, 0.0
    %v2801 = vmax.f32 %v1484, 0.0
    %v2802 = vmax.f32 %v1488, 0.0
    %v2803 = vmax.f32 %v1490, 0.0
    %v2804 = vmax.f32 %v1494, 0.0
    %v2805 = vmax.f32 %v1496, 0.0
    %v2806 = vmax.f32 %v1500, 0.0
    %v2807 = vmax.f32 %v1502, 0.0
    %v2808 = vmax.f32 %v1506, 0.0
    %v2809 = vmax.f32 %v1508, 0.0
    %v2810 = vmax.f32 %v1512, 0.0
    %v2811 = vmax.f32 %v1514, 0.0
    %v2812 = vmax.f32 %v1518, 0.0
    %v2813 = vmax.f32 %v1520, 0.0
    %v2814 = vmax.f32 %v1524, 0.0
    %v2815 = vmax.f32 %v1526, 0.0
    %v2816 = vmax.f32 %v1530, 0.0
    %v2817 = vmax.f32 %v1532, 0.0
    %v2818 = vmax.f32 %v1536, 0.0
    %v2819 = vmax.f32 %v1538, 0.0
    %v2820 = vmax.f32 %v1542, 0.0
    %v2821 = vmax.f32 %v1544, 0.0
    %v2822 = vmax.f32 %v1548, 0.0
    %v2823 = vmax.f32 %v1550, 0.0
    %v2824 = vmax.f32 %v1554, 0.0
    %v2825 = vmax.f32 %v1556, 0.0
    %v2826 = vmax.f32 %v1560, 0.0
    %v2827 = vmax.f32 %v1562, 0.0
    %v2828 = vmax.f32 %v1566, 0.0
    %v2829 = vmax.f32 %v1568, 0.0
    %v2830 = vmax.f32 %v1572, 0.0
    %v2831 = vmax.f32 %v1574, 0.0
    %v2832 = vmax.f32 %v1578, 0.0
    %v2833 = vmax.f32 %v1580, 0.0
    %v2834 = vmax.f32 %v1584, 0.0
    %v2835 = vmax.f32 %v1586, 0.0
    %v2836 = vmax.f32 %v1590, 0.0
    %v2837 = vmax.f32 %v1592, 0.0
    %v2838 = vmax.f32 %v1596, 0.0
    %v2839 = vmax.f32 %v1598, 0.0
    %v2840 = vmax.f32 %v1602, 0.0
    %v2841 = vmax.f32 %v1604, 0.0
    %v2842 = vmax.f32 %v1608, 0.0
    %v2843 = vmax.f32 %v1610, 0.0
    %v2844 = vmax.f32 %v1614, 0.0
    %v2845 = vmax.f32 %v1616, 0.0
    %v2846 = vmax.f32 %v1620, 0.0
    %v2847 = vmax.f32 %v1622, 0.0
    %v2848 = vmax.f32 %v1626, 0.0
    %v2849 = vmax.f32 %v1628, 0.0
    %v2850 = vmax.f32 %v1632, 0.0
    %v2851 = vmax.f32 %v1634, 0.0
    %v2852 = vmax.f32 %v1638, 0.0
    %v2853 = vmax.f32 %v1640, 0.0
    %v2854 = vmax.f32 %v1644, 0.0
    %v2855 = vmax.f32 %v1646, 0.0
    %v2856 = vmax.f32 %v1650, 0.0
    %v2857 = vmax.f32 %v1652, 0.0
    %v2858 = vmax.f32 %v1656, 0.0
    %v2859 = vmax.f32 %v1658, 0.0
    %v2860 = vmax.f32 %v1662, 0.0
    %v2861 = vmax.f32 %v1664, 0.0
    %v2862 = vmax.f32 %v1668, 0.0
    %v2863 = vmax.f32 %v1670, 0.0
    %v2864 = vmax.f32 %v1674, 0.0
    %v2865 = vmax.f32 %v1676, 0.0
    %v2866 = vmax.f32 %v1680, 0.0
    %v2867 = vmax.f32 %v1682, 0.0
    %v2868 = vmax.f32 %v1686, 0.0
    %v2869 = vmax.f32 %v1688, 0.0
    %v2870 = vmax.f32 %v1692, 0.0
    %v2871 = vmax.f32 %v1694, 0.0
    %v2872 = vmax.f32 %v1698, 0.0
    %v2873 = vmax.f32 %v1700, 0.0
    %v2874 = vmax.f32 %v1704, 0.0
    %v2875 = vmax.f32 %v1706, 0.0
    %v2876 = vmax.f32 %v1710, 0.0
    %v2877 = vmax.f32 %v1712, 0.0
    %v2878 = vmax.f32 %v1716, 0.0
    %v2879 = vmax.f32 %v1718, 0.0
    %v2880 = vmax.f32 %v1722, 0.0
    %v2881 = vmax.f32 %v1724, 0.0
    %v2882 = vmax.f32 %v1728, 0.0
    %v2883 = vmax.f32 %v1730, 0.0
    %v2884 = vmax.f32 %v1734, 0.0
    %v2885 = vmax.f32 %v1736, 0.0
    %v2886 = vmax.f32 %v1740, 0.0
    %v2887 = vmax.f32 %v1742, 0.0
    %v2888 = vmax.f32 %v1746, 0.0
    %v2889 = vmax.f32 %v1748, 0.0
    %v2890 = vmax.f32 %v1752, 0.0
    %v2891 = vmax.f32 %v1754, 0.0
    %v2892 = vmax.f32 %v1758, 0.0
    %v2893 = vmax.f32 %v1760, 0.0
    %v2894 = vmax.f32 %v1764, 0.0
    %v2895 = vmax.f32 %v1766, 0.0
    %v2896 = vmax.f32 %v1770, 0.0
    %v2897 = vmax.f32 %v1772, 0.0
    %v2898 = vmax.f32 %v1776, 0.0
    %v2899 = vmax.f32 %v1778, 0.0
    %v2900 = vmax.f32 %v1782, 0.0
    %v2901 = vmax.f32 %v1784, 0.0
    %v2902 = vmax.f32 %v1788, 0.0
    %v2903 = vmax.f32 %v1790, 0.0
    %v2904 = vmax.f32 %v1794, 0.0
    %v2905 = vmax.f32 %v1796, 0.0
    %v2906 = vmax.f32 %v1800, 0.0
    %v2907 = vmax.f32 %v1802, 0.0
    %v2908 = vmax.f32 %v1806, 0.0
    %v2909 = vmax.f32 %v1808, 0.0
    %v2910 = vmax.f32 %v1812, 0.0
    %v2911 = vmax.f32 %v1814, 0.0
    %v2912 = vmax.f32 %v1818, 0.0
    %v2913 = vmax.f32 %v1820, 0.0
    %v2914 = vmax.f32 %v1824, 0.0
    %v2915 = vmax.f32 %v1826, 0.0
    %v2916 = vmax.f32 %v1830, 0.0
    %v2917 = vmax.f32 %v1832, 0.0
    %v2918 = vmax.f32 %v1836, 0.0
    %v2919 = vmax.f32 %v1838, 0.0
    %v2920 = vmax.f32 %v1842, 0.0
    %v2921 = vmax.f32 %v1844, 0.0
    %v2922 = vmax.f32 %v1848, 0.0
    %v2923 = vmax.f32 %v1850, 0.0
    %v2924 = vmax.f32 %v1854, 0.0
    %v2925 = vmax.f32 %v1856, 0.0
    %v2926 = vmax.f32 %v1860, 0.0
    %v2927 = vmax.f32 %v1862, 0.0
    %v2928 = vmax.f32 %v1866, 0.0
    %v2929 = vmax.f32 %v1868, 0.0
    %v2930 = vmax.f32 %v1872, 0.0
    %v2931 = vmax.f32 %v1874, 0.0
    %v2932 = vmax.f32 %v1878, 0.0
    %v2933 = vmax.f32 %v1880, 0.0
    %v2934 = vmax.f32 %v1884, 0.0
    %v2935 = vmax.f32 %v1886, 0.0
    %v2936 = vmax.f32 %v1890, 0.0
    %v2937 = vmax.f32 %v1892, 0.0
    %v2938 = vmax.f32 %v1896, 0.0
    %v2939 = vmax.f32 %v1898, 0.0
    %v2940 = vmax.f32 %v1902, 0.0
    %v2941 = vmax.f32 %v1904, 0.0
    %v2942 = vmax.f32 %v1908, 0.0
    %v2943 = vmax.f32 %v1910, 0.0
    %v2944 = vmax.f32 %v1914, 0.0
    %v2945 = vmax.f32 %v1916, 0.0
    %v2946 = vmax.f32 %v1920, 0.0
    %v2947 = vmax.f32 %v1922, 0.0
    %v2948 = vmax.f32 %v1926, 0.0
    %v2949 = vmax.f32 %v1928, 0.0
    %v2950 = vmax.f32 %v1932, 0.0
    %v2951 = vmax.f32 %v1934, 0.0
    %v2952 = vmax.f32 %v1938, 0.0
    %v2953 = vmax.f32 %v1940, 0.0
    %v2954 = vmax.f32 %v1944, 0.0
    %v2955 = vmax.f32 %v1946, 0.0
    %v2956 = vmax.f32 %v1950, 0.0
    %v2957 = vmax.f32 %v1952, 0.0
    %v2958 = vmax.f32 %v1956, 0.0
    %v2959 = vmax.f32 %v1958, 0.0
    %v2960 = vmax.f32 %v1962, 0.0
    %v2961 = vmax.f32 %v1964, 0.0
    %v2962 = vmax.f32 %v1968, 0.0
    %v2963 = vmax.f32 %v1970, 0.0
    %v2964 = vmax.f32 %v1974, 0.0
    %v2965 = vmax.f32 %v1976, 0.0
    %v2966 = vmax.f32 %v1980, 0.0
    %v2967 = vmax.f32 %v1982, 0.0
    %v2968 = vmax.f32 %v1986, 0.0
    %v2969 = vmax.f32 %v1988, 0.0
    %v2970 = vmax.f32 %v1992, 0.0
    %v2971 = vmax.f32 %v1994, 0.0
    %v2972 = vmax.f32 %v1998, 0.0
    %v2973 = vmax.f32 %v2000, 0.0
    %v2974 = vmax.f32 %v2004, 0.0
    %v2975 = vmax.f32 %v2006, 0.0
    %v2976 = vmax.f32 %v2010, 0.0
    %v2977 = vmax.f32 %v2012, 0.0
    %v2978 = vmax.f32 %v2016, 0.0
    %v2979 = vmax.f32 %v2018, 0.0
    %v2980 = vmax.f32 %v2022, 0.0
    %v2981 = vmax.f32 %v2024, 0.0
    %v2982 = vmax.f32 %v2028, 0.0
    %v2983 = vmax.f32 %v2030, 0.0
    %v2984 = vmax.f32 %v2034, 0.0
    %v2985 = vmax.f32 %v2036, 0.0
    %v2986 = vmax.f32 %v2040, 0.0
    %v2987 = vmax.f32 %v2042, 0.0
    %v2988 = vmax.f32 %v2046, 0.0
    %v2989 = vmax.f32 %v2048, 0.0
    %v2990 = vmax.f32 %v2052, 0.0
    %v2991 = vmax.f32 %v2054, 0.0
    %v2992 = vmax.f32 %v2058, 0.0
    %v2993 = vmax.f32 %v2060, 0.0
    %v2994 = vmax.f32 %v2064, 0.0
    %v2995 = vmax.f32 %v2066, 0.0
    %v2996 = vmax.f32 %v2070, 0.0
    %v2997 = vmax.f32 %v2072, 0.0
    %v2998 = vmax.f32 %v2076, 0.0
    %v2999 = vmax.f32 %v2078, 0.0
    %v3000 = vmax.f32 %v2082, 0.0
    %v3001 = vmax.f32 %v2084, 0.0
    %v3002 = vmax.f32 %v2088, 0.0
    %v3003 = vmax.f32 %v2090, 0.0
    %v3004 = vmax.f32 %v2094, 0.0
    %v3005 = vmax.f32 %v2096, 0.0
    %v3006 = vmax.f32 %v2100, 0.0
    %v3007 = vmax.f32 %v2102, 0.0
    %v3008 = vmax.f32 %v2106, 0.0
    %v3009 = vmax.f32 %v2108, 0.0
    %v3010 = vmax.f32 %v2112, 0.0
    %v3011 = vmax.f32 %v2114, 0.0
    %v3012 = vmax.f32 %v2118, 0.0
    %v3013 = vmax.f32 %v2120, 0.0
    %v3014 = vmax.f32 %v2124, 0.0
    %v3015 = vmax.f32 %v2126, 0.0
    %v3016 = vmax.f32 %v2130, 0.0
    %v3017 = vmax.f32 %v2132, 0.0
    %v3018 = vmax.f32 %v2136, 0.0
    %v3019 = vmax.f32 %v2138, 0.0
    %v3020 = vmax.f32 %v2142, 0.0
    %v3021 = vmax.f32 %v2144, 0.0
    %v3022 = vmax.f32 %v2148, 0.0
    %v3023 = vmax.f32 %v2150, 0.0
    %v3024 = vmax.f32 %v2154, 0.0
    %v3025 = vmax.f32 %v2156, 0.0
    %v3026 = vmax.f32 %v2160, 0.0
    %v3027 = vmax.f32 %v2162, 0.0
    %v3028 = vmax.f32 %v2166, 0.0
    %v3029 = vmax.f32 %v2168, 0.0
    %v3030 = vmax.f32 %v2172, 0.0
    %v3031 = vmax.f32 %v2174, 0.0
    %v3032 = vmax.f32 %v2178, 0.0
    %v3033 = vmax.f32 %v2180, 0.0
    %v3034 = vmax.f32 %v2184, 0.0
    %v3035 = vmax.f32 %v2186, 0.0
    %v3036 = vmax.f32 %v2190, 0.0
    %v3037 = vmax.f32 %v2192, 0.0
    %v3038 = vmax.f32 %v2196, 0.0
    %v3039 = vmax.f32 %v2198, 0.0
    %v3040 = vmax.f32 %v2202, 0.0
    %v3041 = vmax.f32 %v2204, 0.0
    %v3042 = vmax.f32 %v2208, 0.0
    %v3043 = vmax.f32 %v2210, 0.0
    %v3044 = vmax.f32 %v2214, 0.0
    %v3045 = vmax.f32 %v2216, 0.0
    %v3046 = vmax.f32 %v2220, 0.0
    %v3047 = vmax.f32 %v2222, 0.0
    %v3048 = vmax.f32 %v2226, 0.0
    %v3049 = vmax.f32 %v2228, 0.0
    %v3050 = vmax.f32 %v2232, 0.0
    %v3051 = vmax.f32 %v2234, 0.0
    %v3052 = vmax.f32 %v2238, 0.0
    %v3053 = vmax.f32 %v2240, 0.0
    %v3054 = vmax.f32 %v2244, 0.0
    %v3055 = vmax.f32 %v2246, 0.0
    %v3056 = vmax.f32 %v2250, 0.0
    %v3057 = vmax.f32 %v2252, 0.0
    %v3058 = vmax.f32 %v2256, 0.0
    %v3059 = vmax.f32 %v2258, 0.0
    %v3060 = vmax.f32 %v2262, 0.0
    %v3061 = vmax.f32 %v2264, 0.0
    %v3062 = vmax.f32 %v2268, 0.0
    %v3063 = vmax.f32 %v2270, 0.0
    %v3064 = vmax.f32 %v2274, 0.0
    %v3065 = vmax.f32 %v2276, 0.0
    %v3066 = vmax.f32 %v2280, 0.0
    %v3067 = vmax.f32 %v2282, 0.0
    %v3068 = vmax.f32 %v2286, 0.0
    %v3069 = vmax.f32 %v2288, 0.0
    %v3070 = vmax.f32 %v2292, 0.0
    %v3071 = vmax.f32 %v2294, 0.0
    %v3072 = vmax.f32 %v2298, 0.0
    %v3073 = vmax.f32 %v2300, 0.0
    %v3074 = vmax.f32 %v2304, 0.0
    %v3075 = vmax.f32 %v2306, 0.0
    %v3076 = vmax.f32 %v2310, 0.0
    %v3077 = vmax.f32 %v2312, 0.0
    %v3078 = vmax.f32 %v2316, 0.0
    %v3079 = vmax.f32 %v2318, 0.0
    %v3080 = vmax.f32 %v2322, 0.0
    %v3081 = vmax.f32 %v2324, 0.0
    %v3082 = vmax.f32 %v2328, 0.0
    %v3083 = vmax.f32 %v2330, 0.0
    %v3084 = vmax.f32 %v2334, 0.0
    %v3085 = vmax.f32 %v2336, 0.0
    %v3086 = vmax.f32 %v2340, 0.0
    %v3087 = vmax.f32 %v2342, 0.0
    %v3088 = vmax.f32 %v2346, 0.0
    %v3089 = vmax.f32 %v2348, 0.0
    %v3090 = vmax.f32 %v2352, 0.0
    %v3091 = vmax.f32 %v2354, 0.0
    %v3092 = vmax.f32 %v2358, 0.0
    %v3093 = vmax.f32 %v2360, 0.0
    %v3094 = vmax.f32 %v2364, 0.0
    %v3095 = vmax.f32 %v2366, 0.0
    %v3096 = vmax.f32 %v2370, 0.0
    %v3097 = vmax.f32 %v2372, 0.0
    %v3098 = vmax.f32 %v2376, 0.0
    %v3099 = vmax.f32 %v2378, 0.0
    %v3100 = vmax.f32 %v2382, 0.0
    %v3101 = vmax.f32 %v2384, 0.0
    %v3102 = vmax.f32 %v2388, 0.0
    %v3103 = vmax.f32 %v2390, 0.0
    %v3104 = vmax.f32 %v2394, 0.0
    %v3105 = vmax.f32 %v2396, 0.0
    %v3106 = vmax.f32 %v2400, 0.0
    %v3107 = vmax.f32 %v2402, 0.0
    %v3108 = vmax.f32 %v2406, 0.0
    %v3109 = vmax.f32 %v2408, 0.0
    %v3110 = vmax.f32 %v2412, 0.0
    %v3111 = vmax.f32 %v2414, 0.0
    %v3112 = vmax.f32 %v2418, 0.0
    %v3113 = vmax.f32 %v2420, 0.0
    %v3114 = vmax.f32 %v2424, 0.0
    %v3115 = vmax.f32 %v2426, 0.0
    %v3116 = vmax.f32 %v2430, 0.0
    %v3117 = vmax.f32 %v2432, 0.0
    %v3118 = vmax.f32 %v2436, 0.0
    %v3119 = vmax.f32 %v2438, 0.0
    %v3120 = vmax.f32 %v2442, 0.0
    %v3121 = vmax.f32 %v2444, 0.0
    %v3122 = vmax.f32 %v2448, 0.0
    %v3123 = vmax.f32 %v2450, 0.0
    %v3124 = vmax.f32 %v2454, 0.0
    %v3125 = vmax.f32 %v2456, 0.0
    %v3126 = vmax.f32 %v2460, 0.0
    %v3127 = vmax.f32 %v2462, 0.0
    %v3128 = vmax.f32 %v2466, 0.0
    %v3129 = vmax.f32 %v2468, 0.0
    %v3130 = vmax.f32 %v2472, 0.0
    %v3131 = vmax.f32 %v2474, 0.0
    %v3132 = vmax.f32 %v2478, 0.0
    %v3133 = vmax.f32 %v2480, 0.0
    %v3134 = vmax.f32 %v2484, 0.0
    %v3135 = vmax.f32 %v2486, 0.0
    %v3136 = vmax.f32 %v2490, 0.0
    %v3137 = vmax.f32 %v2492, 0.0
    %v3138 = vmax.f32 %v2496, 0.0
    %v3139 = vmax.f32 %v2498, 0.0
    %v3140 = vmax.f32 %v2502, 0.0
    %v3141 = vmax.f32 %v2504, 0.0
    %v3142 = vmax.f32 %v2508, 0.0
    %v3143 = vmax.f32 %v2510, 0.0
    %v3144 = vmax.f32 %v2514, 0.0
    %v3145 = vmax.f32 %v2516, 0.0
    %v3146 = vmax.f32 %v2520, 0.0
    %v3147 = vmax.f32 %v2522, 0.0
    %v3148 = vmax.f32 %v2526, 0.0
    %v3149 = vmax.f32 %v2528, 0.0
    %v3150 = vmax.f32 %v2532, 0.0
    %v3151 = vmax.f32 %v2534, 0.0
    %v3152 = vmax.f32 %v2538, 0.0
    %v3153 = vmax.f32 %v2540, 0.0
    %v3154 = vmax.f32 %v2544, 0.0
    %v3155 = vmax.f32 %v2546, 0.0
    %v3156 = vmax.f32 %v2550, 0.0
    %v3157 = vmax.f32 %v2552, 0.0
    %v3158 = vmax.f32 %v2556, 0.0
    %v3159 = vmax.f32 %v2558, 0.0
    %v3160 = vmax.f32 %v2562, 0.0
    %v3161 = vmax.f32 %v2564, 0.0
    %v3162 = vmax.f32 %v2568, 0.0
    %v3163 = vmax.f32 %v2570, 0.0
    %v3164 = vmax.f32 %v2574, 0.0
    %v3165 = vmax.f32 %v2576, 0.0
    %v3166 = vmax.f32 %v2580, 0.0
    %v3167 = vmax.f32 %v2582, 0.0
    %v3168 = vmax.f32 %v2586, 0.0
    %v3169 = vmax.f32 %v2588, 0.0
    %v3170 = vmax.f32 %v2592, 0.0
    %v3171 = vmax.f32 %v2594, 0.0
    %v3172 = vmax.f32 %v2598, 0.0
    %v3173 = vmax.f32 %v2600, 0.0
    %v3174 = vmax.f32 %v2604, 0.0
    %v3175 = vmax.f32 %v2606, 0.0
    %v3176 = vmax.f32 %v2610, 0.0
    %v3177 = vmax.f32 %v2612, 0.0
    %v3178 = vmax.f32 %v2616, 0.0
    %v3179 = vmax.f32 %v2618, 0.0
    %v3180 = vmax.f32 %v2622, 0.0
    %v3181 = vmax.f32 %v2624, 0.0
    %v3182 = vmax.f32 %v2628, 0.0
    %v3183 = vmax.f32 %v2630, 0.0
    %v3184 = vmax.f32 %v2634, 0.0
    %v3185 = vmax.f32 %v2636, 0.0
    %v3186 = vmax.f32 %v2640, 0.0
    %v3187 = vmax.f32 %v2642, 0.0
    %v3188 = vmax.f32 %v2646, 0.0
    %v3189 = vmax.f32 %v2648, 0.0
    %v3190 = vmax.f32 %v2652, 0.0
    %v3191 = vmax.f32 %v2654, 0.0
    %v3192 = vmax.f32 %v2658, 0.0
    %v3193 = vmax.f32 %v2660, 0.0
    %v3194 = vmax.f32 %v2664, 0.0
    %v3195 = vmax.f32 %v2666, 0.0
    %v3196 = vmax.f32 %v2670, 0.0
    %v3197 = vmax.f32 %v2672, 0.0
    %v3198 = vmax.f32 %v2676, 0.0
    %v3199 = vmax.f32 %v2678, 0.0
    %v3200 = vmax.f32 %v2682, 0.0
    %v3201 = vmax.f32 %v2684, 0.0
    %v3202 = vmax.f32 %v2688, 0.0
    %v3203 = vmax.f32 %v2690, 0.0
    %v3204 = vld [vmem:[%s1] sm:$0xff]
    %v3205 = vld [vmem:[%s1 + $0x8] sm:$0xff]
    %v3206 = vld [vmem:[%s1 + $0x10] sm:$0xff]
    %v3207 = vld [vmem:[%s1 + $0x18] sm:$0xff]
    %v3208 = vld [vmem:[%s1 + $0x20] sm:$0xff]
    %v3209 = vld [vmem:[%s1 + $0x28] sm:$0xff]
    %v3210 = vld [vmem:[%s1 + $0x30] sm:$0xff]
    %v3211 = vld [vmem:[%s1 + $0x38] sm:$0xff]
    %v3212 = vld [vmem:[%s1 + $0x40] sm:$0xff]
    %v3213 = vld [vmem:[%s1 + $0x48] sm:$0xff]
    %v3214 = vld [vmem:[%s1 + $0x50] sm:$0xff]
    %v3215 = vld [vmem:[%s1 + $0x58] sm:$0xff]
    %v3216 = vld [vmem:[%s1 + $0x60] sm:$0xff]
    %v3217 = vld [vmem:[%s1 + $0x68] sm:$0xff]
    %v3218 = vld [vmem:[%s1 + $0x70] sm:$0xff]
    %v3219 = vld [vmem:[%s1 + $0x78] sm:$0xff]
    %3220 = vmatprep.subr.mxu0 %v2723
    %3221 = vmatpush1.msra.mxu0 %v2722
    %3222 = vmatprep.subr.mxu0 %v2721
    %3223 = vmatpush1.msra.mxu0 %v2720
    %3224 = vmatprep.subr.mxu0 %v2719
    %3225 = vmatpush1.msra.mxu0 %v2718
    %3226 = vmatprep.subr.mxu0 %v2717
    %3227 = vmatpush1.msra.mxu0 %v2716
    %3228 = vmatprep.subr.mxu0 %v2715
    %3229 = vmatpush1.msra.mxu0 %v2714
    %3230 = vmatprep.subr.mxu0 %v2713
    %3231 = vmatpush1.msra.mxu0 %v2712
    %3232 = vmatprep.subr.mxu0 %v2711
    %3233 = vmatpush1.msra.mxu0 %v2710
    %3234 = vmatprep.subr.mxu0 %v2709
    %3235 = vmatpush1.msra.mxu0 %v2708
    %3236 = vmatprep.subr.mxu0 %v2707
    %3237 = vmatpush1.msra.mxu0 %v2706
    %3238 = vmatprep.subr.mxu0 %v2705
    %3239 = vmatpush1.msra.mxu0 %v2704
    %3240 = vmatprep.subr.mxu0 %v2703
    %3241 = vmatpush1.msra.mxu0 %v2702
    %3242 = vmatprep.subr.mxu0 %v2701
    %3243 = vmatpush1.msra.mxu0 %v2700
    %3244 = vmatprep.subr.mxu0 %v2699
    %3245 = vmatpush1.msra.mxu0 %v2698
    %3246 = vmatprep.subr.mxu0 %v2697
    %3247 = vmatpush1.msra.mxu0 %v2696
    %3248 = vmatprep.subr.mxu0 %v2695
    %3249 = vmatpush1.msra.mxu0 %v2694
    %3250 = vmatprep.subr.mxu0 %v2693
    %3251 = vmatpush1.msra.mxu0 %v2692
    %3252 = vmatprep.subr.mxu0 %v2755
    %3253 = vmatpush2.msra.mxu0 %v2754
    %3254 = vmatprep.subr.mxu0 %v2753
    %3255 = vmatpush2.msra.mxu0 %v2752
    %3256 = vmatprep.subr.mxu0 %v2751
    %3257 = vmatpush2.msra.mxu0 %v2750
    %3258 = vmatprep.subr.mxu0 %v2749
    %3259 = vmatpush2.msra.mxu0 %v2748
    %3260 = vmatprep.subr.mxu0 %v2747
    %3261 = vmatpush2.msra.mxu0 %v2746
    %3262 = vmatprep.subr.mxu0 %v2745
    %3263 = vmatpush2.msra.mxu0 %v2744
    %3264 = vmatprep.subr.mxu0 %v2743
    %3265 = vmatpush2.msra.mxu0 %v2742
    %3266 = vmatprep.subr.mxu0 %v2741
    %3267 = vmatpush2.msra.mxu0 %v2740
    %3268 = vmatprep.subr.mxu0 %v2739
    %3269 = vmatpush2.msra.mxu0 %v2738
    %3270 = vmatprep.subr.mxu0 %v2737
    %3271 = vmatpush2.msra.mxu0 %v2736
    %3272 = vmatprep.subr.mxu0 %v2735
    %3273 = vmatpush2.msra.mxu0 %v2734
    %3274 = vmatprep.subr.mxu0 %v2733
    %3275 = vmatpush2.msra.mxu0 %v2732
    %3276 = vmatprep.subr.mxu0 %v2731
    %3277 = vmatpush2.msra.mxu0 %v2730
    %3278 = vmatprep.subr.mxu0 %v2729
    %3279 = vmatpush2.msra.mxu0 %v2728
    %3280 = vmatprep.subr.mxu0 %v2727
    %3281 = vmatpush2.msra.mxu0 %v2726
    %3282 = vmatprep.subr.mxu0 %v2725
    %3283 = vmatpush2.msra.mxu0 %v2724
    %3284 = vmatprep.mubr.f32.mxu0 %v3205
    %3285 = vmatmul.mubr.f32.gmra.mxu0 %v3204
    %v3286 = vpop.f32.mrf.mxu0
    %v3287 = vadd.f32 0.0, %v3286
    %v3288 = vpop.f32.mrf.mxu0
    %v3289 = vadd.f32 0.0, %v3288
    %3290 = vdwg.mxu0
    %3291 = vmatprep.subr.mxu0 %v2787
    %3292 = vmatpush1.msra.mxu0 %v2786
    %3293 = vmatprep.subr.mxu0 %v2785
    %3294 = vmatpush1.msra.mxu0 %v2784
    %3295 = vmatprep.subr.mxu0 %v2783
    %3296 = vmatpush1.msra.mxu0 %v2782
    %3297 = vmatprep.subr.mxu0 %v2781
    %3298 = vmatpush1.msra.mxu0 %v2780
    %3299 = vmatprep.subr.mxu0 %v2779
    %3300 = vmatpush1.msra.mxu0 %v2778
    %3301 = vmatprep.subr.mxu0 %v2777
    %3302 = vmatpush1.msra.mxu0 %v2776
    %3303 = vmatprep.subr.mxu0 %v2775
    %3304 = vmatpush1.msra.mxu0 %v2774
    %3305 = vmatprep.subr.mxu0 %v2773
    %3306 = vmatpush1.msra.mxu0 %v2772
    %3307 = vmatprep.subr.mxu0 %v2771
    %3308 = vmatpush1.msra.mxu0 %v2770
    %3309 = vmatprep.subr.mxu0 %v2769
    %3310 = vmatpush1.msra.mxu0 %v2768
    %3311 = vmatprep.subr.mxu0 %v2767
    %3312 = vmatpush1.msra.mxu0 %v2766
    %3313 = vmatprep.subr.mxu0 %v2765
    %3314 = vmatpush1.msra.mxu0 %v2764
    %3315 = vmatprep.subr.mxu0 %v2763
    %3316 = vmatpush1.msra.mxu0 %v2762
    %3317 = vmatprep.subr.mxu0 %v2761
    %3318 = vmatpush1.msra.mxu0 %v2760
    %3319 = vmatprep.subr.mxu0 %v2759
    %3320 = vmatpush1.msra.mxu0 %v2758
    %3321 = vmatprep.subr.mxu0 %v2757
    %3322 = vmatpush1.msra.mxu0 %v2756
    %3323 = vmatprep.subr.mxu0 %v2819
    %3324 = vmatpush2.msra.mxu0 %v2818
    %3325 = vmatprep.subr.mxu0 %v2817
    %3326 = vmatpush2.msra.mxu0 %v2816
    %3327 = vmatprep.subr.mxu0 %v2815
    %3328 = vmatpush2.msra.mxu0 %v2814
    %3329 = vmatprep.subr.mxu0 %v2813
    %3330 = vmatpush2.msra.mxu0 %v2812
    %3331 = vmatprep.subr.mxu0 %v2811
    %3332 = vmatpush2.msra.mxu0 %v2810
    %3333 = vmatprep.subr.mxu0 %v2809
    %3334 = vmatpush2.msra.mxu0 %v2808
    %3335 = vmatprep.subr.mxu0 %v2807
    %3336 = vmatpush2.msra.mxu0 %v2806
    %3337 = vmatprep.subr.mxu0 %v2805
    %3338 = vmatpush2.msra.mxu0 %v2804
    %3339 = vmatprep.subr.mxu0 %v2803
    %3340 = vmatpush2.msra.mxu0 %v2802
    %3341 = vmatprep.subr.mxu0 %v2801
    %3342 = vmatpush2.msra.mxu0 %v2800
    %3343 = vmatprep.subr.mxu0 %v2799
    %3344 = vmatpush2.msra.mxu0 %v2798
    %3345 = vmatprep.subr.mxu0 %v2797
    %3346 = vmatpush2.msra.mxu0 %v2796
    %3347 = vmatprep.subr.mxu0 %v2795
    %3348 = vmatpush2.msra.mxu0 %v2794
    %3349 = vmatprep.subr.mxu0 %v2793
    %3350 = vmatpush2.msra.mxu0 %v2792
    %3351 = vmatprep.subr.mxu0 %v2791
    %3352 = vmatpush2.msra.mxu0 %v2790
    %3353 = vmatprep.subr.mxu0 %v2789
    %3354 = vmatpush2.msra.mxu0 %v2788
    %3355 = vmatprep.mubr.f32.mxu0 %v3207
    %3356 = vmatmul.mubr.f32.gmra.mxu0 %v3206
    %v3357 = vpop.f32.mrf.mxu0
    %v3358 = vadd.f32 %v3287, %v3357
    %v3359 = vpop.f32.mrf.mxu0
    %v3360 = vadd.f32 %v3289, %v3359
    %3361 = vdwg.mxu0
    %3362 = vmatprep.subr.mxu0 %v2851
    %3363 = vmatpush1.msra.mxu0 %v2850
    %3364 = vmatprep.subr.mxu0 %v2849
    %3365 = vmatpush1.msra.mxu0 %v2848
    %3366 = vmatprep.subr.mxu0 %v2847
    %3367 = vmatpush1.msra.mxu0 %v2846
    %3368 = vmatprep.subr.mxu0 %v2845
    %3369 = vmatpush1.msra.mxu0 %v2844
    %3370 = vmatprep.subr.mxu0 %v2843
    %3371 = vmatpush1.msra.mxu0 %v2842
    %3372 = vmatprep.subr.mxu0 %v2841
    %3373 = vmatpush1.msra.mxu0 %v2840
    %3374 = vmatprep.subr.mxu0 %v2839
    %3375 = vmatpush1.msra.mxu0 %v2838
    %3376 = vmatprep.subr.mxu0 %v2837
    %3377 = vmatpush1.msra.mxu0 %v2836
    %3378 = vmatprep.subr.mxu0 %v2835
    %3379 = vmatpush1.msra.mxu0 %v2834
    %3380 = vmatprep.subr.mxu0 %v2833
    %3381 = vmatpush1.msra.mxu0 %v2832
    %3382 = vmatprep.subr.mxu0 %v2831
    %3383 = vmatpush1.msra.mxu0 %v2830
    %3384 = vmatprep.subr.mxu0 %v2829
    %3385 = vmatpush1.msra.mxu0 %v2828
    %3386 = vmatprep.subr.mxu0 %v2827
    %3387 = vmatpush1.msra.mxu0 %v2826
    %3388 = vmatprep.subr.mxu0 %v2825
    %3389 = vmatpush1.msra.mxu0 %v2824
    %3390 = vmatprep.subr.mxu0 %v2823
    %3391 = vmatpush1.msra.mxu0 %v2822
    %3392 = vmatprep.subr.mxu0 %v2821
    %3393 = vmatpush1.msra.mxu0 %v2820
    %3394 = vmatprep.subr.mxu0 %v2883
    %3395 = vmatpush2.msra.mxu0 %v2882
    %3396 = vmatprep.subr.mxu0 %v2881
    %3397 = vmatpush2.msra.mxu0 %v2880
    %3398 = vmatprep.subr.mxu0 %v2879
    %3399 = vmatpush2.msra.mxu0 %v2878
    %3400 = vmatprep.subr.mxu0 %v2877
    %3401 = vmatpush2.msra.mxu0 %v2876
    %3402 = vmatprep.subr.mxu0 %v2875
    %3403 = vmatpush2.msra.mxu0 %v2874
    %3404 = vmatprep.subr.mxu0 %v2873
    %3405 = vmatpush2.msra.mxu0 %v2872
    %3406 = vmatprep.subr.mxu0 %v2871
    %3407 = vmatpush2.msra.mxu0 %v2870
    %3408 = vmatprep.subr.mxu0 %v2869
    %3409 = vmatpush2.msra.mxu0 %v2868
    %3410 = vmatprep.subr.mxu0 %v2867
    %3411 = vmatpush2.msra.mxu0 %v2866
    %3412 = vmatprep.subr.mxu0 %v2865
    %3413 = vmatpush2.msra.mxu0 %v2864
    %3414 = vmatprep.subr.mxu0 %v2863
    %3415 = vmatpush2.msra.mxu0 %v2862
    %3416 = vmatprep.subr.mxu0 %v2861
    %3417 = vmatpush2.msra.mxu0 %v2860
    %3418 = vmatprep.subr.mxu0 %v2859
    %3419 = vmatpush2.msra.mxu0 %v2858
    %3420 = vmatprep.subr.mxu0 %v2857
    %3421 = vmatpush2.msra.mxu0 %v2856
    %3422 = vmatprep.subr.mxu0 %v2855
    %3423 = vmatpush2.msra.mxu0 %v2854
    %3424 = vmatprep.subr.mxu0 %v2853
    %3425 = vmatpush2.msra.mxu0 %v2852
    %3426 = vmatprep.mubr.f32.mxu0 %v3209
    %3427 = vmatmul.mubr.f32.gmra.mxu0 %v3208
    %v3428 = vpop.f32.mrf.mxu0
    %v3429 = vadd.f32 %v3358, %v3428
    %v3430 = vpop.f32.mrf.mxu0
    %v3431 = vadd.f32 %v3360, %v3430
    %3432 = vdwg.mxu0
    %3433 = vmatprep.subr.mxu0 %v2915
    %3434 = vmatpush1.msra.mxu0 %v2914
    %3435 = vmatprep.subr.mxu0 %v2913
    %3436 = vmatpush1.msra.mxu0 %v2912
    %3437 = vmatprep.subr.mxu0 %v2911
    %3438 = vmatpush1.msra.mxu0 %v2910
    %3439 = vmatprep.subr.mxu0 %v2909
    %3440 = vmatpush1.msra.mxu0 %v2908
    %3441 = vmatprep.subr.mxu0 %v2907
    %3442 = vmatpush1.msra.mxu0 %v2906
    %3443 = vmatprep.subr.mxu0 %v2905
    %3444 = vmatpush1.msra.mxu0 %v2904
    %3445 = vmatprep.subr.mxu0 %v2903
    %3446 = vmatpush1.msra.mxu0 %v2902
    %3447 = vmatprep.subr.mxu0 %v2901
    %3448 = vmatpush1.msra.mxu0 %v2900
    %3449 = vmatprep.subr.mxu0 %v2899
    %3450 = vmatpush1.msra.mxu0 %v2898
    %3451 = vmatprep.subr.mxu0 %v2897
    %3452 = vmatpush1.msra.mxu0 %v2896
    %3453 = vmatprep.subr.mxu0 %v2895
    %3454 = vmatpush1.msra.mxu0 %v2894
    %3455 = vmatprep.subr.mxu0 %v2893
    %3456 = vmatpush1.msra.mxu0 %v2892
    %3457 = vmatprep.subr.mxu0 %v2891
    %3458 = vmatpush1.msra.mxu0 %v2890
    %3459 = vmatprep.subr.mxu0 %v2889
    %3460 = vmatpush1.msra.mxu0 %v2888
    %3461 = vmatprep.subr.mxu0 %v2887
    %3462 = vmatpush1.msra.mxu0 %v2886
    %3463 = vmatprep.subr.mxu0 %v2885
    %3464 = vmatpush1.msra.mxu0 %v2884
    %3465 = vmatprep.subr.mxu0 %v2947
    %3466 = vmatpush2.msra.mxu0 %v2946
    %3467 = vmatprep.subr.mxu0 %v2945
    %3468 = vmatpush2.msra.mxu0 %v2944
    %3469 = vmatprep.subr.mxu0 %v2943
    %3470 = vmatpush2.msra.mxu0 %v2942
    %3471 = vmatprep.subr.mxu0 %v2941
    %3472 = vmatpush2.msra.mxu0 %v2940
    %3473 = vmatprep.subr.mxu0 %v2939
    %3474 = vmatpush2.msra.mxu0 %v2938
    %3475 = vmatprep.subr.mxu0 %v2937
    %3476 = vmatpush2.msra.mxu0 %v2936
    %3477 = vmatprep.subr.mxu0 %v2935
    %3478 = vmatpush2.msra.mxu0 %v2934
    %3479 = vmatprep.subr.mxu0 %v2933
    %3480 = vmatpush2.msra.mxu0 %v2932
    %3481 = vmatprep.subr.mxu0 %v2931
    %3482 = vmatpush2.msra.mxu0 %v2930
    %3483 = vmatprep.subr.mxu0 %v2929
    %3484 = vmatpush2.msra.mxu0 %v2928
    %3485 = vmatprep.subr.mxu0 %v2927
    %3486 = vmatpush2.msra.mxu0 %v2926
    %3487 = vmatprep.subr.mxu0 %v2925
    %3488 = vmatpush2.msra.mxu0 %v2924
    %3489 = vmatprep.subr.mxu0 %v2923
    %3490 = vmatpush2.msra.mxu0 %v2922
    %3491 = vmatprep.subr.mxu0 %v2921
    %3492 = vmatpush2.msra.mxu0 %v2920
    %3493 = vmatprep.subr.mxu0 %v2919
    %3494 = vmatpush2.msra.mxu0 %v2918
    %3495 = vmatprep.subr.mxu0 %v2917
    %3496 = vmatpush2.msra.mxu0 %v2916
    %3497 = vmatprep.mubr.f32.mxu0 %v3211
    %3498 = vmatmul.mubr.f32.gmra.mxu0 %v3210
    %v3499 = vpop.f32.mrf.mxu0
    %v3500 = vadd.f32 %v3429, %v3499
    %v3501 = vpop.f32.mrf.mxu0
    %v3502 = vadd.f32 %v3431, %v3501
    %3503 = vdwg.mxu0
    %3504 = vmatprep.subr.mxu0 %v2979
    %3505 = vmatpush1.msra.mxu0 %v2978
    %3506 = vmatprep.subr.mxu0 %v2977
    %3507 = vmatpush1.msra.mxu0 %v2976
    %3508 = vmatprep.subr.mxu0 %v2975
    %3509 = vmatpush1.msra.mxu0 %v2974
    %3510 = vmatprep.subr.mxu0 %v2973
    %3511 = vmatpush1.msra.mxu0 %v2972
    %3512 = vmatprep.subr.mxu0 %v2971
    %3513 = vmatpush1.msra.mxu0 %v2970
    %3514 = vmatprep.subr.mxu0 %v2969
    %3515 = vmatpush1.msra.mxu0 %v2968
    %3516 = vmatprep.subr.mxu0 %v2967
    %3517 = vmatpush1.msra.mxu0 %v2966
    %3518 = vmatprep.subr.mxu0 %v2965
    %3519 = vmatpush1.msra.mxu0 %v2964
    %3520 = vmatprep.subr.mxu0 %v2963
    %3521 = vmatpush1.msra.mxu0 %v2962
    %3522 = vmatprep.subr.mxu0 %v2961
    %3523 = vmatpush1.msra.mxu0 %v2960
    %3524 = vmatprep.subr.mxu0 %v2959
    %3525 = vmatpush1.msra.mxu0 %v2958
    %3526 = vmatprep.subr.mxu0 %v2957
    %3527 = vmatpush1.msra.mxu0 %v2956
    %3528 = vmatprep.subr.mxu0 %v2955
    %3529 = vmatpush1.msra.mxu0 %v2954
    %3530 = vmatprep.subr.mxu0 %v2953
    %3531 = vmatpush1.msra.mxu0 %v2952
    %3532 = vmatprep.subr.mxu0 %v2951
    %3533 = vmatpush1.msra.mxu0 %v2950
    %3534 = vmatprep.subr.mxu0 %v2949
    %3535 = vmatpush1.msra.mxu0 %v2948
    %3536 = vmatprep.subr.mxu0 %v3011
    %3537 = vmatpush2.msra.mxu0 %v3010
    %3538 = vmatprep.subr.mxu0 %v3009
    %3539 = vmatpush2.msra.mxu0 %v3008
    %3540 = vmatprep.subr.mxu0 %v3007
    %3541 = vmatpush2.msra.mxu0 %v3006
    %3542 = vmatprep.subr.mxu0 %v3005
    %3543 = vmatpush2.msra.mxu0 %v3004
    %3544 = vmatprep.subr.mxu0 %v3003
    %3545 = vmatpush2.msra.mxu0 %v3002
    %3546 = vmatprep.subr.mxu0 %v3001
    %3547 = vmatpush2.msra.mxu0 %v3000
    %3548 = vmatprep.subr.mxu0 %v2999
    %3549 = vmatpush2.msra.mxu0 %v2998
    %3550 = vmatprep.subr.mxu0 %v2997
    %3551 = vmatpush2.msra.mxu0 %v2996
    %3552 = vmatprep.subr.mxu0 %v2995
    %3553 = vmatpush2.msra.mxu0 %v2994
    %3554 = vmatprep.subr.mxu0 %v2993
    %3555 = vmatpush2.msra.mxu0 %v2992
    %3556 = vmatprep.subr.mxu0 %v2991
    %3557 = vmatpush2.msra.mxu0 %v2990
    %3558 = vmatprep.subr.mxu0 %v2989
    %3559 = vmatpush2.msra.mxu0 %v2988
    %3560 = vmatprep.subr.mxu0 %v2987
    %3561 = vmatpush2.msra.mxu0 %v2986
    %3562 = vmatprep.subr.mxu0 %v2985
    %3563 = vmatpush2.msra.mxu0 %v2984
    %3564 = vmatprep.subr.mxu0 %v2983
    %3565 = vmatpush2.msra.mxu0 %v2982
    %3566 = vmatprep.subr.mxu0 %v2981
    %3567 = vmatpush2.msra.mxu0 %v2980
    %3568 = vmatprep.mubr.f32.mxu0 %v3213
    %3569 = vmatmul.mubr.f32.gmra.mxu0 %v3212
    %v3570 = vpop.f32.mrf.mxu0
    %v3571 = vadd.f32 %v3500, %v3570
    %v3572 = vpop.f32.mrf.mxu0
    %v3573 = vadd.f32 %v3502, %v3572
    %3574 = vdwg.mxu0
    %3575 = vmatprep.subr.mxu0 %v3043
    %3576 = vmatpush1.msra.mxu0 %v3042
    %3577 = vmatprep.subr.mxu0 %v3041
    %3578 = vmatpush1.msra.mxu0 %v3040
    %3579 = vmatprep.subr.mxu0 %v3039
    %3580 = vmatpush1.msra.mxu0 %v3038
    %3581 = vmatprep.subr.mxu0 %v3037
    %3582 = vmatpush1.msra.mxu0 %v3036
    %3583 = vmatprep.subr.mxu0 %v3035
    %3584 = vmatpush1.msra.mxu0 %v3034
    %3585 = vmatprep.subr.mxu0 %v3033
    %3586 = vmatpush1.msra.mxu0 %v3032
    %3587 = vmatprep.subr.mxu0 %v3031
    %3588 = vmatpush1.msra.mxu0 %v3030
    %3589 = vmatprep.subr.mxu0 %v3029
    %3590 = vmatpush1.msra.mxu0 %v3028
    %3591 = vmatprep.subr.mxu0 %v3027
    %3592 = vmatpush1.msra.mxu0 %v3026
    %3593 = vmatprep.subr.mxu0 %v3025
    %3594 = vmatpush1.msra.mxu0 %v3024
    %3595 = vmatprep.subr.mxu0 %v3023
    %3596 = vmatpush1.msra.mxu0 %v3022
    %3597 = vmatprep.subr.mxu0 %v3021
    %3598 = vmatpush1.msra.mxu0 %v3020
    %3599 = vmatprep.subr.mxu0 %v3019
    %3600 = vmatpush1.msra.mxu0 %v3018
    %3601 = vmatprep.subr.mxu0 %v3017
    %3602 = vmatpush1.msra.mxu0 %v3016
    %3603 = vmatprep.subr.mxu0 %v3015
    %3604 = vmatpush1.msra.mxu0 %v3014
    %3605 = vmatprep.subr.mxu0 %v3013
    %3606 = vmatpush1.msra.mxu0 %v3012
    %3607 = vmatprep.subr.mxu0 %v3075
    %3608 = vmatpush2.msra.mxu0 %v3074
    %3609 = vmatprep.subr.mxu0 %v3073
    %3610 = vmatpush2.msra.mxu0 %v3072
    %3611 = vmatprep.subr.mxu0 %v3071
    %3612 = vmatpush2.msra.mxu0 %v3070
    %3613 = vmatprep.subr.mxu0 %v3069
    %3614 = vmatpush2.msra.mxu0 %v3068
    %3615 = vmatprep.subr.mxu0 %v3067
    %3616 = vmatpush2.msra.mxu0 %v3066
    %3617 = vmatprep.subr.mxu0 %v3065
    %3618 = vmatpush2.msra.mxu0 %v3064
    %3619 = vmatprep.subr.mxu0 %v3063
    %3620 = vmatpush2.msra.mxu0 %v3062
    %3621 = vmatprep.subr.mxu0 %v3061
    %3622 = vmatpush2.msra.mxu0 %v3060
    %3623 = vmatprep.subr.mxu0 %v3059
    %3624 = vmatpush2.msra.mxu0 %v3058
    %3625 = vmatprep.subr.mxu0 %v3057
    %3626 = vmatpush2.msra.mxu0 %v3056
    %3627 = vmatprep.subr.mxu0 %v3055
    %3628 = vmatpush2.msra.mxu0 %v3054
    %3629 = vmatprep.subr.mxu0 %v3053
    %3630 = vmatpush2.msra.mxu0 %v3052
    %3631 = vmatprep.subr.mxu0 %v3051
    %3632 = vmatpush2.msra.mxu0 %v3050
    %3633 = vmatprep.subr.mxu0 %v3049
    %3634 = vmatpush2.msra.mxu0 %v3048
    %3635 = vmatprep.subr.mxu0 %v3047
    %3636 = vmatpush2.msra.mxu0 %v3046
    %3637 = vmatprep.subr.mxu0 %v3045
    %3638 = vmatpush2.msra.mxu0 %v3044
    %3639 = vmatprep.mubr.f32.mxu0 %v3215
    %3640 = vmatmul.mubr.f32.gmra.mxu0 %v3214
    %v3641 = vpop.f32.mrf.mxu0
    %v3642 = vadd.f32 %v3571, %v3641
    %v3643 = vpop.f32.mrf.mxu0
    %v3644 = vadd.f32 %v3573, %v3643
    %3645 = vdwg.mxu0
    %3646 = vmatprep.subr.mxu0 %v3107
    %3647 = vmatpush1.msra.mxu0 %v3106
    %3648 = vmatprep.subr.mxu0 %v3105
    %3649 = vmatpush1.msra.mxu0 %v3104
    %3650 = vmatprep.subr.mxu0 %v3103
    %3651 = vmatpush1.msra.mxu0 %v3102
    %3652 = vmatprep.subr.mxu0 %v3101
    %3653 = vmatpush1.msra.mxu0 %v3100
    %3654 = vmatprep.subr.mxu0 %v3099
    %3655 = vmatpush1.msra.mxu0 %v3098
    %3656 = vmatprep.subr.mxu0 %v3097
    %3657 = vmatpush1.msra.mxu0 %v3096
    %3658 = vmatprep.subr.mxu0 %v3095
    %3659 = vmatpush1.msra.mxu0 %v3094
    %3660 = vmatprep.subr.mxu0 %v3093
    %3661 = vmatpush1.msra.mxu0 %v3092
    %3662 = vmatprep.subr.mxu0 %v3091
    %3663 = vmatpush1.msra.mxu0 %v3090
    %3664 = vmatprep.subr.mxu0 %v3089
    %3665 = vmatpush1.msra.mxu0 %v3088
    %3666 = vmatprep.subr.mxu0 %v3087
    %3667 = vmatpush1.msra.mxu0 %v3086
    %3668 = vmatprep.subr.mxu0 %v3085
    %3669 = vmatpush1.msra.mxu0 %v3084
    %3670 = vmatprep.subr.mxu0 %v3083
    %3671 = vmatpush1.msra.mxu0 %v3082
    %3672 = vmatprep.subr.mxu0 %v3081
    %3673 = vmatpush1.msra.mxu0 %v3080
    %3674 = vmatprep.subr.mxu0 %v3079
    %3675 = vmatpush1.msra.mxu0 %v3078
    %3676 = vmatprep.subr.mxu0 %v3077
    %3677 = vmatpush1.msra.mxu0 %v3076
    %3678 = vmatprep.subr.mxu0 %v3139
    %3679 = vmatpush2.msra.mxu0 %v3138
    %3680 = vmatprep.subr.mxu0 %v3137
    %3681 = vmatpush2.msra.mxu0 %v3136
    %3682 = vmatprep.subr.mxu0 %v3135
    %3683 = vmatpush2.msra.mxu0 %v3134
    %3684 = vmatprep.subr.mxu0 %v3133
    %3685 = vmatpush2.msra.mxu0 %v3132
    %3686 = vmatprep.subr.mxu0 %v3131
    %3687 = vmatpush2.msra.mxu0 %v3130
    %3688 = vmatprep.subr.mxu0 %v3129
    %3689 = vmatpush2.msra.mxu0 %v3128
    %3690 = vmatprep.subr.mxu0 %v3127
    %3691 = vmatpush2.msra.mxu0 %v3126
    %3692 = vmatprep.subr.mxu0 %v3125
    %3693 = vmatpush2.msra.mxu0 %v3124
    %3694 = vmatprep.subr.mxu0 %v3123
    %3695 = vmatpush2.msra.mxu0 %v3122
    %3696 = vmatprep.subr.mxu0 %v3121
    %3697 = vmatpush2.msra.mxu0 %v3120
    %3698 = vmatprep.subr.mxu0 %v3119
    %3699 = vmatpush2.msra.mxu0 %v3118
    %3700 = vmatprep.subr.mxu0 %v3117
    %3701 = vmatpush2.msra.mxu0 %v3116
    %3702 = vmatprep.subr.mxu0 %v3115
    %3703 = vmatpush2.msra.mxu0 %v3114
    %3704 = vmatprep.subr.mxu0 %v3113
    %3705 = vmatpush2.msra.mxu0 %v3112
    %3706 = vmatprep.subr.mxu0 %v3111
    %3707 = vmatpush2.msra.mxu0 %v3110
    %3708 = vmatprep.subr.mxu0 %v3109
    %3709 = vmatpush2.msra.mxu0 %v3108
    %3710 = vmatprep.mubr.f32.mxu0 %v3217
    %3711 = vmatmul.mubr.f32.gmra.mxu0 %v3216
    %v3712 = vpop.f32.mrf.mxu0
    %v3713 = vadd.f32 %v3642, %v3712
    %v3714 = vpop.f32.mrf.mxu0
    %v3715 = vadd.f32 %v3644, %v3714
    %3716 = vdwg.mxu0
    %3717 = vmatprep.subr.mxu0 %v3171
    %3718 = vmatpush1.msra.mxu0 %v3170
    %3719 = vmatprep.subr.mxu0 %v3169
    %3720 = vmatpush1.msra.mxu0 %v3168
    %3721 = vmatprep.subr.mxu0 %v3167
    %3722 = vmatpush1.msra.mxu0 %v3166
    %3723 = vmatprep.subr.mxu0 %v3165
    %3724 = vmatpush1.msra.mxu0 %v3164
    %3725 = vmatprep.subr.mxu0 %v3163
    %3726 = vmatpush1.msra.mxu0 %v3162
    %3727 = vmatprep.subr.mxu0 %v3161
    %3728 = vmatpush1.msra.mxu0 %v3160
    %3729 = vmatprep.subr.mxu0 %v3159
    %3730 = vmatpush1.msra.mxu0 %v3158
    %3731 = vmatprep.subr.mxu0 %v3157
    %3732 = vmatpush1.msra.mxu0 %v3156
    %3733 = vmatprep.subr.mxu0 %v3155
    %3734 = vmatpush1.msra.mxu0 %v3154
    %3735 = vmatprep.subr.mxu0 %v3153
    %3736 = vmatpush1.msra.mxu0 %v3152
    %3737 = vmatprep.subr.mxu0 %v3151
    %3738 = vmatpush1.msra.mxu0 %v3150
    %3739 = vmatprep.subr.mxu0 %v3149
    %3740 = vmatpush1.msra.mxu0 %v3148
    %3741 = vmatprep.subr.mxu0 %v3147
    %3742 = vmatpush1.msra.mxu0 %v3146
    %3743 = vmatprep.subr.mxu0 %v3145
    %3744 = vmatpush1.msra.mxu0 %v3144
    %3745 = vmatprep.subr.mxu0 %v3143
    %3746 = vmatpush1.msra.mxu0 %v3142
    %3747 = vmatprep.subr.mxu0 %v3141
    %3748 = vmatpush1.msra.mxu0 %v3140
    %3749 = vmatprep.subr.mxu0 %v3203
    %3750 = vmatpush2.msra.mxu0 %v3202
    %3751 = vmatprep.subr.mxu0 %v3201
    %3752 = vmatpush2.msra.mxu0 %v3200
    %3753 = vmatprep.subr.mxu0 %v3199
    %3754 = vmatpush2.msra.mxu0 %v3198
    %3755 = vmatprep.subr.mxu0 %v3197
    %3756 = vmatpush2.msra.mxu0 %v3196
    %3757 = vmatprep.subr.mxu0 %v3195
    %3758 = vmatpush2.msra.mxu0 %v3194
    %3759 = vmatprep.subr.mxu0 %v3193
    %3760 = vmatpush2.msra.mxu0 %v3192
    %3761 = vmatprep.subr.mxu0 %v3191
    %3762 = vmatpush2.msra.mxu0 %v3190
    %3763 = vmatprep.subr.mxu0 %v3189
    %3764 = vmatpush2.msra.mxu0 %v3188
    %3765 = vmatprep.subr.mxu0 %v3187
    %3766 = vmatpush2.msra.mxu0 %v3186
    %3767 = vmatprep.subr.mxu0 %v3185
    %3768 = vmatpush2.msra.mxu0 %v3184
    %3769 = vmatprep.subr.mxu0 %v3183
    %3770 = vmatpush2.msra.mxu0 %v3182
    %3771 = vmatprep.subr.mxu0 %v3181
    %3772 = vmatpush2.msra.mxu0 %v3180
    %3773 = vmatprep.subr.mxu0 %v3179
    %3774 = vmatpush2.msra.mxu0 %v3178
    %3775 = vmatprep.subr.mxu0 %v3177
    %3776 = vmatpush2.msra.mxu0 %v3176
    %3777 = vmatprep.subr.mxu0 %v3175
    %3778 = vmatpush2.msra.mxu0 %v3174
    %3779 = vmatprep.subr.mxu0 %v3173
    %3780 = vmatpush2.msra.mxu0 %v3172
    %3781 = vmatprep.mubr.f32.mxu0 %v3219
    %3782 = vmatmul.mubr.f32.gmra.mxu0 %v3218
    %v3783 = vpop.f32.mrf.mxu0
    %v3784 = vadd.f32 %v3713, %v3783
    %v3785 = vpop.f32.mrf.mxu0
    %v3786 = vadd.f32 %v3715, %v3785
    %3787 = vdwg.mxu0
    %v3788 = vld [vmem:[%s3] sm:$0xff]
    %v3789 = vld [vmem:[%s3 + $0x8] sm:$0xff]
    %v3790 = vld [vmem:[%s3 + $0x10] sm:$0xff]
    %v3791 = vld [vmem:[%s3 + $0x18] sm:$0xff]
    %v3792 = vld [vmem:[%s3 + $0x20] sm:$0xff]
    %v3793 = vld [vmem:[%s3 + $0x28] sm:$0xff]
    %v3794 = vld [vmem:[%s3 + $0x30] sm:$0xff]
    %v3795 = vld [vmem:[%s3 + $0x38] sm:$0xff]
    %v3796 = vld [vmem:[%s3 + $0x40] sm:$0xff]
    %v3797 = vld [vmem:[%s3 + $0x48] sm:$0xff]
    %v3798 = vld [vmem:[%s3 + $0x50] sm:$0xff]
    %v3799 = vld [vmem:[%s3 + $0x58] sm:$0xff]
    %v3800 = vld [vmem:[%s3 + $0x60] sm:$0xff]
    %v3801 = vld [vmem:[%s3 + $0x68] sm:$0xff]
    %v3802 = vld [vmem:[%s3 + $0x70] sm:$0xff]
    %v3803 = vld [vmem:[%s3 + $0x78] sm:$0xff]
    %v3804 = vld [vmem:[%s3 + $0x80] sm:$0xff]
    %v3805 = vld [vmem:[%s3 + $0x88] sm:$0xff]
    %v3806 = vld [vmem:[%s3 + $0x90] sm:$0xff]
    %v3807 = vld [vmem:[%s3 + $0x98] sm:$0xff]
    %v3808 = vld [vmem:[%s3 + $0xa0] sm:$0xff]
    %v3809 = vld [vmem:[%s3 + $0xa8] sm:$0xff]
    %v3810 = vld [vmem:[%s3 + $0xb0] sm:$0xff]
    %v3811 = vld [vmem:[%s3 + $0xb8] sm:$0xff]
    %v3812 = vld [vmem:[%s3 + $0xc0] sm:$0xff]
    %v3813 = vld [vmem:[%s3 + $0xc8] sm:$0xff]
    %v3814 = vld [vmem:[%s3 + $0xd0] sm:$0xff]
    %v3815 = vld [vmem:[%s3 + $0xd8] sm:$0xff]
    %v3816 = vld [vmem:[%s3 + $0xe0] sm:$0xff]
    %v3817 = vld [vmem:[%s3 + $0xe8] sm:$0xff]
    %v3818 = vld [vmem:[%s3 + $0xf0] sm:$0xff]
    %v3819 = vld [vmem:[%s3 + $0xf8] sm:$0xff]
    %v3820 = vld [vmem:[%s3 + $0x100] sm:$0xff]
    %v3821 = vld [vmem:[%s3 + $0x108] sm:$0xff]
    %v3822 = vld [vmem:[%s3 + $0x110] sm:$0xff]
    %v3823 = vld [vmem:[%s3 + $0x118] sm:$0xff]
    %v3824 = vld [vmem:[%s3 + $0x120] sm:$0xff]
    %v3825 = vld [vmem:[%s3 + $0x128] sm:$0xff]
    %v3826 = vld [vmem:[%s3 + $0x130] sm:$0xff]
    %v3827 = vld [vmem:[%s3 + $0x138] sm:$0xff]
    %v3828 = vld [vmem:[%s3 + $0x140] sm:$0xff]
    %v3829 = vld [vmem:[%s3 + $0x148] sm:$0xff]
    %v3830 = vld [vmem:[%s3 + $0x150] sm:$0xff]
    %v3831 = vld [vmem:[%s3 + $0x158] sm:$0xff]
    %v3832 = vld [vmem:[%s3 + $0x160] sm:$0xff]
    %v3833 = vld [vmem:[%s3 + $0x168] sm:$0xff]
    %v3834 = vld [vmem:[%s3 + $0x170] sm:$0xff]
    %v3835 = vld [vmem:[%s3 + $0x178] sm:$0xff]
    %v3836 = vld [vmem:[%s3 + $0x180] sm:$0xff]
    %v3837 = vld [vmem:[%s3 + $0x188] sm:$0xff]
    %v3838 = vld [vmem:[%s3 + $0x190] sm:$0xff]
    %v3839 = vld [vmem:[%s3 + $0x198] sm:$0xff]
    %v3840 = vld [vmem:[%s3 + $0x1a0] sm:$0xff]
    %v3841 = vld [vmem:[%s3 + $0x1a8] sm:$0xff]
    %v3842 = vld [vmem:[%s3 + $0x1b0] sm:$0xff]
    %v3843 = vld [vmem:[%s3 + $0x1b8] sm:$0xff]
    %v3844 = vld [vmem:[%s3 + $0x1c0] sm:$0xff]
    %v3845 = vld [vmem:[%s3 + $0x1c8] sm:$0xff]
    %v3846 = vld [vmem:[%s3 + $0x1d0] sm:$0xff]
    %v3847 = vld [vmem:[%s3 + $0x1d8] sm:$0xff]
    %v3848 = vld [vmem:[%s3 + $0x1e0] sm:$0xff]
    %v3849 = vld [vmem:[%s3 + $0x1e8] sm:$0xff]
    %v3850 = vld [vmem:[%s3 + $0x1f0] sm:$0xff]
    %v3851 = vld [vmem:[%s3 + $0x1f8] sm:$0xff]
    %v3852 = vld [vmem:[%s4] sm:$0x3]
    %v3854 = vlaneseq
    %v3855 = vshrl.u32 %v3854, 7
    %v3856 = vsub.s32 0, %v3855
    %v3857 = vrot.slane %v3852, %v3856
    %v3858 = vlaneseq
    %v3859 = vshrl.u32 %v3858, 7
    %v3860 = vsub.s32 1, %v3859
    %v3861 = vrot.slane %v3852, %v3860
    %3864 = vmatprep.subr.mxu0 %v3819
    %3865 = vmatpush1.msra.mxu0 %v3818
    %3866 = vmatprep.subr.mxu0 %v3817
    %3867 = vmatpush1.msra.mxu0 %v3816
    %3868 = vmatprep.subr.mxu0 %v3815
    %3869 = vmatpush1.msra.mxu0 %v3814
    %3870 = vmatprep.subr.mxu0 %v3813
    %3871 = vmatpush1.msra.mxu0 %v3812
    %3872 = vmatprep.subr.mxu0 %v3811
    %3873 = vmatpush1.msra.mxu0 %v3810
    %3874 = vmatprep.subr.mxu0 %v3809
    %3875 = vmatpush1.msra.mxu0 %v3808
    %3876 = vmatprep.subr.mxu0 %v3807
    %3877 = vmatpush1.msra.mxu0 %v3806
    %3878 = vmatprep.subr.mxu0 %v3805
    %3879 = vmatpush1.msra.mxu0 %v3804
    %3880 = vmatprep.subr.mxu0 %v3803
    %3881 = vmatpush1.msra.mxu0 %v3802
    %3882 = vmatprep.subr.mxu0 %v3801
    %3883 = vmatpush1.msra.mxu0 %v3800
    %3884 = vmatprep.subr.mxu0 %v3799
    %3885 = vmatpush1.msra.mxu0 %v3798
    %3886 = vmatprep.subr.mxu0 %v3797
    %3887 = vmatpush1.msra.mxu0 %v3796
    %3888 = vmatprep.subr.mxu0 %v3795
    %3889 = vmatpush1.msra.mxu0 %v3794
    %3890 = vmatprep.subr.mxu0 %v3793
    %3891 = vmatpush1.msra.mxu0 %v3792
    %3892 = vmatprep.subr.mxu0 %v3791
    %3893 = vmatpush1.msra.mxu0 %v3790
    %3894 = vmatprep.subr.mxu0 %v3789
    %3895 = vmatpush1.msra.mxu0 %v3788
    %3896 = vmatprep.subr.mxu0 %v3851
    %3897 = vmatpush2.msra.mxu0 %v3850
    %3898 = vmatprep.subr.mxu0 %v3849
    %3899 = vmatpush2.msra.mxu0 %v3848
    %3900 = vmatprep.subr.mxu0 %v3847
    %3901 = vmatpush2.msra.mxu0 %v3846
    %3902 = vmatprep.subr.mxu0 %v3845
    %3903 = vmatpush2.msra.mxu0 %v3844
    %3904 = vmatprep.subr.mxu0 %v3843
    %3905 = vmatpush2.msra.mxu0 %v3842
    %3906 = vmatprep.subr.mxu0 %v3841
    %3907 = vmatpush2.msra.mxu0 %v3840
    %3908 = vmatprep.subr.mxu0 %v3839
    %3909 = vmatpush2.msra.mxu0 %v3838
    %3910 = vmatprep.subr.mxu0 %v3837
    %3911 = vmatpush2.msra.mxu0 %v3836
    %3912 = vmatprep.subr.mxu0 %v3835
    %3913 = vmatpush2.msra.mxu0 %v3834
    %3914 = vmatprep.subr.mxu0 %v3833
    %3915 = vmatpush2.msra.mxu0 %v3832
    %3916 = vmatprep.subr.mxu0 %v3831
    %3917 = vmatpush2.msra.mxu0 %v3830
    %3918 = vmatprep.subr.mxu0 %v3829
    %3919 = vmatpush2.msra.mxu0 %v3828
    %3920 = vmatprep.subr.mxu0 %v3827
    %3921 = vmatpush2.msra.mxu0 %v3826
    %3922 = vmatprep.subr.mxu0 %v3825
    %3923 = vmatpush2.msra.mxu0 %v3824
    %3924 = vmatprep.subr.mxu0 %v3823
    %3925 = vmatpush2.msra.mxu0 %v3822
    %3926 = vmatprep.subr.mxu0 %v3821
    %3927 = vmatpush2.msra.mxu0 %v3820
    %3928 = vmatprep.mubr.f32.mxu0 %v3786
    %3929 = vmatmul.mubr.f32.gmra.mxu0 %v3784
    %v3930 = vpop.f32.mrf.mxu0
    %v3931 = vadd.f32 %v3857, %v3930
    %v3932 = vpop.f32.mrf.mxu0
    %v3933 = vadd.f32 %v3861, %v3932
    %3934 = vdwg.mxu0
    %v3935 = vld [vmem:[%s6] sm:$0xff]
    %v3936 = vld [vmem:[%s6 + $0x8] sm:$0xff]
    %v3937 = vld [vmem:[%s6 + $0x10] sm:$0xff]
    %v3938 = vld [vmem:[%s6 + $0x18] sm:$0xff]
    %v3939 = vld [vmem:[%s6 + $0x20] sm:$0xff]
    %v3940 = vld [vmem:[%s6 + $0x28] sm:$0xff]
    %v3941 = vld [vmem:[%s6 + $0x30] sm:$0xff]
    %v3942 = vld [vmem:[%s6 + $0x38] sm:$0xff]
    %v3943 = vld [vmem:[%s6 + $0x40] sm:$0xff]
    %v3944 = vld [vmem:[%s6 + $0x48] sm:$0xff]
    %v3945 = vld [vmem:[%s6 + $0x50] sm:$0xff]
    %v3946 = vld [vmem:[%s6 + $0x58] sm:$0xff]
    %v3947 = vld [vmem:[%s6 + $0x60] sm:$0xff]
    %v3948 = vld [vmem:[%s6 + $0x68] sm:$0xff]
    %v3949 = vld [vmem:[%s6 + $0x70] sm:$0xff]
    %v3950 = vld [vmem:[%s6 + $0x78] sm:$0xff]
    %v3951 = vld [vmem:[%s6 + $0x80] sm:$0xff]
    %v3952 = vld [vmem:[%s6 + $0x88] sm:$0xff]
    %v3953 = vld [vmem:[%s6 + $0x90] sm:$0xff]
    %v3954 = vld [vmem:[%s6 + $0x98] sm:$0xff]
    %v3955 = vld [vmem:[%s6 + $0xa0] sm:$0xff]
    %v3956 = vld [vmem:[%s6 + $0xa8] sm:$0xff]
    %v3957 = vld [vmem:[%s6 + $0xb0] sm:$0xff]
    %v3958 = vld [vmem:[%s6 + $0xb8] sm:$0xff]
    %v3959 = vld [vmem:[%s6 + $0xc0] sm:$0xff]
    %v3960 = vld [vmem:[%s6 + $0xc8] sm:$0xff]
    %v3961 = vld [vmem:[%s6 + $0xd0] sm:$0xff]
    %v3962 = vld [vmem:[%s6 + $0xd8] sm:$0xff]
    %v3963 = vld [vmem:[%s6 + $0xe0] sm:$0xff]
    %v3964 = vld [vmem:[%s6 + $0xe8] sm:$0xff]
    %v3965 = vld [vmem:[%s6 + $0xf0] sm:$0xff]
    %v3966 = vld [vmem:[%s6 + $0xf8] sm:$0xff]
    %v3967 = vld [vmem:[%s6 + $0x100] sm:$0xff]
    %v3968 = vld [vmem:[%s6 + $0x108] sm:$0xff]
    %v3969 = vld [vmem:[%s6 + $0x110] sm:$0xff]
    %v3970 = vld [vmem:[%s6 + $0x118] sm:$0xff]
    %v3971 = vld [vmem:[%s6 + $0x120] sm:$0xff]
    %v3972 = vld [vmem:[%s6 + $0x128] sm:$0xff]
    %v3973 = vld [vmem:[%s6 + $0x130] sm:$0xff]
    %v3974 = vld [vmem:[%s6 + $0x138] sm:$0xff]
    %v3975 = vld [vmem:[%s6 + $0x140] sm:$0xff]
    %v3976 = vld [vmem:[%s6 + $0x148] sm:$0xff]
    %v3977 = vld [vmem:[%s6 + $0x150] sm:$0xff]
    %v3978 = vld [vmem:[%s6 + $0x158] sm:$0xff]
    %v3979 = vld [vmem:[%s6 + $0x160] sm:$0xff]
    %v3980 = vld [vmem:[%s6 + $0x168] sm:$0xff]
    %v3981 = vld [vmem:[%s6 + $0x170] sm:$0xff]
    %v3982 = vld [vmem:[%s6 + $0x178] sm:$0xff]
    %v3983 = vld [vmem:[%s6 + $0x180] sm:$0xff]
    %v3984 = vld [vmem:[%s6 + $0x188] sm:$0xff]
    %v3985 = vld [vmem:[%s6 + $0x190] sm:$0xff]
    %v3986 = vld [vmem:[%s6 + $0x198] sm:$0xff]
    %v3987 = vld [vmem:[%s6 + $0x1a0] sm:$0xff]
    %v3988 = vld [vmem:[%s6 + $0x1a8] sm:$0xff]
    %v3989 = vld [vmem:[%s6 + $0x1b0] sm:$0xff]
    %v3990 = vld [vmem:[%s6 + $0x1b8] sm:$0xff]
    %v3991 = vld [vmem:[%s6 + $0x1c0] sm:$0xff]
    %v3992 = vld [vmem:[%s6 + $0x1c8] sm:$0xff]
    %v3993 = vld [vmem:[%s6 + $0x1d0] sm:$0xff]
    %v3994 = vld [vmem:[%s6 + $0x1d8] sm:$0xff]
    %v3995 = vld [vmem:[%s6 + $0x1e0] sm:$0xff]
    %v3996 = vld [vmem:[%s6 + $0x1e8] sm:$0xff]
    %v3997 = vld [vmem:[%s6 + $0x1f0] sm:$0xff]
    %v3998 = vld [vmem:[%s6 + $0x1f8] sm:$0xff]
    %v3999 = vld [vmem:[%s7] sm:$0xf]
    %v4001 = vlaneseq
    %v4002 = vshrl.u32 %v4001, 7
    %v4003 = vsub.s32 0, %v4002
    %v4004 = vrot.slane %v3999, %v4003
    %v4005 = vlaneseq
    %v4006 = vshrl.u32 %v4005, 7
    %v4007 = vsub.s32 1, %v4006
    %v4008 = vrot.slane %v3999, %v4007
    %v4009 = vlaneseq
    %v4010 = vshrl.u32 %v4009, 7
    %v4011 = vsub.s32 2, %v4010
    %v4012 = vrot.slane %v3999, %v4011
    %v4013 = vlaneseq
    %v4014 = vshrl.u32 %v4013, 7
    %v4015 = vsub.s32 3, %v4014
    %v4016 = vrot.slane %v3999, %v4015
    %4021 = vmatprep.subr.mxu0 %v3996
    %4022 = vmatpush1.msra.mxu0 %v3995
    %4023 = vmatprep.subr.mxu0 %v3992
    %4024 = vmatpush1.msra.mxu0 %v3991
    %4025 = vmatprep.subr.mxu0 %v3988
    %4026 = vmatpush1.msra.mxu0 %v3987
    %4027 = vmatprep.subr.mxu0 %v3984
    %4028 = vmatpush1.msra.mxu0 %v3983
    %4029 = vmatprep.subr.mxu0 %v3980
    %4030 = vmatpush1.msra.mxu0 %v3979
    %4031 = vmatprep.subr.mxu0 %v3976
    %4032 = vmatpush1.msra.mxu0 %v3975
    %4033 = vmatprep.subr.mxu0 %v3972
    %4034 = vmatpush1.msra.mxu0 %v3971
    %4035 = vmatprep.subr.mxu0 %v3968
    %4036 = vmatpush1.msra.mxu0 %v3967
    %4037 = vmatprep.subr.mxu0 %v3964
    %4038 = vmatpush1.msra.mxu0 %v3963
    %4039 = vmatprep.subr.mxu0 %v3960
    %4040 = vmatpush1.msra.mxu0 %v3959
    %4041 = vmatprep.subr.mxu0 %v3956
    %4042 = vmatpush1.msra.mxu0 %v3955
    %4043 = vmatprep.subr.mxu0 %v3952
    %4044 = vmatpush1.msra.mxu0 %v3951
    %4045 = vmatprep.subr.mxu0 %v3948
    %4046 = vmatpush1.msra.mxu0 %v3947
    %4047 = vmatprep.subr.mxu0 %v3944
    %4048 = vmatpush1.msra.mxu0 %v3943
    %4049 = vmatprep.subr.mxu0 %v3940
    %4050 = vmatpush1.msra.mxu0 %v3939
    %4051 = vmatprep.subr.mxu0 %v3936
    %4052 = vmatpush1.msra.mxu0 %v3935
    %4053 = vmatprep.subr.mxu0 0.0
    %4054 = vmatpush2.msra.mxu0 0.0
    %4055 = vmatprep.subr.mxu0 0.0
    %4056 = vmatpush2.msra.mxu0 0.0
    %4057 = vmatprep.subr.mxu0 0.0
    %4058 = vmatpush2.msra.mxu0 0.0
    %4059 = vmatprep.subr.mxu0 0.0
    %4060 = vmatpush2.msra.mxu0 0.0
    %4061 = vmatprep.subr.mxu0 0.0
    %4062 = vmatpush2.msra.mxu0 0.0
    %4063 = vmatprep.subr.mxu0 0.0
    %4064 = vmatpush2.msra.mxu0 0.0
    %4065 = vmatprep.subr.mxu0 0.0
    %4066 = vmatpush2.msra.mxu0 0.0
    %4067 = vmatprep.subr.mxu0 0.0
    %4068 = vmatpush2.msra.mxu0 0.0
    %4069 = vmatprep.subr.mxu0 0.0
    %4070 = vmatpush2.msra.mxu0 0.0
    %4071 = vmatprep.subr.mxu0 0.0
    %4072 = vmatpush2.msra.mxu0 0.0
    %4073 = vmatprep.subr.mxu0 0.0
    %4074 = vmatpush2.msra.mxu0 0.0
    %4075 = vmatprep.subr.mxu0 0.0
    %4076 = vmatpush2.msra.mxu0 0.0
    %4077 = vmatprep.subr.mxu0 0.0
    %4078 = vmatpush2.msra.mxu0 0.0
    %4079 = vmatprep.subr.mxu0 0.0
    %4080 = vmatpush2.msra.mxu0 0.0
    %4081 = vmatprep.subr.mxu0 0.0
    %4082 = vmatpush2.msra.mxu0 0.0
    %4083 = vmatprep.subr.mxu0 0.0
    %4084 = vmatpush2.msra.mxu0 0.0
    %4085 = vmatprep.mubr.f32.mxu0 0.0
    %4086 = vmatmul.mubr.f32.gmra.mxu0 %v3931
    %v4087 = vpop.f32.mrf.mxu0
    %v4088 = vadd.f32 %v4004, %v4087
    %v4089 = vpop.f32.mrf.mxu0
    %v4090 = vadd.f32 %v4008, %v4089
    %4091 = vdwg.mxu0
    %4092 = vmatprep.subr.mxu0 %v3998
    %4093 = vmatpush1.msra.mxu0 %v3997
    %4094 = vmatprep.subr.mxu0 %v3994
    %4095 = vmatpush1.msra.mxu0 %v3993
    %4096 = vmatprep.subr.mxu0 %v3990
    %4097 = vmatpush1.msra.mxu0 %v3989
    %4098 = vmatprep.subr.mxu0 %v3986
    %4099 = vmatpush1.msra.mxu0 %v3985
    %4100 = vmatprep.subr.mxu0 %v3982
    %4101 = vmatpush1.msra.mxu0 %v3981
    %4102 = vmatprep.subr.mxu0 %v3978
    %4103 = vmatpush1.msra.mxu0 %v3977
    %4104 = vmatprep.subr.mxu0 %v3974
    %4105 = vmatpush1.msra.mxu0 %v3973
    %4106 = vmatprep.subr.mxu0 %v3970
    %4107 = vmatpush1.msra.mxu0 %v3969
    %4108 = vmatprep.subr.mxu0 %v3966
    %4109 = vmatpush1.msra.mxu0 %v3965
    %4110 = vmatprep.subr.mxu0 %v3962
    %4111 = vmatpush1.msra.mxu0 %v3961
    %4112 = vmatprep.subr.mxu0 %v3958
    %4113 = vmatpush1.msra.mxu0 %v3957
    %4114 = vmatprep.subr.mxu0 %v3954
    %4115 = vmatpush1.msra.mxu0 %v3953
    %4116 = vmatprep.subr.mxu0 %v3950
    %4117 = vmatpush1.msra.mxu0 %v3949
    %4118 = vmatprep.subr.mxu0 %v3946
    %4119 = vmatpush1.msra.mxu0 %v3945
    %4120 = vmatprep.subr.mxu0 %v3942
    %4121 = vmatpush1.msra.mxu0 %v3941
    %4122 = vmatprep.subr.mxu0 %v3938
    %4123 = vmatpush1.msra.mxu0 %v3937
    %4124 = vmatprep.subr.mxu0 0.0
    %4125 = vmatpush2.msra.mxu0 0.0
    %4126 = vmatprep.subr.mxu0 0.0
    %4127 = vmatpush2.msra.mxu0 0.0
    %4128 = vmatprep.subr.mxu0 0.0
    %4129 = vmatpush2.msra.mxu0 0.0
    %4130 = vmatprep.subr.mxu0 0.0
    %4131 = vmatpush2.msra.mxu0 0.0
    %4132 = vmatprep.subr.mxu0 0.0
    %4133 = vmatpush2.msra.mxu0 0.0
    %4134 = vmatprep.subr.mxu0 0.0
    %4135 = vmatpush2.msra.mxu0 0.0
    %4136 = vmatprep.subr.mxu0 0.0
    %4137 = vmatpush2.msra.mxu0 0.0
    %4138 = vmatprep.subr.mxu0 0.0
    %4139 = vmatpush2.msra.mxu0 0.0
    %4140 = vmatprep.subr.mxu0 0.0
    %4141 = vmatpush2.msra.mxu0 0.0
    %4142 = vmatprep.subr.mxu0 0.0
    %4143 = vmatpush2.msra.mxu0 0.0
    %4144 = vmatprep.subr.mxu0 0.0
    %4145 = vmatpush2.msra.mxu0 0.0
    %4146 = vmatprep.subr.mxu0 0.0
    %4147 = vmatpush2.msra.mxu0 0.0
    %4148 = vmatprep.subr.mxu0 0.0
    %4149 = vmatpush2.msra.mxu0 0.0
    %4150 = vmatprep.subr.mxu0 0.0
    %4151 = vmatpush2.msra.mxu0 0.0
    %4152 = vmatprep.subr.mxu0 0.0
    %4153 = vmatpush2.msra.mxu0 0.0
    %4154 = vmatprep.subr.mxu0 0.0
    %4155 = vmatpush2.msra.mxu0 0.0
    %4156 = vmatprep.mubr.f32.mxu0 0.0
    %4157 = vmatmul.mubr.f32.gmra.mxu0 %v3931
    %v4158 = vpop.f32.mrf.mxu0
    %v4159 = vadd.f32 %v4012, %v4158
    %v4160 = vpop.f32.mrf.mxu0
    %v4161 = vadd.f32 %v4016, %v4160
    %4162 = vdwg.mxu0
    %v4163 = vld [vmem:[%s5] sm:$0xff]
    %vm4164 = vcmask 64512
    %v4166 = vsel %vm4164, %v4163, 0
    %4168 = vmatprep.subr.mxu0 0.0
    %4169 = vmatpush1.msra.mxu0 0.0
    %4170 = vmatprep.subr.mxu0 0.0
    %4171 = vmatpush1.msra.mxu0 0.0
    %4172 = vmatprep.subr.mxu0 0.0
    %4173 = vmatpush1.msra.mxu0 0.0
    %4174 = vmatprep.subr.mxu0 0.0
    %4175 = vmatpush1.msra.mxu0 0.0
    %4176 = vmatprep.subr.mxu0 0.0
    %4177 = vmatpush1.msra.mxu0 0.0
    %4178 = vmatprep.subr.mxu0 0.0
    %4179 = vmatpush1.msra.mxu0 0.0
    %4180 = vmatprep.subr.mxu0 0.0
    %4181 = vmatpush1.msra.mxu0 0.0
    %4182 = vmatprep.subr.mxu0 0.0
    %4183 = vmatpush1.msra.mxu0 0.0
    %4184 = vmatprep.subr.mxu0 0.0
    %4185 = vmatpush1.msra.mxu0 0.0
    %4186 = vmatprep.subr.mxu0 0.0
    %4187 = vmatpush1.msra.mxu0 0.0
    %4188 = vmatprep.subr.mxu0 0.0
    %4189 = vmatpush1.msra.mxu0 0.0
    %4190 = vmatprep.subr.mxu0 0.0
    %4191 = vmatpush1.msra.mxu0 0.0
    %4192 = vmatprep.subr.mxu0 0.0
    %4193 = vmatpush1.msra.mxu0 0.0
    %4194 = vmatprep.subr.mxu0 0.0
    %4195 = vmatpush1.msra.mxu0 0.0
    %4196 = vmatprep.subr.mxu0 0.0
    %4197 = vmatpush1.msra.mxu0 0.0
    %4198 = vmatprep.subr.mxu0 0.0
    %4199 = vmatpush1.msra.mxu0 %v4088
    %4200 = vmatprep.subr.mxu0 0.0
    %4201 = vmatpush2.msra.mxu0 0.0
    %4202 = vmatprep.subr.mxu0 0.0
    %4203 = vmatpush2.msra.mxu0 0.0
    %4204 = vmatprep.subr.mxu0 0.0
    %4205 = vmatpush2.msra.mxu0 0.0
    %4206 = vmatprep.subr.mxu0 0.0
    %4207 = vmatpush2.msra.mxu0 0.0
    %4208 = vmatprep.subr.mxu0 0.0
    %4209 = vmatpush2.msra.mxu0 0.0
    %4210 = vmatprep.subr.mxu0 0.0
    %4211 = vmatpush2.msra.mxu0 0.0
    %4212 = vmatprep.subr.mxu0 0.0
    %4213 = vmatpush2.msra.mxu0 0.0
    %4214 = vmatprep.subr.mxu0 0.0
    %4215 = vmatpush2.msra.mxu0 0.0
    %4216 = vmatprep.subr.mxu0 0.0
    %4217 = vmatpush2.msra.mxu0 0.0
    %4218 = vmatprep.subr.mxu0 0.0
    %4219 = vmatpush2.msra.mxu0 0.0
    %4220 = vmatprep.subr.mxu0 0.0
    %4221 = vmatpush2.msra.mxu0 0.0
    %4222 = vmatprep.subr.mxu0 0.0
    %4223 = vmatpush2.msra.mxu0 0.0
    %4224 = vmatprep.subr.mxu0 0.0
    %4225 = vmatpush2.msra.mxu0 0.0
    %4226 = vmatprep.subr.mxu0 0.0
    %4227 = vmatpush2.msra.mxu0 0.0
    %4228 = vmatprep.subr.mxu0 0.0
    %4229 = vmatpush2.msra.mxu0 0.0
    %4230 = vmatprep.subr.mxu0 0.0
    %4231 = vmatpush2.msra.mxu0 0.0
    %4232 = vmatprep.mubr.f32.mxu0 0.0
    %4233 = vmatmul.mubr.f32.gmra.mxu0 %v4166
    %v4234 = vpop.f32.mrf.mxu0
    %v4235 = vadd.f32 0.0, %v4234
    %v4236 = vpop.f32.mrf.mxu0
    %4237 = vdwg.mxu0
    %v4238 = vld [vmem:[%s8] sm:$0xff]
    %v4239 = vld [vmem:[%s8 + $0x8] sm:$0xff]
    %v4240 = vld [vmem:[%s8 + $0x10] sm:$0xff]
    %v4241 = vld [vmem:[%s8 + $0x18] sm:$0xff]
    %v4242 = vld [vmem:[%s8 + $0x20] sm:$0xff]
    %v4243 = vld [vmem:[%s8 + $0x28] sm:$0xff]
    %v4244 = vld [vmem:[%s8 + $0x30] sm:$0xff]
    %v4245 = vld [vmem:[%s8 + $0x38] sm:$0xff]
    %v4246 = vld [vmem:[%s8 + $0x40] sm:$0xff]
    %v4247 = vld [vmem:[%s8 + $0x48] sm:$0xff]
    %v4248 = vld [vmem:[%s8 + $0x50] sm:$0xff]
    %v4249 = vld [vmem:[%s8 + $0x58] sm:$0xff]
    %v4250 = vld [vmem:[%s8 + $0x60] sm:$0xff]
    %v4251 = vld [vmem:[%s8 + $0x68] sm:$0xff]
    %v4252 = vld [vmem:[%s8 + $0x70] sm:$0xff]
    %v4253 = vld [vmem:[%s8 + $0x78] sm:$0xff]
    %v4254 = vld [vmem:[%s8 + $0x80] sm:$0xff]
    %v4255 = vld [vmem:[%s8 + $0x88] sm:$0xff]
    %v4256 = vld [vmem:[%s8 + $0x90] sm:$0xff]
    %v4257 = vld [vmem:[%s8 + $0x98] sm:$0xff]
    %v4258 = vld [vmem:[%s8 + $0xa0] sm:$0xff]
    %v4259 = vld [vmem:[%s8 + $0xa8] sm:$0xff]
    %v4260 = vld [vmem:[%s8 + $0xb0] sm:$0xff]
    %v4261 = vld [vmem:[%s8 + $0xb8] sm:$0xff]
    %v4262 = vld [vmem:[%s8 + $0xc0] sm:$0xff]
    %v4263 = vld [vmem:[%s8 + $0xc8] sm:$0xff]
    %v4264 = vld [vmem:[%s8 + $0xd0] sm:$0xff]
    %v4265 = vld [vmem:[%s8 + $0xd8] sm:$0xff]
    %v4266 = vld [vmem:[%s8 + $0xe0] sm:$0xff]
    %v4267 = vld [vmem:[%s8 + $0xe8] sm:$0xff]
    %v4268 = vld [vmem:[%s8 + $0xf0] sm:$0xff]
    %v4269 = vld [vmem:[%s8 + $0xf8] sm:$0xff]
    %v4270 = vld [vmem:[%s8 + $0x100] sm:$0xff]
    %v4271 = vld [vmem:[%s8 + $0x108] sm:$0xff]
    %v4272 = vld [vmem:[%s8 + $0x110] sm:$0xff]
    %v4273 = vld [vmem:[%s8 + $0x118] sm:$0xff]
    %v4274 = vld [vmem:[%s8 + $0x120] sm:$0xff]
    %v4275 = vld [vmem:[%s8 + $0x128] sm:$0xff]
    %v4276 = vld [vmem:[%s8 + $0x130] sm:$0xff]
    %v4277 = vld [vmem:[%s8 + $0x138] sm:$0xff]
    %v4278 = vld [vmem:[%s8 + $0x140] sm:$0xff]
    %v4279 = vld [vmem:[%s8 + $0x148] sm:$0xff]
    %v4280 = vld [vmem:[%s8 + $0x150] sm:$0xff]
    %v4281 = vld [vmem:[%s8 + $0x158] sm:$0xff]
    %v4282 = vld [vmem:[%s8 + $0x160] sm:$0xff]
    %v4283 = vld [vmem:[%s8 + $0x168] sm:$0xff]
    %v4284 = vld [vmem:[%s8 + $0x170] sm:$0xff]
    %v4285 = vld [vmem:[%s8 + $0x178] sm:$0xff]
    %v4286 = vld [vmem:[%s9] sm:$0x7]
    %v4288 = vlaneseq
    %v4289 = vshrl.u32 %v4288, 7
    %v4290 = vsub.s32 0, %v4289
    %v4291 = vrot.slane %v4286, %v4290
    %v4292 = vlaneseq
    %v4293 = vshrl.u32 %v4292, 7
    %v4294 = vsub.s32 1, %v4293
    %v4295 = vrot.slane %v4286, %v4294
    %v4296 = vlaneseq
    %v4297 = vshrl.u32 %v4296, 7
    %v4298 = vsub.s32 2, %v4297
    %v4299 = vrot.slane %v4286, %v4298
    %4303 = vmatprep.subr.mxu0 %v4284
    %4304 = vmatpush1.msra.mxu0 %v4283
    %4305 = vmatprep.subr.mxu0 %v4281
    %4306 = vmatpush1.msra.mxu0 %v4280
    %4307 = vmatprep.subr.mxu0 %v4278
    %4308 = vmatpush1.msra.mxu0 %v4277
    %4309 = vmatprep.subr.mxu0 %v4275
    %4310 = vmatpush1.msra.mxu0 %v4274
    %4311 = vmatprep.subr.mxu0 %v4272
    %4312 = vmatpush1.msra.mxu0 %v4271
    %4313 = vmatprep.subr.mxu0 %v4269
    %4314 = vmatpush1.msra.mxu0 %v4268
    %4315 = vmatprep.subr.mxu0 %v4266
    %4316 = vmatpush1.msra.mxu0 %v4265
    %4317 = vmatprep.subr.mxu0 %v4263
    %4318 = vmatpush1.msra.mxu0 %v4262
    %4319 = vmatprep.subr.mxu0 %v4260
    %4320 = vmatpush1.msra.mxu0 %v4259
    %4321 = vmatprep.subr.mxu0 %v4257
    %4322 = vmatpush1.msra.mxu0 %v4256
    %4323 = vmatprep.subr.mxu0 %v4254
    %4324 = vmatpush1.msra.mxu0 %v4253
    %4325 = vmatprep.subr.mxu0 %v4251
    %4326 = vmatpush1.msra.mxu0 %v4250
    %4327 = vmatprep.subr.mxu0 %v4248
    %4328 = vmatpush1.msra.mxu0 %v4247
    %4329 = vmatprep.subr.mxu0 %v4245
    %4330 = vmatpush1.msra.mxu0 %v4244
    %4331 = vmatprep.subr.mxu0 %v4242
    %4332 = vmatpush1.msra.mxu0 %v4241
    %4333 = vmatprep.subr.mxu0 %v4239
    %4334 = vmatpush1.msra.mxu0 %v4238
    %4335 = vmatprep.subr.mxu0 0.0
    %4336 = vmatpush2.msra.mxu0 0.0
    %4337 = vmatprep.subr.mxu0 0.0
    %4338 = vmatpush2.msra.mxu0 0.0
    %4339 = vmatprep.subr.mxu0 0.0
    %4340 = vmatpush2.msra.mxu0 0.0
    %4341 = vmatprep.subr.mxu0 0.0
    %4342 = vmatpush2.msra.mxu0 0.0
    %4343 = vmatprep.subr.mxu0 0.0
    %4344 = vmatpush2.msra.mxu0 0.0
    %4345 = vmatprep.subr.mxu0 0.0
    %4346 = vmatpush2.msra.mxu0 0.0
    %4347 = vmatprep.subr.mxu0 0.0
    %4348 = vmatpush2.msra.mxu0 0.0
    %4349 = vmatprep.subr.mxu0 0.0
    %4350 = vmatpush2.msra.mxu0 0.0
    %4351 = vmatprep.subr.mxu0 0.0
    %4352 = vmatpush2.msra.mxu0 0.0
    %4353 = vmatprep.subr.mxu0 0.0
    %4354 = vmatpush2.msra.mxu0 0.0
    %4355 = vmatprep.subr.mxu0 0.0
    %4356 = vmatpush2.msra.mxu0 0.0
    %4357 = vmatprep.subr.mxu0 0.0
    %4358 = vmatpush2.msra.mxu0 0.0
    %4359 = vmatprep.subr.mxu0 0.0
    %4360 = vmatpush2.msra.mxu0 0.0
    %4361 = vmatprep.subr.mxu0 0.0
    %4362 = vmatpush2.msra.mxu0 0.0
    %4363 = vmatprep.subr.mxu0 0.0
    %4364 = vmatpush2.msra.mxu0 0.0
    %4365 = vmatprep.subr.mxu0 0.0
    %4366 = vmatpush2.msra.mxu0 0.0
    %4367 = vmatprep.mubr.f32.mxu0 0.0
    %4368 = vmatmul.mubr.f32.gmra.mxu0 %v4235
    %v4369 = vpop.f32.mrf.mxu0
    %v4370 = vadd.f32 %v4291, %v4369
    %v4371 = vpop.f32.mrf.mxu0
    %v4372 = vadd.f32 %v4295, %v4371
    %4373 = vdwg.mxu0
    %4374 = vmatprep.subr.mxu0 0.0
    %4375 = vmatpush1.msra.mxu0 %v4285
    %4376 = vmatprep.subr.mxu0 0.0
    %4377 = vmatpush1.msra.mxu0 %v4282
    %4378 = vmatprep.subr.mxu0 0.0
    %4379 = vmatpush1.msra.mxu0 %v4279
    %4380 = vmatprep.subr.mxu0 0.0
    %4381 = vmatpush1.msra.mxu0 %v4276
    %4382 = vmatprep.subr.mxu0 0.0
    %4383 = vmatpush1.msra.mxu0 %v4273
    %4384 = vmatprep.subr.mxu0 0.0
    %4385 = vmatpush1.msra.mxu0 %v4270
    %4386 = vmatprep.subr.mxu0 0.0
    %4387 = vmatpush1.msra.mxu0 %v4267
    %4388 = vmatprep.subr.mxu0 0.0
    %4389 = vmatpush1.msra.mxu0 %v4264
    %4390 = vmatprep.subr.mxu0 0.0
    %4391 = vmatpush1.msra.mxu0 %v4261
    %4392 = vmatprep.subr.mxu0 0.0
    %4393 = vmatpush1.msra.mxu0 %v4258
    %4394 = vmatprep.subr.mxu0 0.0
    %4395 = vmatpush1.msra.mxu0 %v4255
    %4396 = vmatprep.subr.mxu0 0.0
    %4397 = vmatpush1.msra.mxu0 %v4252
    %4398 = vmatprep.subr.mxu0 0.0
    %4399 = vmatpush1.msra.mxu0 %v4249
    %4400 = vmatprep.subr.mxu0 0.0
    %4401 = vmatpush1.msra.mxu0 %v4246
    %4402 = vmatprep.subr.mxu0 0.0
    %4403 = vmatpush1.msra.mxu0 %v4243
    %4404 = vmatprep.subr.mxu0 0.0
    %4405 = vmatpush1.msra.mxu0 %v4240
    %4406 = vmatprep.subr.mxu0 0.0
    %4407 = vmatpush2.msra.mxu0 0.0
    %4408 = vmatprep.subr.mxu0 0.0
    %4409 = vmatpush2.msra.mxu0 0.0
    %4410 = vmatprep.subr.mxu0 0.0
    %4411 = vmatpush2.msra.mxu0 0.0
    %4412 = vmatprep.subr.mxu0 0.0
    %4413 = vmatpush2.msra.mxu0 0.0
    %4414 = vmatprep.subr.mxu0 0.0
    %4415 = vmatpush2.msra.mxu0 0.0
    %4416 = vmatprep.subr.mxu0 0.0
    %4417 = vmatpush2.msra.mxu0 0.0
    %4418 = vmatprep.subr.mxu0 0.0
    %4419 = vmatpush2.msra.mxu0 0.0
    %4420 = vmatprep.subr.mxu0 0.0
    %4421 = vmatpush2.msra.mxu0 0.0
    %4422 = vmatprep.subr.mxu0 0.0
    %4423 = vmatpush2.msra.mxu0 0.0
    %4424 = vmatprep.subr.mxu0 0.0
    %4425 = vmatpush2.msra.mxu0 0.0
    %4426 = vmatprep.subr.mxu0 0.0
    %4427 = vmatpush2.msra.mxu0 0.0
    %4428 = vmatprep.subr.mxu0 0.0
    %4429 = vmatpush2.msra.mxu0 0.0
    %4430 = vmatprep.subr.mxu0 0.0
    %4431 = vmatpush2.msra.mxu0 0.0
    %4432 = vmatprep.subr.mxu0 0.0
    %4433 = vmatpush2.msra.mxu0 0.0
    %4434 = vmatprep.subr.mxu0 0.0
    %4435 = vmatpush2.msra.mxu0 0.0
    %4436 = vmatprep.subr.mxu0 0.0
    %4437 = vmatpush2.msra.mxu0 0.0
    %4438 = vmatprep.mubr.f32.mxu0 0.0
    %4439 = vmatmul.mubr.f32.gmra.mxu0 %v4235
    %v4440 = vpop.f32.mrf.mxu0
    %v4441 = vadd.f32 %v4299, %v4440
    %v4442 = vpop.f32.mrf.mxu0
    %4443 = vdwg.mxu0
    %v4444 = vadd.f32 %v4370, %v4090
    %v4445 = vxor.u32 %v4444, 2147483648
    %v4446 = vmul.f32 %v4445, 1.442695
    %v4447 = vpow.pop %v4446
    %v4448 = vadd.f32 %v4447, 1.0
    %v4449 = vrcp.pop %v4448
    %v4450 = vmul.f32 1.0, %v4449
    %v4451 = vadd.f32 %v4372, %v4159
    %v4452 = vxor.u32 %v4451, 2147483648
    %v4453 = vmul.f32 %v4452, 1.442695
    %v4454 = vpow.pop %v4453
    %v4455 = vadd.f32 %v4454, 1.0
    %v4456 = vrcp.pop %v4455
    %v4457 = vmul.f32 1.0, %v4456
    %v4458 = vmul.f32 %v4450, %v4161
    %v4459 = vadd.f32 %v4441, %v4458
    %v4460 = vtanh.pop %v4459
    %v4461 = vsub.f32 1.0, %v4457
    %v4462 = vmul.f32 %v4461, %v4460
    %v4463 = vmul.f32 %v4457, %v3931
    %v4464 = vadd.f32 %v4462, %v4463
    %4465 = vst [vmem:[#allocation3] sm:$0xff] %v4464
    %v4466 = vld [vmem:[%s10] sm:$0x3]
    %v4468 = vsel %vm4164, %v4466, 0
    %4470 = vmatprep.subr.mxu0 0.0
    %4471 = vmatpush1.msra.mxu0 0.0
    %4472 = vmatprep.subr.mxu0 0.0
    %4473 = vmatpush1.msra.mxu0 0.0
    %4474 = vmatprep.subr.mxu0 0.0
    %4475 = vmatpush1.msra.mxu0 0.0
    %4476 = vmatprep.subr.mxu0 0.0
    %4477 = vmatpush1.msra.mxu0 0.0
    %4478 = vmatprep.subr.mxu0 0.0
    %4479 = vmatpush1.msra.mxu0 0.0
    %4480 = vmatprep.subr.mxu0 0.0
    %4481 = vmatpush1.msra.mxu0 0.0
    %4482 = vmatprep.subr.mxu0 0.0
    %4483 = vmatpush1.msra.mxu0 0.0
    %4484 = vmatprep.subr.mxu0 0.0
    %4485 = vmatpush1.msra.mxu0 0.0
    %4486 = vmatprep.subr.mxu0 0.0
    %4487 = vmatpush1.msra.mxu0 0.0
    %4488 = vmatprep.subr.mxu0 0.0
    %4489 = vmatpush1.msra.mxu0 0.0
    %4490 = vmatprep.subr.mxu0 0.0
    %4491 = vmatpush1.msra.mxu0 0.0
    %4492 = vmatprep.subr.mxu0 0.0
    %4493 = vmatpush1.msra.mxu0 0.0
    %4494 = vmatprep.subr.mxu0 0.0
    %4495 = vmatpush1.msra.mxu0 0.0
    %4496 = vmatprep.subr.mxu0 0.0
    %4497 = vmatpush1.msra.mxu0 0.0
    %4498 = vmatprep.subr.mxu0 0.0
    %4499 = vmatpush1.msra.mxu0 0.0
    %4500 = vmatprep.subr.mxu0 0.0
    %4501 = vmatpush1.msra.mxu0 %v4464
    %4502 = vmatprep.subr.mxu0 0.0
    %4503 = vmatpush2.msra.mxu0 0.0
    %4504 = vmatprep.subr.mxu0 0.0
    %4505 = vmatpush2.msra.mxu0 0.0
    %4506 = vmatprep.subr.mxu0 0.0
    %4507 = vmatpush2.msra.mxu0 0.0
    %4508 = vmatprep.subr.mxu0 0.0
    %4509 = vmatpush2.msra.mxu0 0.0
    %4510 = vmatprep.subr.mxu0 0.0
    %4511 = vmatpush2.msra.mxu0 0.0
    %4512 = vmatprep.subr.mxu0 0.0
    %4513 = vmatpush2.msra.mxu0 0.0
    %4514 = vmatprep.subr.mxu0 0.0
    %4515 = vmatpush2.msra.mxu0 0.0
    %4516 = vmatprep.subr.mxu0 0.0
    %4517 = vmatpush2.msra.mxu0 0.0
    %4518 = vmatprep.subr.mxu0 0.0
    %4519 = vmatpush2.msra.mxu0 0.0
    %4520 = vmatprep.subr.mxu0 0.0
    %4521 = vmatpush2.msra.mxu0 0.0
    %4522 = vmatprep.subr.mxu0 0.0
    %4523 = vmatpush2.msra.mxu0 0.0
    %4524 = vmatprep.subr.mxu0 0.0
    %4525 = vmatpush2.msra.mxu0 0.0
    %4526 = vmatprep.subr.mxu0 0.0
    %4527 = vmatpush2.msra.mxu0 0.0
    %4528 = vmatprep.subr.mxu0 0.0
    %4529 = vmatpush2.msra.mxu0 0.0
    %4530 = vmatprep.subr.mxu0 0.0
    %4531 = vmatpush2.msra.mxu0 0.0
    %4532 = vmatprep.subr.mxu0 0.0
    %4533 = vmatpush2.msra.mxu0 0.0
    %4534 = vmatprep.mubr.f32.mxu0 0.0
    %4535 = vmatmul.mubr.f32.gmra.mxu0 %v4468
    %v4536 = vpop.f32.mrf.mxu0
    %v4537 = vadd.f32 0.0, %v4536
    %v4538 = vpop.f32.mrf.mxu0
    %4539 = vdwg.mxu0
    %v4540 = vld [vmem:[%s11] sm:$0xff]
    %v4541 = vld [vmem:[%s11 + $0x8] sm:$0xff]
    %v4542 = vld [vmem:[%s11 + $0x10] sm:$0xff]
    %v4543 = vld [vmem:[%s11 + $0x18] sm:$0xff]
    %v4544 = vld [vmem:[%s11 + $0x20] sm:$0xff]
    %v4545 = vld [vmem:[%s11 + $0x28] sm:$0xff]
    %v4546 = vld [vmem:[%s11 + $0x30] sm:$0xff]
    %v4547 = vld [vmem:[%s11 + $0x38] sm:$0xff]
    %v4548 = vld [vmem:[%s11 + $0x40] sm:$0xff]
    %v4549 = vld [vmem:[%s11 + $0x48] sm:$0xff]
    %v4550 = vld [vmem:[%s11 + $0x50] sm:$0xff]
    %v4551 = vld [vmem:[%s11 + $0x58] sm:$0xff]
    %v4552 = vld [vmem:[%s11 + $0x60] sm:$0xff]
    %v4553 = vld [vmem:[%s11 + $0x68] sm:$0xff]
    %v4554 = vld [vmem:[%s11 + $0x70] sm:$0xff]
    %v4555 = vld [vmem:[%s11 + $0x78] sm:$0xff]
    %v4556 = vld [vmem:[#allocation2] sm:$0x1]
    %v4558 = vlaneseq
    %v4559 = vshrl.u32 %v4558, 7
    %v4560 = vsub.s32 0, %v4559
    %v4561 = vrot.slane %v4556, %v4560
    %4563 = vmatprep.subr.mxu0 0.0
    %4564 = vmatpush1.msra.mxu0 %v4555
    %4565 = vmatprep.subr.mxu0 0.0
    %4566 = vmatpush1.msra.mxu0 %v4554
    %4567 = vmatprep.subr.mxu0 0.0
    %4568 = vmatpush1.msra.mxu0 %v4553
    %4569 = vmatprep.subr.mxu0 0.0
    %4570 = vmatpush1.msra.mxu0 %v4552
    %4571 = vmatprep.subr.mxu0 0.0
    %4572 = vmatpush1.msra.mxu0 %v4551
    %4573 = vmatprep.subr.mxu0 0.0
    %4574 = vmatpush1.msra.mxu0 %v4550
    %4575 = vmatprep.subr.mxu0 0.0
    %4576 = vmatpush1.msra.mxu0 %v4549
    %4577 = vmatprep.subr.mxu0 0.0
    %4578 = vmatpush1.msra.mxu0 %v4548
    %4579 = vmatprep.subr.mxu0 0.0
    %4580 = vmatpush1.msra.mxu0 %v4547
    %4581 = vmatprep.subr.mxu0 0.0
    %4582 = vmatpush1.msra.mxu0 %v4546
    %4583 = vmatprep.subr.mxu0 0.0
    %4584 = vmatpush1.msra.mxu0 %v4545
    %4585 = vmatprep.subr.mxu0 0.0
    %4586 = vmatpush1.msra.mxu0 %v4544
    %4587 = vmatprep.subr.mxu0 0.0
    %4588 = vmatpush1.msra.mxu0 %v4543
    %4589 = vmatprep.subr.mxu0 0.0
    %4590 = vmatpush1.msra.mxu0 %v4542
    %4591 = vmatprep.subr.mxu0 0.0
    %4592 = vmatpush1.msra.mxu0 %v4541
    %4593 = vmatprep.subr.mxu0 0.0
    %4594 = vmatpush1.msra.mxu0 %v4540
    %4595 = vmatprep.subr.mxu0 0.0
    %4596 = vmatpush2.msra.mxu0 0.0
    %4597 = vmatprep.subr.mxu0 0.0
    %4598 = vmatpush2.msra.mxu0 0.0
    %4599 = vmatprep.subr.mxu0 0.0
    %4600 = vmatpush2.msra.mxu0 0.0
    %4601 = vmatprep.subr.mxu0 0.0
    %4602 = vmatpush2.msra.mxu0 0.0
    %4603 = vmatprep.subr.mxu0 0.0
    %4604 = vmatpush2.msra.mxu0 0.0
    %4605 = vmatprep.subr.mxu0 0.0
    %4606 = vmatpush2.msra.mxu0 0.0
    %4607 = vmatprep.subr.mxu0 0.0
    %4608 = vmatpush2.msra.mxu0 0.0
    %4609 = vmatprep.subr.mxu0 0.0
    %4610 = vmatpush2.msra.mxu0 0.0
    %4611 = vmatprep.subr.mxu0 0.0
    %4612 = vmatpush2.msra.mxu0 0.0
    %4613 = vmatprep.subr.mxu0 0.0
    %4614 = vmatpush2.msra.mxu0 0.0
    %4615 = vmatprep.subr.mxu0 0.0
    %4616 = vmatpush2.msra.mxu0 0.0
    %4617 = vmatprep.subr.mxu0 0.0
    %4618 = vmatpush2.msra.mxu0 0.0
    %4619 = vmatprep.subr.mxu0 0.0
    %4620 = vmatpush2.msra.mxu0 0.0
    %4621 = vmatprep.subr.mxu0 0.0
    %4622 = vmatpush2.msra.mxu0 0.0
    %4623 = vmatprep.subr.mxu0 0.0
    %4624 = vmatpush2.msra.mxu0 0.0
    %4625 = vmatprep.subr.mxu0 0.0
    %4626 = vmatpush2.msra.mxu0 0.0
    %4627 = vmatprep.mubr.f32.mxu0 0.0
    %4628 = vmatmul.mubr.f32.gmra.mxu0 %v4537
    %v4629 = vpop.f32.mrf.mxu0
    %v4630 = vadd.f32 %v4561, %v4629
    %v4631 = vpop.f32.mrf.mxu0
    %4632 = vdwg.mxu0
    %v4633 = vxor.u32 %v4630, 2147483648
    %v4634 = vmul.f32 %v4633, 1.442695
    %v4635 = vpow.pop %v4634
    %v4636 = vadd.f32 %v4635, 1.0
    %v4637 = vrcp.pop %v4636
    %v4638 = vmul.f32 1.0, %v4637
    %v4639 = vld [vmem:[%s13] sm:$0xff]
    %v4640 = vmul.f32 %v4639, %v4639
    %4641 = vadd.xlane.f32.xlu0 %v4640
    %v4642 = vpop.xlane.xlu0 %4641
    %v4643 = vrsqrt.pop %v4642
    %v4644 = vmul.f32 %v4642, %v4643
    %vm4645 = vcmp.eq.f32.partialorder %v4642, inf
    %v4646 = vsel %vm4645, %v4642, %v4644
    %vm4647 = vcmp.eq.f32.partialorder %v4642, 0.0
    %v4648 = vand.u32 %v4642, 2147483648
    %v4649 = vsel %vm4647, %v4648, %v4646
    %v4650 = vmax.f32 %v4649, 1e-12
    %v4651 = vrcp.pop %v4650
    %v4652 = vmul.f32 %v4639, %v4651
    %v4653 = vmul.f32 %v3933, %v3933
    %4654 = vadd.xlane.f32.xlu0 %v4653
    %v4655 = vpop.xlane.xlu0 %4654
    %v4656 = vrsqrt.pop %v4655
    %v4657 = vmul.f32 %v4655, %v4656
    %vm4658 = vcmp.eq.f32.partialorder %v4655, inf
    %v4659 = vsel %vm4658, %v4655, %v4657
    %vm4660 = vcmp.eq.f32.partialorder %v4655, 0.0
    %v4661 = vand.u32 %v4655, 2147483648
    %v4662 = vsel %vm4660, %v4661, %v4659
    %v4663 = vmax.f32 %v4662, 1e-12
    %v4664 = vrcp.pop %v4663
    %v4665 = vmul.f32 %v3933, %v4664
    %v4666 = vld [vmem:[%s14] sm:$0xff]
    %v4667 = vld [vmem:[%s15] sm:$0x1]
    %4669 = vset.pattern.permute.xlu0 0
    %4670 = vperm.xlu0 %4669, %v4666
    %v4671 = vpop.permute.xlu0 %4670
    %v4673 = vmul.f32 %v4652, %v4671
    %v4674 = vmul.f32 %v4665, %v4671
    %4675 = vmatprep.subr.mxu0 0.0
    %4676 = vmatpush1.xpose.msra.mxu0 0.0
    %4677 = vmatprep.subr.mxu0 0.0
    %4678 = vmatpush1.xpose.msra.mxu0 0.0
    %4679 = vmatprep.subr.mxu0 0.0
    %4680 = vmatpush1.xpose.msra.mxu0 0.0
    %4681 = vmatprep.subr.mxu0 0.0
    %4682 = vmatpush1.xpose.msra.mxu0 0.0
    %4683 = vmatprep.subr.mxu0 0.0
    %4684 = vmatpush1.xpose.msra.mxu0 0.0
    %4685 = vmatprep.subr.mxu0 0.0
    %4686 = vmatpush1.xpose.msra.mxu0 0.0
    %4687 = vmatprep.subr.mxu0 0.0
    %4688 = vmatpush1.xpose.msra.mxu0 0.0
    %4689 = vmatprep.subr.mxu0 0.0
    %4690 = vmatpush1.xpose.msra.mxu0 0.0
    %4691 = vmatprep.subr.mxu0 0.0
    %4692 = vmatpush1.xpose.msra.mxu0 0.0
    %4693 = vmatprep.subr.mxu0 0.0
    %4694 = vmatpush1.xpose.msra.mxu0 0.0
    %4695 = vmatprep.subr.mxu0 0.0
    %4696 = vmatpush1.xpose.msra.mxu0 0.0
    %4697 = vmatprep.subr.mxu0 0.0
    %4698 = vmatpush1.xpose.msra.mxu0 0.0
    %4699 = vmatprep.subr.mxu0 0.0
    %4700 = vmatpush1.xpose.msra.mxu0 0.0
    %4701 = vmatprep.subr.mxu0 0.0
    %4702 = vmatpush1.xpose.msra.mxu0 0.0
    %4703 = vmatprep.subr.mxu0 0.0
    %4704 = vmatpush1.xpose.msra.mxu0 0.0
    %4705 = vmatprep.subr.mxu0 0.0
    %4706 = vmatpush1.xpose.msra.mxu0 %v4674
    %4707 = vmatprep.subr.mxu0 0.0
    %4708 = vmatpush2.xpose.msra.mxu0 0.0
    %4709 = vmatprep.subr.mxu0 0.0
    %4710 = vmatpush2.xpose.msra.mxu0 0.0
    %4711 = vmatprep.subr.mxu0 0.0
    %4712 = vmatpush2.xpose.msra.mxu0 0.0
    %4713 = vmatprep.subr.mxu0 0.0
    %4714 = vmatpush2.xpose.msra.mxu0 0.0
    %4715 = vmatprep.subr.mxu0 0.0
    %4716 = vmatpush2.xpose.msra.mxu0 0.0
    %4717 = vmatprep.subr.mxu0 0.0
    %4718 = vmatpush2.xpose.msra.mxu0 0.0
    %4719 = vmatprep.subr.mxu0 0.0
    %4720 = vmatpush2.xpose.msra.mxu0 0.0
    %4721 = vmatprep.subr.mxu0 0.0
    %4722 = vmatpush2.xpose.msra.mxu0 0.0
    %4723 = vmatprep.subr.mxu0 0.0
    %4724 = vmatpush2.xpose.msra.mxu0 0.0
    %4725 = vmatprep.subr.mxu0 0.0
    %4726 = vmatpush2.xpose.msra.mxu0 0.0
    %4727 = vmatprep.subr.mxu0 0.0
    %4728 = vmatpush2.xpose.msra.mxu0 0.0
    %4729 = vmatprep.subr.mxu0 0.0
    %4730 = vmatpush2.xpose.msra.mxu0 0.0
    %4731 = vmatprep.subr.mxu0 0.0
    %4732 = vmatpush2.xpose.msra.mxu0 0.0
    %4733 = vmatprep.subr.mxu0 0.0
    %4734 = vmatpush2.xpose.msra.mxu0 0.0
    %4735 = vmatprep.subr.mxu0 0.0
    %4736 = vmatpush2.xpose.msra.mxu0 0.0
    %4737 = vmatprep.subr.mxu0 0.0
    %4738 = vmatpush2.xpose.msra.mxu0 0.0
    %4739 = vmatprep.mubr.f32.mxu0 0.0
    %4740 = vmatmul.mubr.f32.gmra.mxu0 %v4673
    %v4741 = vpop.f32.mrf.mxu0
    %v4742 = vadd.f32 0.0, %v4741
    %v4743 = vpop.f32.mrf.mxu0
    %4744 = vdwg.mxu0
    %v4745 = vlaneseq
    %v4746 = vshrl.u32 %v4745, 7
    %v4747 = vlaneseq
    %v4748 = vand.u32 %v4747, 127
    %vm4749 = vcmp.eq.s32.totalorder %v4746, %v4748
    %v4750 = vsel %vm4749, 1, 0
    %v4751 = vcvt.s32.f32 %v4750
    %v4752 = vmul.f32 %v4673, %v4674
    %4753 = vadd.xlane.f32.xlu0 %v4752
    %v4754 = vpop.xlane.xlu0 %4753
    %v4755 = vmul.f32 %v4742, %v4751
    %v4756 = vsel %vm4164, %v4755, 0.0
    %v4757 = vrot.slane %v4756, 4
    %v4758 = vadd.f32 %v4756, %v4757
    %v4759 = vrot.slane %v4758, 2
    %v4760 = vadd.f32 %v4758, %v4759
    %v4761 = vrot.slane %v4760, 1
    %v4762 = vadd.f32 %v4760, %v4761
    %v4763 = vsub.f32 1.0, %v4751
    %v4765 = vlaneseq
    %v4766 = vshrl.u32 %v4765, 7
    %v4767 = vsub.s32 0, %v4766
    %v4768 = vrot.slane %v4667, %v4767
    %v4770 = vmul.f32 %v4671, %v4768
    %v4771 = vmul.f32 %v4763, %v4770
    %v4772 = vsub.f32 0.2, %v4754
    %v4773 = vadd.f32 %v4772, %v4742
    %v4774 = vmax.f32 %v4773, 0.0
    %v4775 = vmul.f32 %v4774, %v4771
    %v4776 = vsub.f32 0.2, %v4762
    %v4777 = vadd.f32 %v4776, %v4742
    %v4778 = vmax.f32 %v4777, 0.0
    %v4779 = vmul.f32 %v4778, %v4771
    %v4780 = vadd.f32 %v4775, %v4779
    %v4781 = vsel %vm4164, %v4780, 0.0
    %4782 = vadd.xlane.f32.xlu0 %v4781
    %v4783 = vpop.xlane.xlu0 %4782
    %v4784 = vrot.slane %v4783, 4
    %v4785 = vadd.f32 %v4783, %v4784
    %v4786 = vrot.slane %v4785, 2
    %v4787 = vadd.f32 %v4785, %v4786
    %v4788 = vrot.slane %v4787, 1
    %v4789 = vadd.f32 %v4787, %v4788
    %s4790 = vtos %v4789
    %v4791 = vstv %s4790
    %vm4792 = vcmask 7168
    %v4793 = vsel %vm4792, %v4666, 0.0
    %4794 = vadd.xlane.f32.xlu0 %v4793
    %v4795 = vpop.xlane.xlu0 %4794
    %v4796 = vrot.slane %v4795, 4
    %v4797 = vadd.f32 %v4795, %v4796
    %v4798 = vrot.slane %v4797, 2
    %v4799 = vadd.f32 %v4797, %v4798
    %v4800 = vrot.slane %v4799, 1
    %v4801 = vadd.f32 %v4799, %v4800
    %s4802 = vtos %v4801
    %v4803 = vstv %s4802
    %v4804 = vmax.f32 %v4803, 1.0
    %v4805 = vmul.f32 %v4804, %v4804
    %v4806 = vrcp.pop %v4805
    %v4807 = vmul.f32 %v4791, %v4806
    %vm4808 = vcmp.eq.s32.totalorder %v4748, 0
    %4810 = vset.pattern.permute.xlu0 0
    %4811 = vperm.xlu0 %4810, %v4638
    %v4812 = vpop.permute.xlu0 %4811
    %v4814 = vsel %vm4808, %v4812, 0.0
    %vm4815 = vcmp.eq.s32.totalorder %v4748, 1
    %v4816 = vsel %vm4815, %v4807, 0.0
    %v4817 = vadd.f32 %v4814, %v4816
    %4818 = vst [vmem:[%s17] sm:$0x3] %v4817
    // Predicated region
    $region66: #{compat_model_forward.1} parent=1 // pred_check
      _
    $region67: #{compat_model_forward.1} parent=1 // pred_check_branch
      %4820 = sbr.rel (0) target = $region69
    $region68: #{compat_model_forward.1} parent=1 // pred_region
      %s4822 = ssub.s32 128, 128
      %4823 = vsyncadd [#allocation4], %s4822
      %s4825 = sshll.u32 [#allocation3], 4
      %s4826 = int_to_ptr.vmem [resolvable:$true] %s4825
      %4828 = dma.vmem_to_hbm [thread:$0]  %s4826, 128, %s16, [#allocation4]
    $region69: #{compat_model_forward.1} parent=1 // pred_fallthru
      _
    // Predicated region
    $region70: #{compat_model_forward.1} parent=1 // pred_check
      _
    $region71: #{compat_model_forward.1} parent=1 // pred_check_branch
      %4830 = sbr.rel (0) target = $region73
    $region72: #{compat_model_forward.1} parent=1 // pred_region
      _
    $region73: #{compat_model_forward.1} parent=1 // pred_fallthru
      _
    // Predicated region
    $region74: #{compat_model_forward.1} parent=1 // pred_check
      _
    $region75: #{compat_model_forward.1} parent=1 // pred_check_branch
      %4832 = sbr.rel (0) target = $region77
    $region76: #{compat_model_forward.1} parent=1 // pred_region
      %4833 = dma.done [#allocation4], 128
    $region77: #{compat_model_forward.1} parent=1 // pred_fallthru
      _
    // Predicated region
    $region78: #{compat_model_forward.1} parent=1 // pred_check
      _
    $region79: #{compat_model_forward.1} parent=1 // pred_check_branch
      %4835 = sbr.rel (0) target = $region81
    $region80: #{compat_model_forward.1} parent=1 // pred_region
      _
    $region81: #{compat_model_forward.1} parent=1 // pred_fallthru
      _
    %4836 = vsyncpa [#allocation4], 1

</llo_original>
